<compile_context>
chip_gen: v7x
topology: tpu7x:2x2x1
jax: 0.10.0
libtpu: 0.0.40
codegen_flags: <defaults>
</compile_context>

<pallas_src>
import math

import jax
import jax.numpy as jnp
from jax.experimental import pallas as pl
from jax.experimental.pallas import tpu as pltpu


# ----------------------------------------------------------------------------- kernel
def seq2seq_kernel(
    seqs_ref, mask_ref, allys_ref,
    # encoder GRU, per-gate (pre-transposed so the kernel does x @ W), PyTorch order r,z,n
    e_wi_r_ref, e_wi_z_ref, e_wi_n_ref,
    e_wh_r_ref, e_wh_z_ref, e_wh_n_ref,
    e_b_r_ref, e_b_z_ref, e_b_in_ref, e_b_hn_ref,
    # additive attention
    wa_ref, ba_ref, va_ref,
    # decoder GRU cell, per-gate; input split into [context rows | ally row]
    d_wc_r_ref, d_wc_z_ref, d_wc_n_ref,
    d_wy_r_ref, d_wy_z_ref, d_wy_n_ref,
    d_wh_r_ref, d_wh_z_ref, d_wh_n_ref,
    d_b_r_ref, d_b_z_ref, d_b_in_ref, d_b_hn_ref,
    # output head
    wo_ref, bo_ref,
    # packed output slab: [preds(K) | e(T) | att(T) | zero pad]
    out_ref,
    # scratch
    hs_ref,
):
    f32 = jnp.float32
    B, T, C = seqs_ref.shape
    K = allys_ref.shape[1]
    H = e_wh_r_ref.shape[0]
    OUT_W = out_ref.shape[1]

    seqs = seqs_ref[...]              # (B, T, C)
    mask = mask_ref[...]              # (B, T)
    allys = allys_ref[...]            # (B, K)

    # -------- encoder: batched input projection (one matmul per gate, r/z biases folded)
    masked = seqs * mask[:, :, None]                                   # (B, T, C)
    x2d = masked.reshape(B * T, C)
    gi_r_all = (jnp.dot(x2d, e_wi_r_ref[...], preferred_element_type=f32)
                + e_b_r_ref[...]).reshape(B, T, H)
    gi_z_all = (jnp.dot(x2d, e_wi_z_ref[...], preferred_element_type=f32)
                + e_b_z_ref[...]).reshape(B, T, H)
    gi_n_all = (jnp.dot(x2d, e_wi_n_ref[...], preferred_element_type=f32)
                + e_b_in_ref[...]).reshape(B, T, H)

    e_wh_r = e_wh_r_ref[...]
    e_wh_z = e_wh_z_ref[...]
    e_wh_n = e_wh_n_ref[...]
    e_b_hn = e_b_hn_ref[...]

    # -------- encoder recurrence (T is small & fixed -> static unroll)
    h = jnp.zeros((B, H), f32)
    for t in range(T):
        gh_r = jnp.dot(h, e_wh_r, preferred_element_type=f32)
        gh_z = jnp.dot(h, e_wh_z, preferred_element_type=f32)
        gh_n = jnp.dot(h, e_wh_n, preferred_element_type=f32) + e_b_hn
        r = jax.nn.sigmoid(gi_r_all[:, t, :] + gh_r)
        z = jax.nn.sigmoid(gi_z_all[:, t, :] + gh_z)
        n = jnp.tanh(gi_n_all[:, t, :] + r * gh_n)
        h = (1.0 - z) * n + z * h
        hs_ref[:, t:t + 1, :] = h[:, None, :]                          # bound live ranges

    Hs = hs_ref[...]                                                   # (B, T, H)

    # -------- additive attention: score via VPU mul + lane reduce (no width-1 MXU dot)
    proj = jnp.tanh(
        jnp.dot(Hs.reshape(B * T, H), wa_ref[...], preferred_element_type=f32)
        + ba_ref[...]
    )
    scores = jnp.sum(proj.reshape(B, T, H) * va_ref[...], axis=-1)     # (B, T), raw e

    valid = mask > 0.0
    msk_scores = jnp.where(valid, scores, f32(-1e30))
    m = jnp.max(msk_scores, axis=1, keepdims=True)
    ex = jnp.where(valid, jnp.exp(msk_scores - m), 0.0)
    denom = jnp.maximum(jnp.sum(ex, axis=1, keepdims=True), f32(1e-30))  # guard all-masked rows
    att = ex / denom                                                     # (B, T)

    c_vec = jnp.sum(att[:, :, None] * Hs, axis=1)                        # (B, H)

    # -------- decoder: loop-invariant context projection hoisted out of the k-loop
    gi_c_r = jnp.dot(c_vec, d_wc_r_ref[...], preferred_element_type=f32) + d_b_r_ref[...]
    gi_c_z = jnp.dot(c_vec, d_wc_z_ref[...], preferred_element_type=f32) + d_b_z_ref[...]
    gi_c_n = jnp.dot(c_vec, d_wc_n_ref[...], preferred_element_type=f32) + d_b_in_ref[...]

    d_wy_r = d_wy_r_ref[...]
    d_wy_z = d_wy_z_ref[...]
    d_wy_n = d_wy_n_ref[...]
    d_wh_r = d_wh_r_ref[...]
    d_wh_z = d_wh_z_ref[...]
    d_wh_n = d_wh_n_ref[...]
    d_b_hn = d_b_hn_ref[...]
    wo = wo_ref[...]                                                    # (1, H)
    bo = bo_ref[0, 0]                                                   # scalar from SMEM

    hd = c_vec
    preds = []
    for k in range(K):
        y_k = allys[:, k:k + 1]                                         # (B, 1)
        gr = gi_c_r + y_k * d_wy_r
        gz = gi_c_z + y_k * d_wy_z
        gn = gi_c_n + y_k * d_wy_n
        hr = jnp.dot(hd, d_wh_r, preferred_element_type=f32)
        hz = jnp.dot(hd, d_wh_z, preferred_element_type=f32)
        hn = jnp.dot(hd, d_wh_n, preferred_element_type=f32) + d_b_hn
        r = jax.nn.sigmoid(gr + hr)
        z = jax.nn.sigmoid(gz + hz)
        n = jnp.tanh(gn + r * hn)
        hd = (1.0 - z) * n + z * hd
        # output head: Linear(H -> 1) as VPU mul + lane reduce
        preds.append(jnp.sum(hd * wo, axis=-1, keepdims=True) + bo)     # (B, 1)

    pieces = preds + [scores, att]
    pad_w = OUT_W - (K + 2 * T)
    if pad_w > 0:
        pieces.append(jnp.zeros((B, pad_w), f32))
    out_ref[...] = jnp.concatenate(pieces, axis=1)                      # one lane-dense store


# ----------------------------------------------------------------------------- wrapper
def _full_spec(arr):
    nd = arr.ndim
    return pl.BlockSpec(arr.shape, lambda i, _nd=nd: (0,) * _nd)


def forward(params, seqs, mask_seq, allys, *, b_tile=None):
    B, T, C = seqs.shape
    K = allys.shape[1]
    H = params["e_wh_r"].shape[0]
    OUT_W = 128 * pl.cdiv(K + 2 * T, 128)       # lane-dense packed output width

    if b_tile is None:
        b_tile = B if B <= 128 else 128
    assert B % b_tile == 0, "batch must be divisible by b_tile"
    assert b_tile == B or b_tile % 8 == 0, "partial batch tiles must be 8-multiples"
    grid = (B // b_tile,)

    weights_vmem = (
        params["e_wi_r"], params["e_wi_z"], params["e_wi_n"],
        params["e_wh_r"], params["e_wh_z"], params["e_wh_n"],
        params["e_b_r"], params["e_b_z"], params["e_b_in"], params["e_b_hn"],
        params["wa"], params["ba"], params["va"],
        params["d_wc_r"], params["d_wc_z"], params["d_wc_n"],
        params["d_wy_r"], params["d_wy_z"], params["d_wy_n"],
        params["d_wh_r"], params["d_wh_z"], params["d_wh_n"],
        params["d_b_r"], params["d_b_z"], params["d_b_in"], params["d_b_hn"],
        params["wo"],
    )
    args = (seqs, mask_seq, allys) + weights_vmem + (params["bo"],)

    in_specs = (
        [
            pl.BlockSpec((b_tile, T, C), lambda i: (i, 0, 0)),
            pl.BlockSpec((b_tile, T), lambda i: (i, 0)),
            pl.BlockSpec((b_tile, K), lambda i: (i, 0)),
        ]
        + [_full_spec(w) for w in weights_vmem]
        + [pl.BlockSpec(memory_space=pltpu.MemorySpace.SMEM)]   # bo scalar
    )
    out_spec = pl.BlockSpec((b_tile, OUT_W), lambda i: (i, 0))

    # Advisory cost estimate so XLA schedules this cheap kernel sensibly.
    flops = int(B * (
        3 * 2 * T * C * H        # encoder input projection
        + T * 3 * 2 * H * H      # encoder recurrence
        + 2 * T * H * H          # attention projection
        + 3 * 2 * H * H          # decoder hoisted context projection
        + K * 3 * 2 * H * H      # decoder recurrence
    ))
    transcendentals = int(B * (T * 4 * H + T + K * 3 * H))
    bytes_accessed = int(4 * (seqs.size + mask_seq.size + allys.size
                              + sum(int(p.size) for p in params.values())
                              + B * OUT_W))

    out = pl.pallas_call(
        seq2seq_kernel,
        out_shape=jax.ShapeDtypeStruct((B, OUT_W), jnp.float32),
        grid=grid,
        in_specs=in_specs,
        out_specs=out_spec,
        scratch_shapes=[pltpu.VMEM((b_tile, T, H), jnp.float32)],
        compiler_params=pltpu.CompilerParams(dimension_semantics=("parallel",)),
        cost_estimate=pl.CostEstimate(
            flops=flops, transcendentals=transcendentals, bytes_accessed=bytes_accessed),
    )(*args)

    preds = out[:, :K]
    e_vals = out[:, K:K + T]
    att = out[:, K + T:K + 2 * T]
    return preds, e_vals, att


def init_params(key, n_signals, rnn_dim):
    """Per-gate, pre-transposed layout.

    To load a PyTorch checkpoint:
      e_wi_g  = weight_ih_l0[gH:(g+1)H, :].T          (g in r,z,n)
      e_wh_g  = weight_hh_l0[gH:(g+1)H, :].T
      e_b_r   = (bias_ih_l0[r] + bias_hh_l0[r])[None]   (same for z)
      e_b_in  = bias_ih_l0[n][None];  e_b_hn = bias_hh_l0[n][None]
      d_wc_g  = cell.weight_ih[gH:(g+1)H, :H].T;  d_wy_g = cell.weight_ih[gH:(g+1)H, H:].T
      va/wo stored as (1, H) rows; bo as (1, 1).
    """
    C, H = n_signals, rnn_dim
    s = 1.0 / math.sqrt(H)
    names_shapes = [
        ("e_wi_r", (C, H)), ("e_wi_z", (C, H)), ("e_wi_n", (C, H)),
        ("e_wh_r", (H, H)), ("e_wh_z", (H, H)), ("e_wh_n", (H, H)),
        ("e_b_r", (1, H)), ("e_b_z", (1, H)), ("e_b_in", (1, H)), ("e_b_hn", (1, H)),
        ("wa", (H, H)), ("ba", (1, H)), ("va", (1, H)),
        ("d_wc_r", (H, H)), ("d_wc_z", (H, H)), ("d_wc_n", (H, H)),
        ("d_wy_r", (1, H)), ("d_wy_z", (1, H)), ("d_wy_n", (1, H)),
        ("d_wh_r", (H, H)), ("d_wh_z", (H, H)), ("d_wh_n", (H, H)),
        ("d_b_r", (1, H)), ("d_b_z", (1, H)), ("d_b_in", (1, H)), ("d_b_hn", (1, H)),
        ("wo", (1, H)), ("bo", (1, 1)),
    ]
    ks = jax.random.split(key, len(names_shapes))
    return {
        name: jax.random.uniform(k, shape, jnp.float32, -s, s)
        for (name, shape), k in zip(names_shapes, ks)
    }


if __name__ == "__main__":
    B, size_seq, n_signals, rnn_dim, wk_ahead = 2, 8, 4, 32, 4

    key = jax.random.PRNGKey(0)
    k_seq, k_ally, k_par = jax.random.split(key, 3)

    seqs = jax.random.normal(k_seq, (B, size_seq, n_signals), jnp.float32)
    mask_seq = jnp.ones((B, size_seq), jnp.float32).at[1, 6:].set(0.0)  # pad tail of sample 1
    allys = jax.random.normal(k_ally, (B, wk_ahead), jnp.float32)

    params = init_params(k_par, n_signals, rnn_dim)

    preds, e_vals, att = forward(params, seqs, mask_seq, allys)
    jax.block_until_ready((preds, e_vals, att))

    assert preds.shape == (B, wk_ahead)
    assert e_vals.shape == (B, size_seq) and att.shape == (B, size_seq)
    assert bool(jnp.all(jnp.isfinite(preds)))
    assert bool(jnp.all(jnp.abs(jnp.sum(att, axis=1) - 1.0) < 1e-4))
    print("KERNEL_OK")
</pallas_src>

<mosaic_0001>
module attributes {stable_mosaic.version = 11 : i64} {
  func.func @seq2seq_kernel(%arg0: i32, %arg1: memref<2x8x4xf32, #tpu.memory_space<vmem>>, %arg2: memref<2x8xf32, #tpu.memory_space<vmem>>, %arg3: memref<2x4xf32, #tpu.memory_space<vmem>>, %arg4: memref<4x32xf32, #tpu.memory_space<vmem>>, %arg5: memref<4x32xf32, #tpu.memory_space<vmem>>, %arg6: memref<4x32xf32, #tpu.memory_space<vmem>>, %arg7: memref<32x32xf32, #tpu.memory_space<vmem>>, %arg8: memref<32x32xf32, #tpu.memory_space<vmem>>, %arg9: memref<32x32xf32, #tpu.memory_space<vmem>>, %arg10: memref<1x32xf32, #tpu.memory_space<vmem>>, %arg11: memref<1x32xf32, #tpu.memory_space<vmem>>, %arg12: memref<1x32xf32, #tpu.memory_space<vmem>>, %arg13: memref<1x32xf32, #tpu.memory_space<vmem>>, %arg14: memref<32x32xf32, #tpu.memory_space<vmem>>, %arg15: memref<1x32xf32, #tpu.memory_space<vmem>>, %arg16: memref<1x32xf32, #tpu.memory_space<vmem>>, %arg17: memref<32x32xf32, #tpu.memory_space<vmem>>, %arg18: memref<32x32xf32, #tpu.memory_space<vmem>>, %arg19: memref<32x32xf32, #tpu.memory_space<vmem>>, %arg20: memref<1x32xf32, #tpu.memory_space<vmem>>, %arg21: memref<1x32xf32, #tpu.memory_space<vmem>>, %arg22: memref<1x32xf32, #tpu.memory_space<vmem>>, %arg23: memref<32x32xf32, #tpu.memory_space<vmem>>, %arg24: memref<32x32xf32, #tpu.memory_space<vmem>>, %arg25: memref<32x32xf32, #tpu.memory_space<vmem>>, %arg26: memref<1x32xf32, #tpu.memory_space<vmem>>, %arg27: memref<1x32xf32, #tpu.memory_space<vmem>>, %arg28: memref<1x32xf32, #tpu.memory_space<vmem>>, %arg29: memref<1x32xf32, #tpu.memory_space<vmem>>, %arg30: memref<1x32xf32, #tpu.memory_space<vmem>>, %arg31: memref<1x1xf32, #tpu.memory_space<smem>>, %arg32: memref<2x128xf32, #tpu.memory_space<vmem>>, %arg33: memref<2x8x32xf32, #tpu.memory_space<vmem>>) attributes {dimension_semantics = [#tpu.dimension_semantics<parallel>], iteration_bounds = array<i64: 1>, scalar_prefetch = 0 : i64, scratch_operands = 1 : i64, tpu.core_type = #tpu.core_type<tc>, window_params = [{transform_indices = @transform_0, window_bounds = array<i64: 2, 8, 4>}, {transform_indices = @transform_1, window_bounds = array<i64: 2, 8>}, {transform_indices = @transform_2, window_bounds = array<i64: 2, 4>}, {pipeline_mode = #tpu.pipeline_mode<synchronous>, transform_indices = @transform_3, window_bounds = array<i64: 4, 32>}, {pipeline_mode = #tpu.pipeline_mode<synchronous>, transform_indices = @transform_4, window_bounds = array<i64: 4, 32>}, {pipeline_mode = #tpu.pipeline_mode<synchronous>, transform_indices = @transform_5, window_bounds = array<i64: 4, 32>}, {pipeline_mode = #tpu.pipeline_mode<synchronous>, transform_indices = @transform_6, window_bounds = array<i64: 32, 32>}, {pipeline_mode = #tpu.pipeline_mode<synchronous>, transform_indices = @transform_7, window_bounds = array<i64: 32, 32>}, {pipeline_mode = #tpu.pipeline_mode<synchronous>, transform_indices = @transform_8, window_bounds = array<i64: 32, 32>}, {pipeline_mode = #tpu.pipeline_mode<synchronous>, transform_indices = @transform_9, window_bounds = array<i64: 1, 32>}, {pipeline_mode = #tpu.pipeline_mode<synchronous>, transform_indices = @transform_10, window_bounds = array<i64: 1, 32>}, {pipeline_mode = #tpu.pipeline_mode<synchronous>, transform_indices = @transform_11, window_bounds = array<i64: 1, 32>}, {pipeline_mode = #tpu.pipeline_mode<synchronous>, transform_indices = @transform_12, window_bounds = array<i64: 1, 32>}, {pipeline_mode = #tpu.pipeline_mode<synchronous>, transform_indices = @transform_13, window_bounds = array<i64: 32, 32>}, {pipeline_mode = #tpu.pipeline_mode<synchronous>, transform_indices = @transform_14, window_bounds = array<i64: 1, 32>}, {pipeline_mode = #tpu.pipeline_mode<synchronous>, transform_indices = @transform_15, window_bounds = array<i64: 1, 32>}, {pipeline_mode = #tpu.pipeline_mode<synchronous>, transform_indices = @transform_16, window_bounds = array<i64: 32, 32>}, {pipeline_mode = #tpu.pipeline_mode<synchronous>, transform_indices = @transform_17, window_bounds = array<i64: 32, 32>}, {pipeline_mode = #tpu.pipeline_mode<synchronous>, transform_indices = @transform_18, window_bounds = array<i64: 32, 32>}, {pipeline_mode = #tpu.pipeline_mode<synchronous>, transform_indices = @transform_19, window_bounds = array<i64: 1, 32>}, {pipeline_mode = #tpu.pipeline_mode<synchronous>, transform_indices = @transform_20, window_bounds = array<i64: 1, 32>}, {pipeline_mode = #tpu.pipeline_mode<synchronous>, transform_indices = @transform_21, window_bounds = array<i64: 1, 32>}, {pipeline_mode = #tpu.pipeline_mode<synchronous>, transform_indices = @transform_22, window_bounds = array<i64: 32, 32>}, {pipeline_mode = #tpu.pipeline_mode<synchronous>, transform_indices = @transform_23, window_bounds = array<i64: 32, 32>}, {pipeline_mode = #tpu.pipeline_mode<synchronous>, transform_indices = @transform_24, window_bounds = array<i64: 32, 32>}, {pipeline_mode = #tpu.pipeline_mode<synchronous>, transform_indices = @transform_25, window_bounds = array<i64: 1, 32>}, {pipeline_mode = #tpu.pipeline_mode<synchronous>, transform_indices = @transform_26, window_bounds = array<i64: 1, 32>}, {pipeline_mode = #tpu.pipeline_mode<synchronous>, transform_indices = @transform_27, window_bounds = array<i64: 1, 32>}, {pipeline_mode = #tpu.pipeline_mode<synchronous>, transform_indices = @transform_28, window_bounds = array<i64: 1, 32>}, {pipeline_mode = #tpu.pipeline_mode<synchronous>, transform_indices = @transform_29, window_bounds = array<i64: 1, 32>}, {transform_indices = @transform_30, window_bounds = array<i64: 1, 1>}, {transform_indices = @transform_31, window_bounds = array<i64: 2, 128>}]} {
    %c0 = arith.constant 0 : index
    %c0_0 = arith.constant 0 : index
    %c0_1 = arith.constant 0 : index
    %0 = vector.load %arg1[%c0, %c0_0, %c0_1] : memref<2x8x4xf32, #tpu.memory_space<vmem>>, vector<2x8x4xf32>
    %c0_2 = arith.constant 0 : index
    %c0_3 = arith.constant 0 : index
    %1 = vector.load %arg2[%c0_2, %c0_3] : memref<2x8xf32, #tpu.memory_space<vmem>>, vector<2x8xf32>
    %c0_4 = arith.constant 0 : index
    %c0_5 = arith.constant 0 : index
    %2 = vector.load %arg3[%c0_4, %c0_5] : memref<2x4xf32, #tpu.memory_space<vmem>>, vector<2x4xf32>
    %3 = vector.shape_cast %1 : vector<2x8xf32> to vector<2x8x1xf32>
    %4 = vector.broadcast %3 : vector<2x8x1xf32> to vector<2x8x4xf32>
    %5 = arith.mulf %0, %4 : vector<2x8x4xf32>
    %6 = vector.shape_cast %5 : vector<2x8x4xf32> to vector<16x4xf32>
    %c0_6 = arith.constant 0 : index
    %c0_7 = arith.constant 0 : index
    %7 = vector.load %arg4[%c0_6, %c0_7] : memref<4x32xf32, #tpu.memory_space<vmem>>, vector<4x32xf32>
    %cst = arith.constant dense<0.000000e+00> : vector<16x32xf32>
    %8 = tpu.matmul %6, %7, %cst {dimension_numbers = #tpu.dot_dimension_numbers<[1], [0], [0], [1], [0, 0, 1, 1], [], []>} : vector<16x4xf32>, vector<4x32xf32>, vector<16x32xf32> -> vector<16x32xf32>
    %c0_8 = arith.constant 0 : index
    %c0_9 = arith.constant 0 : index
    %9 = vector.load %arg10[%c0_8, %c0_9] : memref<1x32xf32, #tpu.memory_space<vmem>>, vector<1x32xf32>
    %10 = vector.broadcast %9 : vector<1x32xf32> to vector<16x32xf32>
    %11 = arith.addf %8, %10 : vector<16x32xf32>
    %12 = vector.shape_cast %11 : vector<16x32xf32> to vector<2x8x32xf32>
    %c0_10 = arith.constant 0 : index
    %c0_11 = arith.constant 0 : index
    %13 = vector.load %arg5[%c0_10, %c0_11] : memref<4x32xf32, #tpu.memory_space<vmem>>, vector<4x32xf32>
    %cst_12 = arith.constant dense<0.000000e+00> : vector<16x32xf32>
    %14 = tpu.matmul %6, %13, %cst_12 {dimension_numbers = #tpu.dot_dimension_numbers<[1], [0], [0], [1], [0, 0, 1, 1], [], []>} : vector<16x4xf32>, vector<4x32xf32>, vector<16x32xf32> -> vector<16x32xf32>
    %c0_13 = arith.constant 0 : index
    %c0_14 = arith.constant 0 : index
    %15 = vector.load %arg11[%c0_13, %c0_14] : memref<1x32xf32, #tpu.memory_space<vmem>>, vector<1x32xf32>
    %16 = vector.broadcast %15 : vector<1x32xf32> to vector<16x32xf32>
    %17 = arith.addf %14, %16 : vector<16x32xf32>
    %18 = vector.shape_cast %17 : vector<16x32xf32> to vector<2x8x32xf32>
    %c0_15 = arith.constant 0 : index
    %c0_16 = arith.constant 0 : index
    %19 = vector.load %arg6[%c0_15, %c0_16] : memref<4x32xf32, #tpu.memory_space<vmem>>, vector<4x32xf32>
    %cst_17 = arith.constant dense<0.000000e+00> : vector<16x32xf32>
    %20 = tpu.matmul %6, %19, %cst_17 {dimension_numbers = #tpu.dot_dimension_numbers<[1], [0], [0], [1], [0, 0, 1, 1], [], []>} : vector<16x4xf32>, vector<4x32xf32>, vector<16x32xf32> -> vector<16x32xf32>
    %c0_18 = arith.constant 0 : index
    %c0_19 = arith.constant 0 : index
    %21 = vector.load %arg12[%c0_18, %c0_19] : memref<1x32xf32, #tpu.memory_space<vmem>>, vector<1x32xf32>
    %22 = vector.broadcast %21 : vector<1x32xf32> to vector<16x32xf32>
    %23 = arith.addf %20, %22 : vector<16x32xf32>
    %24 = vector.shape_cast %23 : vector<16x32xf32> to vector<2x8x32xf32>
    %c0_20 = arith.constant 0 : index
    %c0_21 = arith.constant 0 : index
    %25 = vector.load %arg7[%c0_20, %c0_21] : memref<32x32xf32, #tpu.memory_space<vmem>>, vector<32x32xf32>
    %c0_22 = arith.constant 0 : index
    %c0_23 = arith.constant 0 : index
    %26 = vector.load %arg8[%c0_22, %c0_23] : memref<32x32xf32, #tpu.memory_space<vmem>>, vector<32x32xf32>
    %c0_24 = arith.constant 0 : index
    %c0_25 = arith.constant 0 : index
    %27 = vector.load %arg9[%c0_24, %c0_25] : memref<32x32xf32, #tpu.memory_space<vmem>>, vector<32x32xf32>
    %c0_26 = arith.constant 0 : index
    %c0_27 = arith.constant 0 : index
    %28 = vector.load %arg13[%c0_26, %c0_27] : memref<1x32xf32, #tpu.memory_space<vmem>>, vector<1x32xf32>
    %cst_28 = arith.constant 0.000000e+00 : f32
    %29 = vector.broadcast %cst_28 : f32 to vector<2x32xf32>
    %cst_29 = arith.constant dense<0.000000e+00> : vector<2x32xf32>
    %30 = tpu.matmul %29, %25, %cst_29 {dimension_numbers = #tpu.dot_dimension_numbers<[1], [0], [0], [1], [0, 0, 1, 1], [], []>} : vector<2x32xf32>, vector<32x32xf32>, vector<2x32xf32> -> vector<2x32xf32>
    %cst_30 = arith.constant dense<0.000000e+00> : vector<2x32xf32>
    %31 = tpu.matmul %29, %26, %cst_30 {dimension_numbers = #tpu.dot_dimension_numbers<[1], [0], [0], [1], [0, 0, 1, 1], [], []>} : vector<2x32xf32>, vector<32x32xf32>, vector<2x32xf32> -> vector<2x32xf32>
    %cst_31 = arith.constant dense<0.000000e+00> : vector<2x32xf32>
    %32 = tpu.matmul %29, %27, %cst_31 {dimension_numbers = #tpu.dot_dimension_numbers<[1], [0], [0], [1], [0, 0, 1, 1], [], []>} : vector<2x32xf32>, vector<32x32xf32>, vector<2x32xf32> -> vector<2x32xf32>
    %33 = vector.broadcast %28 : vector<1x32xf32> to vector<2x32xf32>
    %34 = arith.addf %32, %33 : vector<2x32xf32>
    %35 = vector.extract_strided_slice %12 {offsets = [0, 0, 0], sizes = [2, 1, 32], strides = [1, 1, 1]} : vector<2x8x32xf32> to vector<2x1x32xf32>
    %36 = vector.shape_cast %35 : vector<2x1x32xf32> to vector<2x32xf32>
    %37 = arith.addf %36, %30 : vector<2x32xf32>
    %38 = arith.negf %37 : vector<2x32xf32>
    %39 = math.exp %38 : vector<2x32xf32>
    %cst_32 = arith.constant 1.000000e+00 : f32
    %40 = vector.broadcast %cst_32 : f32 to vector<2x32xf32>
    %41 = arith.addf %40, %39 : vector<2x32xf32>
    %42 = arith.divf %40, %41 : vector<2x32xf32>
    %43 = vector.extract_strided_slice %18 {offsets = [0, 0, 0], sizes = [2, 1, 32], strides = [1, 1, 1]} : vector<2x8x32xf32> to vector<2x1x32xf32>
    %44 = vector.shape_cast %43 : vector<2x1x32xf32> to vector<2x32xf32>
    %45 = arith.addf %44, %31 : vector<2x32xf32>
    %46 = arith.negf %45 : vector<2x32xf32>
    %47 = math.exp %46 : vector<2x32xf32>
    %cst_33 = arith.constant 1.000000e+00 : f32
    %48 = vector.broadcast %cst_33 : f32 to vector<2x32xf32>
    %49 = arith.addf %48, %47 : vector<2x32xf32>
    %50 = arith.divf %48, %49 : vector<2x32xf32>
    %51 = vector.extract_strided_slice %24 {offsets = [0, 0, 0], sizes = [2, 1, 32], strides = [1, 1, 1]} : vector<2x8x32xf32> to vector<2x1x32xf32>
    %52 = vector.shape_cast %51 : vector<2x1x32xf32> to vector<2x32xf32>
    %53 = arith.mulf %42, %34 : vector<2x32xf32>
    %54 = arith.addf %52, %53 : vector<2x32xf32>
    %55 = math.tanh %54 : vector<2x32xf32>
    %cst_34 = arith.constant 1.000000e+00 : f32
    %56 = vector.broadcast %cst_34 : f32 to vector<2x32xf32>
    %57 = arith.subf %56, %50 : vector<2x32xf32>
    %58 = arith.mulf %57, %55 : vector<2x32xf32>
    %59 = arith.mulf %50, %29 : vector<2x32xf32>
    %60 = arith.addf %58, %59 : vector<2x32xf32>
    %61 = vector.shape_cast %60 : vector<2x32xf32> to vector<2x1x32xf32>
    %c0_35 = arith.constant 0 : index
    %c0_36 = arith.constant 0 : index
    %c0_37 = arith.constant 0 : index
    %62 = vector.load %arg33[%c0_35, %c0_36, %c0_37] : memref<2x8x32xf32, #tpu.memory_space<vmem>>, vector<2x1x32xf32>
    tpu.vector_store %arg33[%c0_35, %c0_36, %c0_37], %61 {strides = array<i32>} : memref<2x8x32xf32, #tpu.memory_space<vmem>>, vector<2x1x32xf32>,
    %cst_38 = arith.constant dense<0.000000e+00> : vector<2x32xf32>
    %63 = tpu.matmul %60, %25, %cst_38 {dimension_numbers = #tpu.dot_dimension_numbers<[1], [0], [0], [1], [0, 0, 1, 1], [], []>} : vector<2x32xf32>, vector<32x32xf32>, vector<2x32xf32> -> vector<2x32xf32>
    %cst_39 = arith.constant dense<0.000000e+00> : vector<2x32xf32>
    %64 = tpu.matmul %60, %26, %cst_39 {dimension_numbers = #tpu.dot_dimension_numbers<[1], [0], [0], [1], [0, 0, 1, 1], [], []>} : vector<2x32xf32>, vector<32x32xf32>, vector<2x32xf32> -> vector<2x32xf32>
    %cst_40 = arith.constant dense<0.000000e+00> : vector<2x32xf32>
    %65 = tpu.matmul %60, %27, %cst_40 {dimension_numbers = #tpu.dot_dimension_numbers<[1], [0], [0], [1], [0, 0, 1, 1], [], []>} : vector<2x32xf32>, vector<32x32xf32>, vector<2x32xf32> -> vector<2x32xf32>
    %66 = vector.broadcast %28 : vector<1x32xf32> to vector<2x32xf32>
    %67 = arith.addf %65, %66 : vector<2x32xf32>
    %68 = vector.extract_strided_slice %12 {offsets = [0, 1, 0], sizes = [2, 1, 32], strides = [1, 1, 1]} : vector<2x8x32xf32> to vector<2x1x32xf32>
    %69 = vector.shape_cast %68 : vector<2x1x32xf32> to vector<2x32xf32>
    %70 = arith.addf %69, %63 : vector<2x32xf32>
    %71 = arith.negf %70 : vector<2x32xf32>
    %72 = math.exp %71 : vector<2x32xf32>
    %cst_41 = arith.constant 1.000000e+00 : f32
    %73 = vector.broadcast %cst_41 : f32 to vector<2x32xf32>
    %74 = arith.addf %73, %72 : vector<2x32xf32>
    %75 = arith.divf %73, %74 : vector<2x32xf32>
    %76 = vector.extract_strided_slice %18 {offsets = [0, 1, 0], sizes = [2, 1, 32], strides = [1, 1, 1]} : vector<2x8x32xf32> to vector<2x1x32xf32>
    %77 = vector.shape_cast %76 : vector<2x1x32xf32> to vector<2x32xf32>
    %78 = arith.addf %77, %64 : vector<2x32xf32>
    %79 = arith.negf %78 : vector<2x32xf32>
    %80 = math.exp %79 : vector<2x32xf32>
    %cst_42 = arith.constant 1.000000e+00 : f32
    %81 = vector.broadcast %cst_42 : f32 to vector<2x32xf32>
    %82 = arith.addf %81, %80 : vector<2x32xf32>
    %83 = arith.divf %81, %82 : vector<2x32xf32>
    %84 = vector.extract_strided_slice %24 {offsets = [0, 1, 0], sizes = [2, 1, 32], strides = [1, 1, 1]} : vector<2x8x32xf32> to vector<2x1x32xf32>
    %85 = vector.shape_cast %84 : vector<2x1x32xf32> to vector<2x32xf32>
    %86 = arith.mulf %75, %67 : vector<2x32xf32>
    %87 = arith.addf %85, %86 : vector<2x32xf32>
    %88 = math.tanh %87 : vector<2x32xf32>
    %cst_43 = arith.constant 1.000000e+00 : f32
    %89 = vector.broadcast %cst_43 : f32 to vector<2x32xf32>
    %90 = arith.subf %89, %83 : vector<2x32xf32>
    %91 = arith.mulf %90, %88 : vector<2x32xf32>
    %92 = arith.mulf %83, %60 : vector<2x32xf32>
    %93 = arith.addf %91, %92 : vector<2x32xf32>
    %94 = vector.shape_cast %93 : vector<2x32xf32> to vector<2x1x32xf32>
    %c0_44 = arith.constant 0 : index
    %c1 = arith.constant 1 : index
    %c0_45 = arith.constant 0 : index
    %95 = vector.load %arg33[%c0_44, %c1, %c0_45] : memref<2x8x32xf32, #tpu.memory_space<vmem>>, vector<2x1x32xf32>
    tpu.vector_store %arg33[%c0_44, %c1, %c0_45], %94 {strides = array<i32>} : memref<2x8x32xf32, #tpu.memory_space<vmem>>, vector<2x1x32xf32>,
    %cst_46 = arith.constant dense<0.000000e+00> : vector<2x32xf32>
    %96 = tpu.matmul %93, %25, %cst_46 {dimension_numbers = #tpu.dot_dimension_numbers<[1], [0], [0], [1], [0, 0, 1, 1], [], []>} : vector<2x32xf32>, vector<32x32xf32>, vector<2x32xf32> -> vector<2x32xf32>
    %cst_47 = arith.constant dense<0.000000e+00> : vector<2x32xf32>
    %97 = tpu.matmul %93, %26, %cst_47 {dimension_numbers = #tpu.dot_dimension_numbers<[1], [0], [0], [1], [0, 0, 1, 1], [], []>} : vector<2x32xf32>, vector<32x32xf32>, vector<2x32xf32> -> vector<2x32xf32>
    %cst_48 = arith.constant dense<0.000000e+00> : vector<2x32xf32>
    %98 = tpu.matmul %93, %27, %cst_48 {dimension_numbers = #tpu.dot_dimension_numbers<[1], [0], [0], [1], [0, 0, 1, 1], [], []>} : vector<2x32xf32>, vector<32x32xf32>, vector<2x32xf32> -> vector<2x32xf32>
    %99 = vector.broadcast %28 : vector<1x32xf32> to vector<2x32xf32>
    %100 = arith.addf %98, %99 : vector<2x32xf32>
    %101 = vector.extract_strided_slice %12 {offsets = [0, 2, 0], sizes = [2, 1, 32], strides = [1, 1, 1]} : vector<2x8x32xf32> to vector<2x1x32xf32>
    %102 = vector.shape_cast %101 : vector<2x1x32xf32> to vector<2x32xf32>
    %103 = arith.addf %102, %96 : vector<2x32xf32>
    %104 = arith.negf %103 : vector<2x32xf32>
    %105 = math.exp %104 : vector<2x32xf32>
    %cst_49 = arith.constant 1.000000e+00 : f32
    %106 = vector.broadcast %cst_49 : f32 to vector<2x32xf32>
    %107 = arith.addf %106, %105 : vector<2x32xf32>
    %108 = arith.divf %106, %107 : vector<2x32xf32>
    %109 = vector.extract_strided_slice %18 {offsets = [0, 2, 0], sizes = [2, 1, 32], strides = [1, 1, 1]} : vector<2x8x32xf32> to vector<2x1x32xf32>
    %110 = vector.shape_cast %109 : vector<2x1x32xf32> to vector<2x32xf32>
    %111 = arith.addf %110, %97 : vector<2x32xf32>
    %112 = arith.negf %111 : vector<2x32xf32>
    %113 = math.exp %112 : vector<2x32xf32>
    %cst_50 = arith.constant 1.000000e+00 : f32
    %114 = vector.broadcast %cst_50 : f32 to vector<2x32xf32>
    %115 = arith.addf %114, %113 : vector<2x32xf32>
    %116 = arith.divf %114, %115 : vector<2x32xf32>
    %117 = vector.extract_strided_slice %24 {offsets = [0, 2, 0], sizes = [2, 1, 32], strides = [1, 1, 1]} : vector<2x8x32xf32> to vector<2x1x32xf32>
    %118 = vector.shape_cast %117 : vector<2x1x32xf32> to vector<2x32xf32>
    %119 = arith.mulf %108, %100 : vector<2x32xf32>
    %120 = arith.addf %118, %119 : vector<2x32xf32>
    %121 = math.tanh %120 : vector<2x32xf32>
    %cst_51 = arith.constant 1.000000e+00 : f32
    %122 = vector.broadcast %cst_51 : f32 to vector<2x32xf32>
    %123 = arith.subf %122, %116 : vector<2x32xf32>
    %124 = arith.mulf %123, %121 : vector<2x32xf32>
    %125 = arith.mulf %116, %93 : vector<2x32xf32>
    %126 = arith.addf %124, %125 : vector<2x32xf32>
    %127 = vector.shape_cast %126 : vector<2x32xf32> to vector<2x1x32xf32>
    %c0_52 = arith.constant 0 : index
    %c2 = arith.constant 2 : index
    %c0_53 = arith.constant 0 : index
    %128 = vector.load %arg33[%c0_52, %c2, %c0_53] : memref<2x8x32xf32, #tpu.memory_space<vmem>>, vector<2x1x32xf32>
    tpu.vector_store %arg33[%c0_52, %c2, %c0_53], %127 {strides = array<i32>} : memref<2x8x32xf32, #tpu.memory_space<vmem>>, vector<2x1x32xf32>,
    %cst_54 = arith.constant dense<0.000000e+00> : vector<2x32xf32>
    %129 = tpu.matmul %126, %25, %cst_54 {dimension_numbers = #tpu.dot_dimension_numbers<[1], [0], [0], [1], [0, 0, 1, 1], [], []>} : vector<2x32xf32>, vector<32x32xf32>, vector<2x32xf32> -> vector<2x32xf32>
    %cst_55 = arith.constant dense<0.000000e+00> : vector<2x32xf32>
    %130 = tpu.matmul %126, %26, %cst_55 {dimension_numbers = #tpu.dot_dimension_numbers<[1], [0], [0], [1], [0, 0, 1, 1], [], []>} : vector<2x32xf32>, vector<32x32xf32>, vector<2x32xf32> -> vector<2x32xf32>
    %cst_56 = arith.constant dense<0.000000e+00> : vector<2x32xf32>
    %131 = tpu.matmul %126, %27, %cst_56 {dimension_numbers = #tpu.dot_dimension_numbers<[1], [0], [0], [1], [0, 0, 1, 1], [], []>} : vector<2x32xf32>, vector<32x32xf32>, vector<2x32xf32> -> vector<2x32xf32>
    %132 = vector.broadcast %28 : vector<1x32xf32> to vector<2x32xf32>
    %133 = arith.addf %131, %132 : vector<2x32xf32>
    %134 = vector.extract_strided_slice %12 {offsets = [0, 3, 0], sizes = [2, 1, 32], strides = [1, 1, 1]} : vector<2x8x32xf32> to vector<2x1x32xf32>
    %135 = vector.shape_cast %134 : vector<2x1x32xf32> to vector<2x32xf32>
    %136 = arith.addf %135, %129 : vector<2x32xf32>
    %137 = arith.negf %136 : vector<2x32xf32>
    %138 = math.exp %137 : vector<2x32xf32>
    %cst_57 = arith.constant 1.000000e+00 : f32
    %139 = vector.broadcast %cst_57 : f32 to vector<2x32xf32>
    %140 = arith.addf %139, %138 : vector<2x32xf32>
    %141 = arith.divf %139, %140 : vector<2x32xf32>
    %142 = vector.extract_strided_slice %18 {offsets = [0, 3, 0], sizes = [2, 1, 32], strides = [1, 1, 1]} : vector<2x8x32xf32> to vector<2x1x32xf32>
    %143 = vector.shape_cast %142 : vector<2x1x32xf32> to vector<2x32xf32>
    %144 = arith.addf %143, %130 : vector<2x32xf32>
    %145 = arith.negf %144 : vector<2x32xf32>
    %146 = math.exp %145 : vector<2x32xf32>
    %cst_58 = arith.constant 1.000000e+00 : f32
    %147 = vector.broadcast %cst_58 : f32 to vector<2x32xf32>
    %148 = arith.addf %147, %146 : vector<2x32xf32>
    %149 = arith.divf %147, %148 : vector<2x32xf32>
    %150 = vector.extract_strided_slice %24 {offsets = [0, 3, 0], sizes = [2, 1, 32], strides = [1, 1, 1]} : vector<2x8x32xf32> to vector<2x1x32xf32>
    %151 = vector.shape_cast %150 : vector<2x1x32xf32> to vector<2x32xf32>
    %152 = arith.mulf %141, %133 : vector<2x32xf32>
    %153 = arith.addf %151, %152 : vector<2x32xf32>
    %154 = math.tanh %153 : vector<2x32xf32>
    %cst_59 = arith.constant 1.000000e+00 : f32
    %155 = vector.broadcast %cst_59 : f32 to vector<2x32xf32>
    %156 = arith.subf %155, %149 : vector<2x32xf32>
    %157 = arith.mulf %156, %154 : vector<2x32xf32>
    %158 = arith.mulf %149, %126 : vector<2x32xf32>
    %159 = arith.addf %157, %158 : vector<2x32xf32>
    %160 = vector.shape_cast %159 : vector<2x32xf32> to vector<2x1x32xf32>
    %c0_60 = arith.constant 0 : index
    %c3 = arith.constant 3 : index
    %c0_61 = arith.constant 0 : index
    %161 = vector.load %arg33[%c0_60, %c3, %c0_61] : memref<2x8x32xf32, #tpu.memory_space<vmem>>, vector<2x1x32xf32>
    tpu.vector_store %arg33[%c0_60, %c3, %c0_61], %160 {strides = array<i32>} : memref<2x8x32xf32, #tpu.memory_space<vmem>>, vector<2x1x32xf32>,
    %cst_62 = arith.constant dense<0.000000e+00> : vector<2x32xf32>
    %162 = tpu.matmul %159, %25, %cst_62 {dimension_numbers = #tpu.dot_dimension_numbers<[1], [0], [0], [1], [0, 0, 1, 1], [], []>} : vector<2x32xf32>, vector<32x32xf32>, vector<2x32xf32> -> vector<2x32xf32>
    %cst_63 = arith.constant dense<0.000000e+00> : vector<2x32xf32>
    %163 = tpu.matmul %159, %26, %cst_63 {dimension_numbers = #tpu.dot_dimension_numbers<[1], [0], [0], [1], [0, 0, 1, 1], [], []>} : vector<2x32xf32>, vector<32x32xf32>, vector<2x32xf32> -> vector<2x32xf32>
    %cst_64 = arith.constant dense<0.000000e+00> : vector<2x32xf32>
    %164 = tpu.matmul %159, %27, %cst_64 {dimension_numbers = #tpu.dot_dimension_numbers<[1], [0], [0], [1], [0, 0, 1, 1], [], []>} : vector<2x32xf32>, vector<32x32xf32>, vector<2x32xf32> -> vector<2x32xf32>
    %165 = vector.broadcast %28 : vector<1x32xf32> to vector<2x32xf32>
    %166 = arith.addf %164, %165 : vector<2x32xf32>
    %167 = vector.extract_strided_slice %12 {offsets = [0, 4, 0], sizes = [2, 1, 32], strides = [1, 1, 1]} : vector<2x8x32xf32> to vector<2x1x32xf32>
    %168 = vector.shape_cast %167 : vector<2x1x32xf32> to vector<2x32xf32>
    %169 = arith.addf %168, %162 : vector<2x32xf32>
    %170 = arith.negf %169 : vector<2x32xf32>
    %171 = math.exp %170 : vector<2x32xf32>
    %cst_65 = arith.constant 1.000000e+00 : f32
    %172 = vector.broadcast %cst_65 : f32 to vector<2x32xf32>
    %173 = arith.addf %172, %171 : vector<2x32xf32>
    %174 = arith.divf %172, %173 : vector<2x32xf32>
    %175 = vector.extract_strided_slice %18 {offsets = [0, 4, 0], sizes = [2, 1, 32], strides = [1, 1, 1]} : vector<2x8x32xf32> to vector<2x1x32xf32>
    %176 = vector.shape_cast %175 : vector<2x1x32xf32> to vector<2x32xf32>
    %177 = arith.addf %176, %163 : vector<2x32xf32>
    %178 = arith.negf %177 : vector<2x32xf32>
    %179 = math.exp %178 : vector<2x32xf32>
    %cst_66 = arith.constant 1.000000e+00 : f32
    %180 = vector.broadcast %cst_66 : f32 to vector<2x32xf32>
    %181 = arith.addf %180, %179 : vector<2x32xf32>
    %182 = arith.divf %180, %181 : vector<2x32xf32>
    %183 = vector.extract_strided_slice %24 {offsets = [0, 4, 0], sizes = [2, 1, 32], strides = [1, 1, 1]} : vector<2x8x32xf32> to vector<2x1x32xf32>
    %184 = vector.shape_cast %183 : vector<2x1x32xf32> to vector<2x32xf32>
    %185 = arith.mulf %174, %166 : vector<2x32xf32>
    %186 = arith.addf %184, %185 : vector<2x32xf32>
    %187 = math.tanh %186 : vector<2x32xf32>
    %cst_67 = arith.constant 1.000000e+00 : f32
    %188 = vector.broadcast %cst_67 : f32 to vector<2x32xf32>
    %189 = arith.subf %188, %182 : vector<2x32xf32>
    %190 = arith.mulf %189, %187 : vector<2x32xf32>
    %191 = arith.mulf %182, %159 : vector<2x32xf32>
    %192 = arith.addf %190, %191 : vector<2x32xf32>
    %193 = vector.shape_cast %192 : vector<2x32xf32> to vector<2x1x32xf32>
    %c0_68 = arith.constant 0 : index
    %c4 = arith.constant 4 : index
    %c0_69 = arith.constant 0 : index
    %194 = vector.load %arg33[%c0_68, %c4, %c0_69] : memref<2x8x32xf32, #tpu.memory_space<vmem>>, vector<2x1x32xf32>
    tpu.vector_store %arg33[%c0_68, %c4, %c0_69], %193 {strides = array<i32>} : memref<2x8x32xf32, #tpu.memory_space<vmem>>, vector<2x1x32xf32>,
    %cst_70 = arith.constant dense<0.000000e+00> : vector<2x32xf32>
    %195 = tpu.matmul %192, %25, %cst_70 {dimension_numbers = #tpu.dot_dimension_numbers<[1], [0], [0], [1], [0, 0, 1, 1], [], []>} : vector<2x32xf32>, vector<32x32xf32>, vector<2x32xf32> -> vector<2x32xf32>
    %cst_71 = arith.constant dense<0.000000e+00> : vector<2x32xf32>
    %196 = tpu.matmul %192, %26, %cst_71 {dimension_numbers = #tpu.dot_dimension_numbers<[1], [0], [0], [1], [0, 0, 1, 1], [], []>} : vector<2x32xf32>, vector<32x32xf32>, vector<2x32xf32> -> vector<2x32xf32>
    %cst_72 = arith.constant dense<0.000000e+00> : vector<2x32xf32>
    %197 = tpu.matmul %192, %27, %cst_72 {dimension_numbers = #tpu.dot_dimension_numbers<[1], [0], [0], [1], [0, 0, 1, 1], [], []>} : vector<2x32xf32>, vector<32x32xf32>, vector<2x32xf32> -> vector<2x32xf32>
    %198 = vector.broadcast %28 : vector<1x32xf32> to vector<2x32xf32>
    %199 = arith.addf %197, %198 : vector<2x32xf32>
    %200 = vector.extract_strided_slice %12 {offsets = [0, 5, 0], sizes = [2, 1, 32], strides = [1, 1, 1]} : vector<2x8x32xf32> to vector<2x1x32xf32>
    %201 = vector.shape_cast %200 : vector<2x1x32xf32> to vector<2x32xf32>
    %202 = arith.addf %201, %195 : vector<2x32xf32>
    %203 = arith.negf %202 : vector<2x32xf32>
    %204 = math.exp %203 : vector<2x32xf32>
    %cst_73 = arith.constant 1.000000e+00 : f32
    %205 = vector.broadcast %cst_73 : f32 to vector<2x32xf32>
    %206 = arith.addf %205, %204 : vector<2x32xf32>
    %207 = arith.divf %205, %206 : vector<2x32xf32>
    %208 = vector.extract_strided_slice %18 {offsets = [0, 5, 0], sizes = [2, 1, 32], strides = [1, 1, 1]} : vector<2x8x32xf32> to vector<2x1x32xf32>
    %209 = vector.shape_cast %208 : vector<2x1x32xf32> to vector<2x32xf32>
    %210 = arith.addf %209, %196 : vector<2x32xf32>
    %211 = arith.negf %210 : vector<2x32xf32>
    %212 = math.exp %211 : vector<2x32xf32>
    %cst_74 = arith.constant 1.000000e+00 : f32
    %213 = vector.broadcast %cst_74 : f32 to vector<2x32xf32>
    %214 = arith.addf %213, %212 : vector<2x32xf32>
    %215 = arith.divf %213, %214 : vector<2x32xf32>
    %216 = vector.extract_strided_slice %24 {offsets = [0, 5, 0], sizes = [2, 1, 32], strides = [1, 1, 1]} : vector<2x8x32xf32> to vector<2x1x32xf32>
    %217 = vector.shape_cast %216 : vector<2x1x32xf32> to vector<2x32xf32>
    %218 = arith.mulf %207, %199 : vector<2x32xf32>
    %219 = arith.addf %217, %218 : vector<2x32xf32>
    %220 = math.tanh %219 : vector<2x32xf32>
    %cst_75 = arith.constant 1.000000e+00 : f32
    %221 = vector.broadcast %cst_75 : f32 to vector<2x32xf32>
    %222 = arith.subf %221, %215 : vector<2x32xf32>
    %223 = arith.mulf %222, %220 : vector<2x32xf32>
    %224 = arith.mulf %215, %192 : vector<2x32xf32>
    %225 = arith.addf %223, %224 : vector<2x32xf32>
    %226 = vector.shape_cast %225 : vector<2x32xf32> to vector<2x1x32xf32>
    %c0_76 = arith.constant 0 : index
    %c5 = arith.constant 5 : index
    %c0_77 = arith.constant 0 : index
    %227 = vector.load %arg33[%c0_76, %c5, %c0_77] : memref<2x8x32xf32, #tpu.memory_space<vmem>>, vector<2x1x32xf32>
    tpu.vector_store %arg33[%c0_76, %c5, %c0_77], %226 {strides = array<i32>} : memref<2x8x32xf32, #tpu.memory_space<vmem>>, vector<2x1x32xf32>,
    %cst_78 = arith.constant dense<0.000000e+00> : vector<2x32xf32>
    %228 = tpu.matmul %225, %25, %cst_78 {dimension_numbers = #tpu.dot_dimension_numbers<[1], [0], [0], [1], [0, 0, 1, 1], [], []>} : vector<2x32xf32>, vector<32x32xf32>, vector<2x32xf32> -> vector<2x32xf32>
    %cst_79 = arith.constant dense<0.000000e+00> : vector<2x32xf32>
    %229 = tpu.matmul %225, %26, %cst_79 {dimension_numbers = #tpu.dot_dimension_numbers<[1], [0], [0], [1], [0, 0, 1, 1], [], []>} : vector<2x32xf32>, vector<32x32xf32>, vector<2x32xf32> -> vector<2x32xf32>
    %cst_80 = arith.constant dense<0.000000e+00> : vector<2x32xf32>
    %230 = tpu.matmul %225, %27, %cst_80 {dimension_numbers = #tpu.dot_dimension_numbers<[1], [0], [0], [1], [0, 0, 1, 1], [], []>} : vector<2x32xf32>, vector<32x32xf32>, vector<2x32xf32> -> vector<2x32xf32>
    %231 = vector.broadcast %28 : vector<1x32xf32> to vector<2x32xf32>
    %232 = arith.addf %230, %231 : vector<2x32xf32>
    %233 = vector.extract_strided_slice %12 {offsets = [0, 6, 0], sizes = [2, 1, 32], strides = [1, 1, 1]} : vector<2x8x32xf32> to vector<2x1x32xf32>
    %234 = vector.shape_cast %233 : vector<2x1x32xf32> to vector<2x32xf32>
    %235 = arith.addf %234, %228 : vector<2x32xf32>
    %236 = arith.negf %235 : vector<2x32xf32>
    %237 = math.exp %236 : vector<2x32xf32>
    %cst_81 = arith.constant 1.000000e+00 : f32
    %238 = vector.broadcast %cst_81 : f32 to vector<2x32xf32>
    %239 = arith.addf %238, %237 : vector<2x32xf32>
    %240 = arith.divf %238, %239 : vector<2x32xf32>
    %241 = vector.extract_strided_slice %18 {offsets = [0, 6, 0], sizes = [2, 1, 32], strides = [1, 1, 1]} : vector<2x8x32xf32> to vector<2x1x32xf32>
    %242 = vector.shape_cast %241 : vector<2x1x32xf32> to vector<2x32xf32>
    %243 = arith.addf %242, %229 : vector<2x32xf32>
    %244 = arith.negf %243 : vector<2x32xf32>
    %245 = math.exp %244 : vector<2x32xf32>
    %cst_82 = arith.constant 1.000000e+00 : f32
    %246 = vector.broadcast %cst_82 : f32 to vector<2x32xf32>
    %247 = arith.addf %246, %245 : vector<2x32xf32>
    %248 = arith.divf %246, %247 : vector<2x32xf32>
    %249 = vector.extract_strided_slice %24 {offsets = [0, 6, 0], sizes = [2, 1, 32], strides = [1, 1, 1]} : vector<2x8x32xf32> to vector<2x1x32xf32>
    %250 = vector.shape_cast %249 : vector<2x1x32xf32> to vector<2x32xf32>
    %251 = arith.mulf %240, %232 : vector<2x32xf32>
    %252 = arith.addf %250, %251 : vector<2x32xf32>
    %253 = math.tanh %252 : vector<2x32xf32>
    %cst_83 = arith.constant 1.000000e+00 : f32
    %254 = vector.broadcast %cst_83 : f32 to vector<2x32xf32>
    %255 = arith.subf %254, %248 : vector<2x32xf32>
    %256 = arith.mulf %255, %253 : vector<2x32xf32>
    %257 = arith.mulf %248, %225 : vector<2x32xf32>
    %258 = arith.addf %256, %257 : vector<2x32xf32>
    %259 = vector.shape_cast %258 : vector<2x32xf32> to vector<2x1x32xf32>
    %c0_84 = arith.constant 0 : index
    %c6 = arith.constant 6 : index
    %c0_85 = arith.constant 0 : index
    %260 = vector.load %arg33[%c0_84, %c6, %c0_85] : memref<2x8x32xf32, #tpu.memory_space<vmem>>, vector<2x1x32xf32>
    tpu.vector_store %arg33[%c0_84, %c6, %c0_85], %259 {strides = array<i32>} : memref<2x8x32xf32, #tpu.memory_space<vmem>>, vector<2x1x32xf32>,
    %cst_86 = arith.constant dense<0.000000e+00> : vector<2x32xf32>
    %261 = tpu.matmul %258, %25, %cst_86 {dimension_numbers = #tpu.dot_dimension_numbers<[1], [0], [0], [1], [0, 0, 1, 1], [], []>} : vector<2x32xf32>, vector<32x32xf32>, vector<2x32xf32> -> vector<2x32xf32>
    %cst_87 = arith.constant dense<0.000000e+00> : vector<2x32xf32>
    %262 = tpu.matmul %258, %26, %cst_87 {dimension_numbers = #tpu.dot_dimension_numbers<[1], [0], [0], [1], [0, 0, 1, 1], [], []>} : vector<2x32xf32>, vector<32x32xf32>, vector<2x32xf32> -> vector<2x32xf32>
    %cst_88 = arith.constant dense<0.000000e+00> : vector<2x32xf32>
    %263 = tpu.matmul %258, %27, %cst_88 {dimension_numbers = #tpu.dot_dimension_numbers<[1], [0], [0], [1], [0, 0, 1, 1], [], []>} : vector<2x32xf32>, vector<32x32xf32>, vector<2x32xf32> -> vector<2x32xf32>
    %264 = vector.broadcast %28 : vector<1x32xf32> to vector<2x32xf32>
    %265 = arith.addf %263, %264 : vector<2x32xf32>
    %266 = vector.extract_strided_slice %12 {offsets = [0, 7, 0], sizes = [2, 1, 32], strides = [1, 1, 1]} : vector<2x8x32xf32> to vector<2x1x32xf32>
    %267 = vector.shape_cast %266 : vector<2x1x32xf32> to vector<2x32xf32>
    %268 = arith.addf %267, %261 : vector<2x32xf32>
    %269 = arith.negf %268 : vector<2x32xf32>
    %270 = math.exp %269 : vector<2x32xf32>
    %cst_89 = arith.constant 1.000000e+00 : f32
    %271 = vector.broadcast %cst_89 : f32 to vector<2x32xf32>
    %272 = arith.addf %271, %270 : vector<2x32xf32>
    %273 = arith.divf %271, %272 : vector<2x32xf32>
    %274 = vector.extract_strided_slice %18 {offsets = [0, 7, 0], sizes = [2, 1, 32], strides = [1, 1, 1]} : vector<2x8x32xf32> to vector<2x1x32xf32>
    %275 = vector.shape_cast %274 : vector<2x1x32xf32> to vector<2x32xf32>
    %276 = arith.addf %275, %262 : vector<2x32xf32>
    %277 = arith.negf %276 : vector<2x32xf32>
    %278 = math.exp %277 : vector<2x32xf32>
    %cst_90 = arith.constant 1.000000e+00 : f32
    %279 = vector.broadcast %cst_90 : f32 to vector<2x32xf32>
    %280 = arith.addf %279, %278 : vector<2x32xf32>
    %281 = arith.divf %279, %280 : vector<2x32xf32>
    %282 = vector.extract_strided_slice %24 {offsets = [0, 7, 0], sizes = [2, 1, 32], strides = [1, 1, 1]} : vector<2x8x32xf32> to vector<2x1x32xf32>
    %283 = vector.shape_cast %282 : vector<2x1x32xf32> to vector<2x32xf32>
    %284 = arith.mulf %273, %265 : vector<2x32xf32>
    %285 = arith.addf %283, %284 : vector<2x32xf32>
    %286 = math.tanh %285 : vector<2x32xf32>
    %cst_91 = arith.constant 1.000000e+00 : f32
    %287 = vector.broadcast %cst_91 : f32 to vector<2x32xf32>
    %288 = arith.subf %287, %281 : vector<2x32xf32>
    %289 = arith.mulf %288, %286 : vector<2x32xf32>
    %290 = arith.mulf %281, %258 : vector<2x32xf32>
    %291 = arith.addf %289, %290 : vector<2x32xf32>
    %292 = vector.shape_cast %291 : vector<2x32xf32> to vector<2x1x32xf32>
    %c0_92 = arith.constant 0 : index
    %c7 = arith.constant 7 : index
    %c0_93 = arith.constant 0 : index
    %293 = vector.load %arg33[%c0_92, %c7, %c0_93] : memref<2x8x32xf32, #tpu.memory_space<vmem>>, vector<2x1x32xf32>
    tpu.vector_store %arg33[%c0_92, %c7, %c0_93], %292 {strides = array<i32>} : memref<2x8x32xf32, #tpu.memory_space<vmem>>, vector<2x1x32xf32>,
    %c0_94 = arith.constant 0 : index
    %c0_95 = arith.constant 0 : index
    %c0_96 = arith.constant 0 : index
    %294 = vector.load %arg33[%c0_94, %c0_95, %c0_96] : memref<2x8x32xf32, #tpu.memory_space<vmem>>, vector<2x8x32xf32>
    %295 = vector.shape_cast %294 : vector<2x8x32xf32> to vector<16x32xf32>
    %c0_97 = arith.constant 0 : index
    %c0_98 = arith.constant 0 : index
    %296 = vector.load %arg14[%c0_97, %c0_98] : memref<32x32xf32, #tpu.memory_space<vmem>>, vector<32x32xf32>
    %cst_99 = arith.constant dense<0.000000e+00> : vector<16x32xf32>
    %297 = tpu.matmul %295, %296, %cst_99 {dimension_numbers = #tpu.dot_dimension_numbers<[1], [0], [0], [1], [0, 0, 1, 1], [], []>} : vector<16x32xf32>, vector<32x32xf32>, vector<16x32xf32> -> vector<16x32xf32>
    %c0_100 = arith.constant 0 : index
    %c0_101 = arith.constant 0 : index
    %298 = vector.load %arg15[%c0_100, %c0_101] : memref<1x32xf32, #tpu.memory_space<vmem>>, vector<1x32xf32>
    %299 = vector.broadcast %298 : vector<1x32xf32> to vector<16x32xf32>
    %300 = arith.addf %297, %299 : vector<16x32xf32>
    %301 = math.tanh %300 : vector<16x32xf32>
    %302 = vector.shape_cast %301 : vector<16x32xf32> to vector<2x8x32xf32>
    %c0_102 = arith.constant 0 : index
    %c0_103 = arith.constant 0 : index
    %303 = vector.load %arg16[%c0_102, %c0_103] : memref<1x32xf32, #tpu.memory_space<vmem>>, vector<1x32xf32>
    %304 = vector.shape_cast %303 : vector<1x32xf32> to vector<1x1x32xf32>
    %305 = vector.broadcast %304 : vector<1x1x32xf32> to vector<2x8x32xf32>
    %306 = arith.mulf %302, %305 : vector<2x8x32xf32>
    %cst_104 = arith.constant dense<0.000000e+00> : vector<2x8xf32>
    %307 = vector.multi_reduction <add>, %306, %cst_104 [2] : vector<2x8x32xf32> to vector<2x8xf32>
    %cst_105 = arith.constant 0.000000e+00 : f32
    %308 = vector.broadcast %cst_105 : f32 to vector<2x8xf32>
    %309 = arith.cmpf ogt, %1, %308 : vector<2x8xf32>
    %cst_106 = arith.constant -1.000000e+30 : f32
    %310 = vector.broadcast %cst_106 : f32 to vector<2x8xf32>
    %311 = arith.select %309, %307, %310 : vector<2x8xi1>, vector<2x8xf32>
    %cst_107 = arith.constant dense<0xFF800000> : vector<2xf32>
    %312 = vector.multi_reduction <maximumf>, %311, %cst_107 [1] : vector<2x8xf32> to vector<2xf32>
    %313 = vector.shape_cast %312 : vector<2xf32> to vector<2x1xf32>
    %314 = vector.broadcast %313 : vector<2x1xf32> to vector<2x8xf32>
    %315 = arith.subf %311, %314 : vector<2x8xf32>
    %316 = math.exp %315 : vector<2x8xf32>
    %cst_108 = arith.constant 0.000000e+00 : f32
    %317 = vector.broadcast %cst_108 : f32 to vector<2x8xf32>
    %318 = arith.select %309, %316, %317 : vector<2x8xi1>, vector<2x8xf32>
    %cst_109 = arith.constant dense<0.000000e+00> : vector<2xf32>
    %319 = vector.multi_reduction <add>, %318, %cst_109 [1] : vector<2x8xf32> to vector<2xf32>
    %320 = vector.shape_cast %319 : vector<2xf32> to vector<2x1xf32>
    %cst_110 = arith.constant 1.000000e-30 : f32
    %321 = vector.broadcast %cst_110 : f32 to vector<2x1xf32>
    %322 = arith.maximumf %320, %321 : vector<2x1xf32>
    %323 = vector.broadcast %322 : vector<2x1xf32> to vector<2x8xf32>
    %324 = arith.divf %318, %323 : vector<2x8xf32>
    %325 = vector.shape_cast %324 : vector<2x8xf32> to vector<2x8x1xf32>
    %326 = vector.broadcast %325 : vector<2x8x1xf32> to vector<2x8x32xf32>
    %327 = arith.mulf %326, %294 : vector<2x8x32xf32>
    %cst_111 = arith.constant dense<0.000000e+00> : vector<2x32xf32>
    %328 = vector.multi_reduction <add>, %327, %cst_111 [1] : vector<2x8x32xf32> to vector<2x32xf32>
    %c0_112 = arith.constant 0 : index
    %c0_113 = arith.constant 0 : index
    %329 = vector.load %arg17[%c0_112, %c0_113] : memref<32x32xf32, #tpu.memory_space<vmem>>, vector<32x32xf32>
    %cst_114 = arith.constant dense<0.000000e+00> : vector<2x32xf32>
    %330 = tpu.matmul %328, %329, %cst_114 {dimension_numbers = #tpu.dot_dimension_numbers<[1], [0], [0], [1], [0, 0, 1, 1], [], []>} : vector<2x32xf32>, vector<32x32xf32>, vector<2x32xf32> -> vector<2x32xf32>
    %c0_115 = arith.constant 0 : index
    %c0_116 = arith.constant 0 : index
    %331 = vector.load %arg26[%c0_115, %c0_116] : memref<1x32xf32, #tpu.memory_space<vmem>>, vector<1x32xf32>
    %332 = vector.broadcast %331 : vector<1x32xf32> to vector<2x32xf32>
    %333 = arith.addf %330, %332 : vector<2x32xf32>
    %c0_117 = arith.constant 0 : index
    %c0_118 = arith.constant 0 : index
    %334 = vector.load %arg18[%c0_117, %c0_118] : memref<32x32xf32, #tpu.memory_space<vmem>>, vector<32x32xf32>
    %cst_119 = arith.constant dense<0.000000e+00> : vector<2x32xf32>
    %335 = tpu.matmul %328, %334, %cst_119 {dimension_numbers = #tpu.dot_dimension_numbers<[1], [0], [0], [1], [0, 0, 1, 1], [], []>} : vector<2x32xf32>, vector<32x32xf32>, vector<2x32xf32> -> vector<2x32xf32>
    %c0_120 = arith.constant 0 : index
    %c0_121 = arith.constant 0 : index
    %336 = vector.load %arg27[%c0_120, %c0_121] : memref<1x32xf32, #tpu.memory_space<vmem>>, vector<1x32xf32>
    %337 = vector.broadcast %336 : vector<1x32xf32> to vector<2x32xf32>
    %338 = arith.addf %335, %337 : vector<2x32xf32>
    %c0_122 = arith.constant 0 : index
    %c0_123 = arith.constant 0 : index
    %339 = vector.load %arg19[%c0_122, %c0_123] : memref<32x32xf32, #tpu.memory_space<vmem>>, vector<32x32xf32>
    %cst_124 = arith.constant dense<0.000000e+00> : vector<2x32xf32>
    %340 = tpu.matmul %328, %339, %cst_124 {dimension_numbers = #tpu.dot_dimension_numbers<[1], [0], [0], [1], [0, 0, 1, 1], [], []>} : vector<2x32xf32>, vector<32x32xf32>, vector<2x32xf32> -> vector<2x32xf32>
    %c0_125 = arith.constant 0 : index
    %c0_126 = arith.constant 0 : index
    %341 = vector.load %arg28[%c0_125, %c0_126] : memref<1x32xf32, #tpu.memory_space<vmem>>, vector<1x32xf32>
    %342 = vector.broadcast %341 : vector<1x32xf32> to vector<2x32xf32>
    %343 = arith.addf %340, %342 : vector<2x32xf32>
    %c0_127 = arith.constant 0 : index
    %c0_128 = arith.constant 0 : index
    %344 = vector.load %arg20[%c0_127, %c0_128] : memref<1x32xf32, #tpu.memory_space<vmem>>, vector<1x32xf32>
    %c0_129 = arith.constant 0 : index
    %c0_130 = arith.constant 0 : index
    %345 = vector.load %arg21[%c0_129, %c0_130] : memref<1x32xf32, #tpu.memory_space<vmem>>, vector<1x32xf32>
    %c0_131 = arith.constant 0 : index
    %c0_132 = arith.constant 0 : index
    %346 = vector.load %arg22[%c0_131, %c0_132] : memref<1x32xf32, #tpu.memory_space<vmem>>, vector<1x32xf32>
    %c0_133 = arith.constant 0 : index
    %c0_134 = arith.constant 0 : index
    %347 = vector.load %arg23[%c0_133, %c0_134] : memref<32x32xf32, #tpu.memory_space<vmem>>, vector<32x32xf32>
    %c0_135 = arith.constant 0 : index
    %c0_136 = arith.constant 0 : index
    %348 = vector.load %arg24[%c0_135, %c0_136] : memref<32x32xf32, #tpu.memory_space<vmem>>, vector<32x32xf32>
    %c0_137 = arith.constant 0 : index
    %c0_138 = arith.constant 0 : index
    %349 = vector.load %arg25[%c0_137, %c0_138] : memref<32x32xf32, #tpu.memory_space<vmem>>, vector<32x32xf32>
    %c0_139 = arith.constant 0 : index
    %c0_140 = arith.constant 0 : index
    %350 = vector.load %arg29[%c0_139, %c0_140] : memref<1x32xf32, #tpu.memory_space<vmem>>, vector<1x32xf32>
    %c0_141 = arith.constant 0 : index
    %c0_142 = arith.constant 0 : index
    %351 = vector.load %arg30[%c0_141, %c0_142] : memref<1x32xf32, #tpu.memory_space<vmem>>, vector<1x32xf32>
    %c0_143 = arith.constant 0 : index
    %c0_144 = arith.constant 0 : index
    %352 = memref.load %arg31[%c0_143, %c0_144] : memref<1x1xf32, #tpu.memory_space<smem>>
    %353 = vector.extract_strided_slice %2 {offsets = [0, 0], sizes = [2, 1], strides = [1, 1]} : vector<2x4xf32> to vector<2x1xf32>
    %354 = vector.broadcast %353 : vector<2x1xf32> to vector<2x32xf32>
    %355 = vector.broadcast %344 : vector<1x32xf32> to vector<2x32xf32>
    %356 = arith.mulf %354, %355 : vector<2x32xf32>
    %357 = arith.addf %333, %356 : vector<2x32xf32>
    %358 = vector.broadcast %353 : vector<2x1xf32> to vector<2x32xf32>
    %359 = vector.broadcast %345 : vector<1x32xf32> to vector<2x32xf32>
    %360 = arith.mulf %358, %359 : vector<2x32xf32>
    %361 = arith.addf %338, %360 : vector<2x32xf32>
    %362 = vector.broadcast %353 : vector<2x1xf32> to vector<2x32xf32>
    %363 = vector.broadcast %346 : vector<1x32xf32> to vector<2x32xf32>
    %364 = arith.mulf %362, %363 : vector<2x32xf32>
    %365 = arith.addf %343, %364 : vector<2x32xf32>
    %cst_145 = arith.constant dense<0.000000e+00> : vector<2x32xf32>
    %366 = tpu.matmul %328, %347, %cst_145 {dimension_numbers = #tpu.dot_dimension_numbers<[1], [0], [0], [1], [0, 0, 1, 1], [], []>} : vector<2x32xf32>, vector<32x32xf32>, vector<2x32xf32> -> vector<2x32xf32>
    %cst_146 = arith.constant dense<0.000000e+00> : vector<2x32xf32>
    %367 = tpu.matmul %328, %348, %cst_146 {dimension_numbers = #tpu.dot_dimension_numbers<[1], [0], [0], [1], [0, 0, 1, 1], [], []>} : vector<2x32xf32>, vector<32x32xf32>, vector<2x32xf32> -> vector<2x32xf32>
    %cst_147 = arith.constant dense<0.000000e+00> : vector<2x32xf32>
    %368 = tpu.matmul %328, %349, %cst_147 {dimension_numbers = #tpu.dot_dimension_numbers<[1], [0], [0], [1], [0, 0, 1, 1], [], []>} : vector<2x32xf32>, vector<32x32xf32>, vector<2x32xf32> -> vector<2x32xf32>
    %369 = vector.broadcast %350 : vector<1x32xf32> to vector<2x32xf32>
    %370 = arith.addf %368, %369 : vector<2x32xf32>
    %371 = arith.addf %357, %366 : vector<2x32xf32>
    %372 = arith.negf %371 : vector<2x32xf32>
    %373 = math.exp %372 : vector<2x32xf32>
    %cst_148 = arith.constant 1.000000e+00 : f32
    %374 = vector.broadcast %cst_148 : f32 to vector<2x32xf32>
    %375 = arith.addf %374, %373 : vector<2x32xf32>
    %376 = arith.divf %374, %375 : vector<2x32xf32>
    %377 = arith.addf %361, %367 : vector<2x32xf32>
    %378 = arith.negf %377 : vector<2x32xf32>
    %379 = math.exp %378 : vector<2x32xf32>
    %cst_149 = arith.constant 1.000000e+00 : f32
    %380 = vector.broadcast %cst_149 : f32 to vector<2x32xf32>
    %381 = arith.addf %380, %379 : vector<2x32xf32>
    %382 = arith.divf %380, %381 : vector<2x32xf32>
    %383 = arith.mulf %376, %370 : vector<2x32xf32>
    %384 = arith.addf %365, %383 : vector<2x32xf32>
    %385 = math.tanh %384 : vector<2x32xf32>
    %cst_150 = arith.constant 1.000000e+00 : f32
    %386 = vector.broadcast %cst_150 : f32 to vector<2x32xf32>
    %387 = arith.subf %386, %382 : vector<2x32xf32>
    %388 = arith.mulf %387, %385 : vector<2x32xf32>
    %389 = arith.mulf %382, %328 : vector<2x32xf32>
    %390 = arith.addf %388, %389 : vector<2x32xf32>
    %391 = vector.broadcast %351 : vector<1x32xf32> to vector<2x32xf32>
    %392 = arith.mulf %390, %391 : vector<2x32xf32>
    %cst_151 = arith.constant dense<0.000000e+00> : vector<2xf32>
    %393 = vector.multi_reduction <add>, %392, %cst_151 [1] : vector<2x32xf32> to vector<2xf32>
    %394 = vector.shape_cast %393 : vector<2xf32> to vector<2x1xf32>
    %395 = vector.broadcast %352 : f32 to vector<2x1xf32>
    %396 = arith.addf %394, %395 : vector<2x1xf32>
    %397 = vector.extract_strided_slice %2 {offsets = [0, 1], sizes = [2, 1], strides = [1, 1]} : vector<2x4xf32> to vector<2x1xf32>
    %398 = vector.broadcast %397 : vector<2x1xf32> to vector<2x32xf32>
    %399 = vector.broadcast %344 : vector<1x32xf32> to vector<2x32xf32>
    %400 = arith.mulf %398, %399 : vector<2x32xf32>
    %401 = arith.addf %333, %400 : vector<2x32xf32>
    %402 = vector.broadcast %397 : vector<2x1xf32> to vector<2x32xf32>
    %403 = vector.broadcast %345 : vector<1x32xf32> to vector<2x32xf32>
    %404 = arith.mulf %402, %403 : vector<2x32xf32>
    %405 = arith.addf %338, %404 : vector<2x32xf32>
    %406 = vector.broadcast %397 : vector<2x1xf32> to vector<2x32xf32>
    %407 = vector.broadcast %346 : vector<1x32xf32> to vector<2x32xf32>
    %408 = arith.mulf %406, %407 : vector<2x32xf32>
    %409 = arith.addf %343, %408 : vector<2x32xf32>
    %cst_152 = arith.constant dense<0.000000e+00> : vector<2x32xf32>
    %410 = tpu.matmul %390, %347, %cst_152 {dimension_numbers = #tpu.dot_dimension_numbers<[1], [0], [0], [1], [0, 0, 1, 1], [], []>} : vector<2x32xf32>, vector<32x32xf32>, vector<2x32xf32> -> vector<2x32xf32>
    %cst_153 = arith.constant dense<0.000000e+00> : vector<2x32xf32>
    %411 = tpu.matmul %390, %348, %cst_153 {dimension_numbers = #tpu.dot_dimension_numbers<[1], [0], [0], [1], [0, 0, 1, 1], [], []>} : vector<2x32xf32>, vector<32x32xf32>, vector<2x32xf32> -> vector<2x32xf32>
    %cst_154 = arith.constant dense<0.000000e+00> : vector<2x32xf32>
    %412 = tpu.matmul %390, %349, %cst_154 {dimension_numbers = #tpu.dot_dimension_numbers<[1], [0], [0], [1], [0, 0, 1, 1], [], []>} : vector<2x32xf32>, vector<32x32xf32>, vector<2x32xf32> -> vector<2x32xf32>
    %413 = vector.broadcast %350 : vector<1x32xf32> to vector<2x32xf32>
    %414 = arith.addf %412, %413 : vector<2x32xf32>
    %415 = arith.addf %401, %410 : vector<2x32xf32>
    %416 = arith.negf %415 : vector<2x32xf32>
    %417 = math.exp %416 : vector<2x32xf32>
    %cst_155 = arith.constant 1.000000e+00 : f32
    %418 = vector.broadcast %cst_155 : f32 to vector<2x32xf32>
    %419 = arith.addf %418, %417 : vector<2x32xf32>
    %420 = arith.divf %418, %419 : vector<2x32xf32>
    %421 = arith.addf %405, %411 : vector<2x32xf32>
    %422 = arith.negf %421 : vector<2x32xf32>
    %423 = math.exp %422 : vector<2x32xf32>
    %cst_156 = arith.constant 1.000000e+00 : f32
    %424 = vector.broadcast %cst_156 : f32 to vector<2x32xf32>
    %425 = arith.addf %424, %423 : vector<2x32xf32>
    %426 = arith.divf %424, %425 : vector<2x32xf32>
    %427 = arith.mulf %420, %414 : vector<2x32xf32>
    %428 = arith.addf %409, %427 : vector<2x32xf32>
    %429 = math.tanh %428 : vector<2x32xf32>
    %cst_157 = arith.constant 1.000000e+00 : f32
    %430 = vector.broadcast %cst_157 : f32 to vector<2x32xf32>
    %431 = arith.subf %430, %426 : vector<2x32xf32>
    %432 = arith.mulf %431, %429 : vector<2x32xf32>
    %433 = arith.mulf %426, %390 : vector<2x32xf32>
    %434 = arith.addf %432, %433 : vector<2x32xf32>
    %435 = vector.broadcast %351 : vector<1x32xf32> to vector<2x32xf32>
    %436 = arith.mulf %434, %435 : vector<2x32xf32>
    %cst_158 = arith.constant dense<0.000000e+00> : vector<2xf32>
    %437 = vector.multi_reduction <add>, %436, %cst_158 [1] : vector<2x32xf32> to vector<2xf32>
    %438 = vector.shape_cast %437 : vector<2xf32> to vector<2x1xf32>
    %439 = vector.broadcast %352 : f32 to vector<2x1xf32>
    %440 = arith.addf %438, %439 : vector<2x1xf32>
    %441 = vector.extract_strided_slice %2 {offsets = [0, 2], sizes = [2, 1], strides = [1, 1]} : vector<2x4xf32> to vector<2x1xf32>
    %442 = vector.broadcast %441 : vector<2x1xf32> to vector<2x32xf32>
    %443 = vector.broadcast %344 : vector<1x32xf32> to vector<2x32xf32>
    %444 = arith.mulf %442, %443 : vector<2x32xf32>
    %445 = arith.addf %333, %444 : vector<2x32xf32>
    %446 = vector.broadcast %441 : vector<2x1xf32> to vector<2x32xf32>
    %447 = vector.broadcast %345 : vector<1x32xf32> to vector<2x32xf32>
    %448 = arith.mulf %446, %447 : vector<2x32xf32>
    %449 = arith.addf %338, %448 : vector<2x32xf32>
    %450 = vector.broadcast %441 : vector<2x1xf32> to vector<2x32xf32>
    %451 = vector.broadcast %346 : vector<1x32xf32> to vector<2x32xf32>
    %452 = arith.mulf %450, %451 : vector<2x32xf32>
    %453 = arith.addf %343, %452 : vector<2x32xf32>
    %cst_159 = arith.constant dense<0.000000e+00> : vector<2x32xf32>
    %454 = tpu.matmul %434, %347, %cst_159 {dimension_numbers = #tpu.dot_dimension_numbers<[1], [0], [0], [1], [0, 0, 1, 1], [], []>} : vector<2x32xf32>, vector<32x32xf32>, vector<2x32xf32> -> vector<2x32xf32>
    %cst_160 = arith.constant dense<0.000000e+00> : vector<2x32xf32>
    %455 = tpu.matmul %434, %348, %cst_160 {dimension_numbers = #tpu.dot_dimension_numbers<[1], [0], [0], [1], [0, 0, 1, 1], [], []>} : vector<2x32xf32>, vector<32x32xf32>, vector<2x32xf32> -> vector<2x32xf32>
    %cst_161 = arith.constant dense<0.000000e+00> : vector<2x32xf32>
    %456 = tpu.matmul %434, %349, %cst_161 {dimension_numbers = #tpu.dot_dimension_numbers<[1], [0], [0], [1], [0, 0, 1, 1], [], []>} : vector<2x32xf32>, vector<32x32xf32>, vector<2x32xf32> -> vector<2x32xf32>
    %457 = vector.broadcast %350 : vector<1x32xf32> to vector<2x32xf32>
    %458 = arith.addf %456, %457 : vector<2x32xf32>
    %459 = arith.addf %445, %454 : vector<2x32xf32>
    %460 = arith.negf %459 : vector<2x32xf32>
    %461 = math.exp %460 : vector<2x32xf32>
    %cst_162 = arith.constant 1.000000e+00 : f32
    %462 = vector.broadcast %cst_162 : f32 to vector<2x32xf32>
    %463 = arith.addf %462, %461 : vector<2x32xf32>
    %464 = arith.divf %462, %463 : vector<2x32xf32>
    %465 = arith.addf %449, %455 : vector<2x32xf32>
    %466 = arith.negf %465 : vector<2x32xf32>
    %467 = math.exp %466 : vector<2x32xf32>
    %cst_163 = arith.constant 1.000000e+00 : f32
    %468 = vector.broadcast %cst_163 : f32 to vector<2x32xf32>
    %469 = arith.addf %468, %467 : vector<2x32xf32>
    %470 = arith.divf %468, %469 : vector<2x32xf32>
    %471 = arith.mulf %464, %458 : vector<2x32xf32>
    %472 = arith.addf %453, %471 : vector<2x32xf32>
    %473 = math.tanh %472 : vector<2x32xf32>
    %cst_164 = arith.constant 1.000000e+00 : f32
    %474 = vector.broadcast %cst_164 : f32 to vector<2x32xf32>
    %475 = arith.subf %474, %470 : vector<2x32xf32>
    %476 = arith.mulf %475, %473 : vector<2x32xf32>
    %477 = arith.mulf %470, %434 : vector<2x32xf32>
    %478 = arith.addf %476, %477 : vector<2x32xf32>
    %479 = vector.broadcast %351 : vector<1x32xf32> to vector<2x32xf32>
    %480 = arith.mulf %478, %479 : vector<2x32xf32>
    %cst_165 = arith.constant dense<0.000000e+00> : vector<2xf32>
    %481 = vector.multi_reduction <add>, %480, %cst_165 [1] : vector<2x32xf32> to vector<2xf32>
    %482 = vector.shape_cast %481 : vector<2xf32> to vector<2x1xf32>
    %483 = vector.broadcast %352 : f32 to vector<2x1xf32>
    %484 = arith.addf %482, %483 : vector<2x1xf32>
    %485 = vector.extract_strided_slice %2 {offsets = [0, 3], sizes = [2, 1], strides = [1, 1]} : vector<2x4xf32> to vector<2x1xf32>
    %486 = vector.broadcast %485 : vector<2x1xf32> to vector<2x32xf32>
    %487 = vector.broadcast %344 : vector<1x32xf32> to vector<2x32xf32>
    %488 = arith.mulf %486, %487 : vector<2x32xf32>
    %489 = arith.addf %333, %488 : vector<2x32xf32>
    %490 = vector.broadcast %485 : vector<2x1xf32> to vector<2x32xf32>
    %491 = vector.broadcast %345 : vector<1x32xf32> to vector<2x32xf32>
    %492 = arith.mulf %490, %491 : vector<2x32xf32>
    %493 = arith.addf %338, %492 : vector<2x32xf32>
    %494 = vector.broadcast %485 : vector<2x1xf32> to vector<2x32xf32>
    %495 = vector.broadcast %346 : vector<1x32xf32> to vector<2x32xf32>
    %496 = arith.mulf %494, %495 : vector<2x32xf32>
    %497 = arith.addf %343, %496 : vector<2x32xf32>
    %cst_166 = arith.constant dense<0.000000e+00> : vector<2x32xf32>
    %498 = tpu.matmul %478, %347, %cst_166 {dimension_numbers = #tpu.dot_dimension_numbers<[1], [0], [0], [1], [0, 0, 1, 1], [], []>} : vector<2x32xf32>, vector<32x32xf32>, vector<2x32xf32> -> vector<2x32xf32>
    %cst_167 = arith.constant dense<0.000000e+00> : vector<2x32xf32>
    %499 = tpu.matmul %478, %348, %cst_167 {dimension_numbers = #tpu.dot_dimension_numbers<[1], [0], [0], [1], [0, 0, 1, 1], [], []>} : vector<2x32xf32>, vector<32x32xf32>, vector<2x32xf32> -> vector<2x32xf32>
    %cst_168 = arith.constant dense<0.000000e+00> : vector<2x32xf32>
    %500 = tpu.matmul %478, %349, %cst_168 {dimension_numbers = #tpu.dot_dimension_numbers<[1], [0], [0], [1], [0, 0, 1, 1], [], []>} : vector<2x32xf32>, vector<32x32xf32>, vector<2x32xf32> -> vector<2x32xf32>
    %501 = vector.broadcast %350 : vector<1x32xf32> to vector<2x32xf32>
    %502 = arith.addf %500, %501 : vector<2x32xf32>
    %503 = arith.addf %489, %498 : vector<2x32xf32>
    %504 = arith.negf %503 : vector<2x32xf32>
    %505 = math.exp %504 : vector<2x32xf32>
    %cst_169 = arith.constant 1.000000e+00 : f32
    %506 = vector.broadcast %cst_169 : f32 to vector<2x32xf32>
    %507 = arith.addf %506, %505 : vector<2x32xf32>
    %508 = arith.divf %506, %507 : vector<2x32xf32>
    %509 = arith.addf %493, %499 : vector<2x32xf32>
    %510 = arith.negf %509 : vector<2x32xf32>
    %511 = math.exp %510 : vector<2x32xf32>
    %cst_170 = arith.constant 1.000000e+00 : f32
    %512 = vector.broadcast %cst_170 : f32 to vector<2x32xf32>
    %513 = arith.addf %512, %511 : vector<2x32xf32>
    %514 = arith.divf %512, %513 : vector<2x32xf32>
    %515 = arith.mulf %508, %502 : vector<2x32xf32>
    %516 = arith.addf %497, %515 : vector<2x32xf32>
    %517 = math.tanh %516 : vector<2x32xf32>
    %cst_171 = arith.constant 1.000000e+00 : f32
    %518 = vector.broadcast %cst_171 : f32 to vector<2x32xf32>
    %519 = arith.subf %518, %514 : vector<2x32xf32>
    %520 = arith.mulf %519, %517 : vector<2x32xf32>
    %521 = arith.mulf %514, %478 : vector<2x32xf32>
    %522 = arith.addf %520, %521 : vector<2x32xf32>
    %523 = vector.broadcast %351 : vector<1x32xf32> to vector<2x32xf32>
    %524 = arith.mulf %522, %523 : vector<2x32xf32>
    %cst_172 = arith.constant dense<0.000000e+00> : vector<2xf32>
    %525 = vector.multi_reduction <add>, %524, %cst_172 [1] : vector<2x32xf32> to vector<2xf32>
    %526 = vector.shape_cast %525 : vector<2xf32> to vector<2x1xf32>
    %527 = vector.broadcast %352 : f32 to vector<2x1xf32>
    %528 = arith.addf %526, %527 : vector<2x1xf32>
    %cst_173 = arith.constant 0.000000e+00 : f32
    %529 = vector.broadcast %cst_173 : f32 to vector<2x108xf32>
    %530 = tpu.concatenate %396, %440, %484, %528, %307, %324, %529 in 1 : vector<2x1xf32>, vector<2x1xf32>, vector<2x1xf32>, vector<2x1xf32>, vector<2x8xf32>, vector<2x8xf32>, vector<2x108xf32> -> vector<2x128xf32>
    %c0_174 = arith.constant 0 : index
    %c0_175 = arith.constant 0 : index
    %531 = vector.load %arg32[%c0_174, %c0_175] : memref<2x128xf32, #tpu.memory_space<vmem>>, vector<2x128xf32>
    tpu.vector_store %arg32[%c0_174, %c0_175], %530 {strides = array<i32>} : memref<2x128xf32, #tpu.memory_space<vmem>>, vector<2x128xf32>,
    return
  }
  func.func @transform_0(%arg0: i32) -> (i32, i32, i32) {
    %c0_i32 = arith.constant 0 : i32
    %c0_i32_0 = arith.constant 0 : i32
    %c0_i32_1 = arith.constant 0 : i32
    return %arg0, %c0_i32, %c0_i32_0 : i32, i32, i32
  }
  func.func @transform_1(%arg0: i32) -> (i32, i32) {
    %c0_i32 = arith.constant 0 : i32
    %c0_i32_0 = arith.constant 0 : i32
    return %arg0, %c0_i32 : i32, i32
  }
  func.func @transform_2(%arg0: i32) -> (i32, i32) {
    %c0_i32 = arith.constant 0 : i32
    %c0_i32_0 = arith.constant 0 : i32
    return %arg0, %c0_i32 : i32, i32
  }
  func.func @transform_3(%arg0: i32) -> (i32, i32) {
    %c0_i32 = arith.constant 0 : i32
    %c0_i32_0 = arith.constant 0 : i32
    %c0_i32_1 = arith.constant 0 : i32
    return %c0_i32, %c0_i32_0 : i32, i32
  }
  func.func @transform_4(%arg0: i32) -> (i32, i32) {
    %c0_i32 = arith.constant 0 : i32
    %c0_i32_0 = arith.constant 0 : i32
    %c0_i32_1 = arith.constant 0 : i32
    return %c0_i32, %c0_i32_0 : i32, i32
  }
  func.func @transform_5(%arg0: i32) -> (i32, i32) {
    %c0_i32 = arith.constant 0 : i32
    %c0_i32_0 = arith.constant 0 : i32
    %c0_i32_1 = arith.constant 0 : i32
    return %c0_i32, %c0_i32_0 : i32, i32
  }
  func.func @transform_6(%arg0: i32) -> (i32, i32) {
    %c0_i32 = arith.constant 0 : i32
    %c0_i32_0 = arith.constant 0 : i32
    %c0_i32_1 = arith.constant 0 : i32
    return %c0_i32, %c0_i32_0 : i32, i32
  }
  func.func @transform_7(%arg0: i32) -> (i32, i32) {
    %c0_i32 = arith.constant 0 : i32
    %c0_i32_0 = arith.constant 0 : i32
    %c0_i32_1 = arith.constant 0 : i32
    return %c0_i32, %c0_i32_0 : i32, i32
  }
  func.func @transform_8(%arg0: i32) -> (i32, i32) {
    %c0_i32 = arith.constant 0 : i32
    %c0_i32_0 = arith.constant 0 : i32
    %c0_i32_1 = arith.constant 0 : i32
    return %c0_i32, %c0_i32_0 : i32, i32
  }
  func.func @transform_9(%arg0: i32) -> (i32, i32) {
    %c0_i32 = arith.constant 0 : i32
    %c0_i32_0 = arith.constant 0 : i32
    %c0_i32_1 = arith.constant 0 : i32
    return %c0_i32, %c0_i32_0 : i32, i32
  }
  func.func @transform_10(%arg0: i32) -> (i32, i32) {
    %c0_i32 = arith.constant 0 : i32
    %c0_i32_0 = arith.constant 0 : i32
    %c0_i32_1 = arith.constant 0 : i32
    return %c0_i32, %c0_i32_0 : i32, i32
  }
  func.func @transform_11(%arg0: i32) -> (i32, i32) {
    %c0_i32 = arith.constant 0 : i32
    %c0_i32_0 = arith.constant 0 : i32
    %c0_i32_1 = arith.constant 0 : i32
    return %c0_i32, %c0_i32_0 : i32, i32
  }
  func.func @transform_12(%arg0: i32) -> (i32, i32) {
    %c0_i32 = arith.constant 0 : i32
    %c0_i32_0 = arith.constant 0 : i32
    %c0_i32_1 = arith.constant 0 : i32
    return %c0_i32, %c0_i32_0 : i32, i32
  }
  func.func @transform_13(%arg0: i32) -> (i32, i32) {
    %c0_i32 = arith.constant 0 : i32
    %c0_i32_0 = arith.constant 0 : i32
    %c0_i32_1 = arith.constant 0 : i32
    return %c0_i32, %c0_i32_0 : i32, i32
  }
  func.func @transform_14(%arg0: i32) -> (i32, i32) {
    %c0_i32 = arith.constant 0 : i32
    %c0_i32_0 = arith.constant 0 : i32
    %c0_i32_1 = arith.constant 0 : i32
    return %c0_i32, %c0_i32_0 : i32, i32
  }
  func.func @transform_15(%arg0: i32) -> (i32, i32) {
    %c0_i32 = arith.constant 0 : i32
    %c0_i32_0 = arith.constant 0 : i32
    %c0_i32_1 = arith.constant 0 : i32
    return %c0_i32, %c0_i32_0 : i32, i32
  }
  func.func @transform_16(%arg0: i32) -> (i32, i32) {
    %c0_i32 = arith.constant 0 : i32
    %c0_i32_0 = arith.constant 0 : i32
    %c0_i32_1 = arith.constant 0 : i32
    return %c0_i32, %c0_i32_0 : i32, i32
  }
  func.func @transform_17(%arg0: i32) -> (i32, i32) {
    %c0_i32 = arith.constant 0 : i32
    %c0_i32_0 = arith.constant 0 : i32
    %c0_i32_1 = arith.constant 0 : i32
    return %c0_i32, %c0_i32_0 : i32, i32
  }
  func.func @transform_18(%arg0: i32) -> (i32, i32) {
    %c0_i32 = arith.constant 0 : i32
    %c0_i32_0 = arith.constant 0 : i32
    %c0_i32_1 = arith.constant 0 : i32
    return %c0_i32, %c0_i32_0 : i32, i32
  }
  func.func @transform_19(%arg0: i32) -> (i32, i32) {
    %c0_i32 = arith.constant 0 : i32
    %c0_i32_0 = arith.constant 0 : i32
    %c0_i32_1 = arith.constant 0 : i32
    return %c0_i32, %c0_i32_0 : i32, i32
  }
  func.func @transform_20(%arg0: i32) -> (i32, i32) {
    %c0_i32 = arith.constant 0 : i32
    %c0_i32_0 = arith.constant 0 : i32
    %c0_i32_1 = arith.constant 0 : i32
    return %c0_i32, %c0_i32_0 : i32, i32
  }
  func.func @transform_21(%arg0: i32) -> (i32, i32) {
    %c0_i32 = arith.constant 0 : i32
    %c0_i32_0 = arith.constant 0 : i32
    %c0_i32_1 = arith.constant 0 : i32
    return %c0_i32, %c0_i32_0 : i32, i32
  }
  func.func @transform_22(%arg0: i32) -> (i32, i32) {
    %c0_i32 = arith.constant 0 : i32
    %c0_i32_0 = arith.constant 0 : i32
    %c0_i32_1 = arith.constant 0 : i32
    return %c0_i32, %c0_i32_0 : i32, i32
  }
  func.func @transform_23(%arg0: i32) -> (i32, i32) {
    %c0_i32 = arith.constant 0 : i32
    %c0_i32_0 = arith.constant 0 : i32
    %c0_i32_1 = arith.constant 0 : i32
    return %c0_i32, %c0_i32_0 : i32, i32
  }
  func.func @transform_24(%arg0: i32) -> (i32, i32) {
    %c0_i32 = arith.constant 0 : i32
    %c0_i32_0 = arith.constant 0 : i32
    %c0_i32_1 = arith.constant 0 : i32
    return %c0_i32, %c0_i32_0 : i32, i32
  }
  func.func @transform_25(%arg0: i32) -> (i32, i32) {
    %c0_i32 = arith.constant 0 : i32
    %c0_i32_0 = arith.constant 0 : i32
    %c0_i32_1 = arith.constant 0 : i32
    return %c0_i32, %c0_i32_0 : i32, i32
  }
  func.func @transform_26(%arg0: i32) -> (i32, i32) {
    %c0_i32 = arith.constant 0 : i32
    %c0_i32_0 = arith.constant 0 : i32
    %c0_i32_1 = arith.constant 0 : i32
    return %c0_i32, %c0_i32_0 : i32, i32
  }
  func.func @transform_27(%arg0: i32) -> (i32, i32) {
    %c0_i32 = arith.constant 0 : i32
    %c0_i32_0 = arith.constant 0 : i32
    %c0_i32_1 = arith.constant 0 : i32
    return %c0_i32, %c0_i32_0 : i32, i32
  }
  func.func @transform_28(%arg0: i32) -> (i32, i32) {
    %c0_i32 = arith.constant 0 : i32
    %c0_i32_0 = arith.constant 0 : i32
    %c0_i32_1 = arith.constant 0 : i32
    return %c0_i32, %c0_i32_0 : i32, i32
  }
  func.func @transform_29(%arg0: i32) -> (i32, i32) {
    %c0_i32 = arith.constant 0 : i32
    %c0_i32_0 = arith.constant 0 : i32
    %c0_i32_1 = arith.constant 0 : i32
    return %c0_i32, %c0_i32_0 : i32, i32
  }
  func.func @transform_30(%arg0: i32) -> (i32, i32) {
    %c0_i32 = arith.constant 0 : i32
    %c0_i32_0 = arith.constant 0 : i32
    %c0_i32_1 = arith.constant 0 : i32
    return %c0_i32, %c0_i32_0 : i32, i32
  }
  func.func @transform_31(%arg0: i32) -> (i32, i32) {
    %c0_i32 = arith.constant 0 : i32
    %c0_i32_0 = arith.constant 0 : i32
    return %arg0, %c0_i32 : i32, i32
  }
}

</mosaic_0001>

<llo_original>
// kernel: tpu_custom_call.1
$region0: #{tpu_custom_call.1}
  #allocation0 [shape = 'u32[]', space=smem, size = 0x4, offset = 0x4, fixed_abs, tag = 'smem constant byte address 0x4 - core index']
  #allocation1 [shape = 'u32[144,128]{1,0:T(1,128)}', space=vmem, size = 0x12000, scoped, tag = 'internal scratch']
  #allocation2 [shape = 'f32[2,8,32]{2,1,0:T(8,128)}', space=vmem, size = 0x2000, scoped, tag = 'scratch operand']
  #allocation3 [shape = 'f32[1,1]{1,0:T(1,128)S(6)}', space=smem, size = 0x200, scoped, tag = 'scoped memory for tpu_custom_call.1']
  %s0 = inlined_call_operand.smem [shape: u32[32], index: -1, kind: input, shape index: {}]
  %s1 = sld [smem:[%s0]]
  %s2 = scalar_lea.smem %s0, 1
  %s3 = sld [smem:[%s2]]
  %s4 = scalar_lea.smem %s0, 2
  %s5 = sld [smem:[%s4]]
  %s6 = scalar_lea.smem %s0, 3
  %s7 = sld [smem:[%s6]]
  %s8 = scalar_lea.smem %s0, 4
  %s9 = sld [smem:[%s8]]
  %s10 = scalar_lea.smem %s0, 5
  %s11 = sld [smem:[%s10]]
  %s12 = scalar_lea.smem %s0, 6
  %s13 = sld [smem:[%s12]]
  %s14 = scalar_lea.smem %s0, 7
  %s15 = sld [smem:[%s14]]
  %s16 = scalar_lea.smem %s0, 8
  %s17 = sld [smem:[%s16]]
  %s18 = scalar_lea.smem %s0, 9
  %s19 = sld [smem:[%s18]]
  %s20 = scalar_lea.smem %s0, 10
  %s21 = sld [smem:[%s20]]
  %s22 = scalar_lea.smem %s0, 11
  %s23 = sld [smem:[%s22]]
  %s24 = scalar_lea.smem %s0, 12
  %s25 = sld [smem:[%s24]]
  %s26 = scalar_lea.smem %s0, 13
  %s27 = sld [smem:[%s26]]
  %s28 = scalar_lea.smem %s0, 14
  %s29 = sld [smem:[%s28]]
  %s30 = scalar_lea.smem %s0, 15
  %s31 = sld [smem:[%s30]]
  %s32 = scalar_lea.smem %s0, 16
  %s33 = sld [smem:[%s32]]
  %s34 = scalar_lea.smem %s0, 17
  %s35 = sld [smem:[%s34]]
  %s36 = scalar_lea.smem %s0, 18
  %s37 = sld [smem:[%s36]]
  %s38 = scalar_lea.smem %s0, 19
  %s39 = sld [smem:[%s38]]
  %s40 = scalar_lea.smem %s0, 20
  %s41 = sld [smem:[%s40]]
  %s42 = scalar_lea.smem %s0, 21
  %s43 = sld [smem:[%s42]]
  %s44 = scalar_lea.smem %s0, 22
  %s45 = sld [smem:[%s44]]
  %s46 = scalar_lea.smem %s0, 23
  %s47 = sld [smem:[%s46]]
  %s48 = scalar_lea.smem %s0, 24
  %s49 = sld [smem:[%s48]]
  %s50 = scalar_lea.smem %s0, 25
  %s51 = sld [smem:[%s50]]
  %s52 = scalar_lea.smem %s0, 26
  %s53 = sld [smem:[%s52]]
  %s54 = scalar_lea.smem %s0, 27
  %s55 = sld [smem:[%s54]]
  %s56 = scalar_lea.smem %s0, 28
  %s57 = sld [smem:[%s56]]
  %s58 = scalar_lea.smem %s0, 29
  %s59 = sld [smem:[%s58]]
  %s60 = scalar_lea.smem %s0, 30
  %s61 = sld [smem:[%s60]]
  %s62 = scalar_lea.smem %s0, 31
  %s63 = sld [smem:[%s62]]
  %s64 = sld [smem:[#allocation0]]
  $region198: #{tpu_custom_call.1} parent=0
    _
  %s66 = ssub.s32 1, %s64
  %s67 = scalar_select 0, %s66, %s64
  %68 = sst [smem:[#allocation3]] %s61
  $region1: #{tpu_custom_call.1} parent=0
    #allocation4 [shape = 'u8[1024]{0}', space=vmem, size = 0x400, scoped, tag = 'input window, operand 1, single buffered']
    #allocation5 [shape = 's32[1]{0}', space=sflag, size = 0x4, scoped, tag = 'scoped memory for tpu_custom_call.1']
    #allocation6 [shape = 's32[1]{0}', space=sflag, size = 0x4, scoped, tag = 'scoped memory for tpu_custom_call.1']
    #allocation7 [shape = 'u8[1024]{0}', space=vmem, size = 0x400, scoped, tag = 'input window, operand 2, single buffered']
    #allocation8 [shape = 's32[1]{0}', space=sflag, size = 0x4, scoped, tag = 'scoped memory for tpu_custom_call.1']
    #allocation9 [shape = 'u8[2048]{0}', space=vmem, size = 0x800, scoped, tag = 'input window, operand 3, single buffered']
    #allocation10 [shape = 'u8[2048]{0}', space=vmem, size = 0x800, scoped, tag = 'input window, operand 4, single buffered']
    #allocation11 [shape = 's32[1]{0}', space=sflag, size = 0x4, scoped, tag = 'scoped memory for tpu_custom_call.1']
    #allocation12 [shape = 'u8[2048]{0}', space=vmem, size = 0x800, scoped, tag = 'input window, operand 5, single buffered']
    #allocation13 [shape = 'u8[16384]{0}', space=vmem, size = 0x4000, scoped, tag = 'input window, operand 7, single buffered']
    #allocation14 [shape = 's32[1]{0}', space=sflag, size = 0x4, scoped, tag = 'scoped memory for tpu_custom_call.1']
    #allocation15 [shape = 'u8[16384]{0}', space=vmem, size = 0x4000, scoped, tag = 'input window, operand 8, single buffered']
    #allocation16 [shape = 'u8[512]{0}', space=vmem, size = 0x400, scoped, tag = 'input window, operand 10, single buffered']
    #allocation17 [shape = 's32[1]{0}', space=sflag, size = 0x4, scoped, tag = 'scoped memory for tpu_custom_call.1']
    #allocation18 [shape = 'u8[512]{0}', space=vmem, size = 0x400, scoped, tag = 'input window, operand 14, single buffered']
    #allocation19 [shape = 'u8[512]{0}', space=vmem, size = 0x400, scoped, tag = 'input window, operand 15, single buffered']
    #allocation20 [shape = 's32[1]{0}', space=sflag, size = 0x4, scoped, tag = 'scoped memory for tpu_custom_call.1']
    #allocation21 [shape = 'u8[16384]{0}', space=vmem, size = 0x4000, scoped, tag = 'input window, operand 16, single buffered']
    #allocation22 [shape = 'u8[16384]{0}', space=vmem, size = 0x4000, scoped, tag = 'input window, operand 17, single buffered']
    #allocation23 [shape = 's32[1]{0}', space=sflag, size = 0x4, scoped, tag = 'scoped memory for tpu_custom_call.1']
    #allocation24 [shape = 'u8[16384]{0}', space=vmem, size = 0x4000, scoped, tag = 'input window, operand 18, single buffered']
    #allocation25 [shape = 'u8[512]{0}', space=vmem, size = 0x400, scoped, tag = 'input window, operand 19, single buffered']
    #allocation26 [shape = 's32[1]{0}', space=sflag, size = 0x4, scoped, tag = 'scoped memory for tpu_custom_call.1']
    #allocation27 [shape = 'u8[16384]{0}', space=vmem, size = 0x4000, scoped, tag = 'input window, operand 23, single buffered']
    #allocation28 [shape = 'u8[16384]{0}', space=vmem, size = 0x4000, scoped, tag = 'input window, operand 24, single buffered']
    #allocation29 [shape = 's32[1]{0}', space=sflag, size = 0x4, scoped, tag = 'scoped memory for tpu_custom_call.1']
    #allocation30 [shape = 'u8[1024]{0}', space=vmem, size = 0x400, scoped, tag = 'output window, operand 0, single buffered']
    %69 = vsyncpa [#allocation5], 0
    %70 = vsyncpa [#allocation8], 0
    %71 = vsyncpa [#allocation11], 0
    %72 = vsyncpa [#allocation14], 0
    %73 = vsyncpa [#allocation17], 0
    %74 = vsyncpa [#allocation20], 0
    %75 = vsyncpa [#allocation23], 0
    %76 = vsyncpa [#allocation26], 0
    %77 = vsyncpa [#allocation29], 0
    %78 = vsyncpa [#allocation6], 0
    // Predicated region
    $region2: #{tpu_custom_call.1} parent=1 // pred_check
      _
    $region3: #{tpu_custom_call.1} parent=1 // pred_check_branch
      %80 = sbr.rel (0) target = $region5
    $region4: #{tpu_custom_call.1} parent=1 // pred_region
      _
    $region5: #{tpu_custom_call.1} parent=1 // pred_fallthru
      _
    // Predicated region
    $region6: #{tpu_custom_call.1} parent=1 // pred_check
      _
    $region7: #{tpu_custom_call.1} parent=1 // pred_check_branch
      %82 = sbr.rel (0) target = $region9
    $region8: #{tpu_custom_call.1} parent=1 // pred_region
      %s84 = ssub.s32 32, 32
      %85 = vsyncadd [#allocation5], %s84
      %s87 = sshll.u32 [#allocation4], 4
      %s88 = int_to_ptr.vmem [resolvable:$true] %s87
      %90 = dma.hbm_to_vmem [thread:$0]  %s3, 32, %s88, [#allocation5]
    $region9: #{tpu_custom_call.1} parent=1 // pred_fallthru
      _
    // Predicated region
    $region10: #{tpu_custom_call.1} parent=1 // pred_check
      _
    $region11: #{tpu_custom_call.1} parent=1 // pred_check_branch
      %92 = sbr.rel (0) target = $region13
    $region12: #{tpu_custom_call.1} parent=1 // pred_region
      %s94 = ssub.s32 32, 32
      %95 = vsyncadd [#allocation8], %s94
      %s97 = sshll.u32 [#allocation7], 4
      %s98 = int_to_ptr.vmem [resolvable:$true] %s97
      %100 = dma.hbm_to_vmem [thread:$0]  %s5, 32, %s98, [#allocation8]
    $region13: #{tpu_custom_call.1} parent=1 // pred_fallthru
      _
    // Predicated region
    $region14: #{tpu_custom_call.1} parent=1 // pred_check
      _
    $region15: #{tpu_custom_call.1} parent=1 // pred_check_branch
      %102 = sbr.rel (0) target = $region17
    $region16: #{tpu_custom_call.1} parent=1 // pred_region
      %s104 = ssub.s32 64, 64
      %105 = vsyncadd [#allocation8], %s104
      %s107 = sshll.u32 [#allocation9], 4
      %s108 = int_to_ptr.vmem [resolvable:$true] %s107
      %110 = dma.hbm_to_vmem [thread:$0]  %s7, 64, %s108, [#allocation8]
    $region17: #{tpu_custom_call.1} parent=1 // pred_fallthru
      _
    // Predicated region
    $region18: #{tpu_custom_call.1} parent=1 // pred_check
      _
    $region19: #{tpu_custom_call.1} parent=1 // pred_check_branch
      %112 = sbr.rel (0) target = $region21
    $region20: #{tpu_custom_call.1} parent=1 // pred_region
      %s114 = ssub.s32 64, 64
      %115 = vsyncadd [#allocation11], %s114
      %s117 = sshll.u32 [#allocation10], 4
      %s118 = int_to_ptr.vmem [resolvable:$true] %s117
      %120 = dma.hbm_to_vmem [thread:$0]  %s9, 64, %s118, [#allocation11]
    $region21: #{tpu_custom_call.1} parent=1 // pred_fallthru
      _
    // Predicated region
    $region22: #{tpu_custom_call.1} parent=1 // pred_check
      _
    $region23: #{tpu_custom_call.1} parent=1 // pred_check_branch
      %122 = sbr.rel (0) target = $region25
    $region24: #{tpu_custom_call.1} parent=1 // pred_region
      %s124 = ssub.s32 64, 64
      %125 = vsyncadd [#allocation11], %s124
      %s127 = sshll.u32 [#allocation12], 4
      %s128 = int_to_ptr.vmem [resolvable:$true] %s127
      %130 = dma.hbm_to_vmem [thread:$0]  %s11, 64, %s128, [#allocation11]
    $region25: #{tpu_custom_call.1} parent=1 // pred_fallthru
      _
    // Predicated region
    $region26: #{tpu_custom_call.1} parent=1 // pred_check
      _
    $region27: #{tpu_custom_call.1} parent=1 // pred_check_branch
      %132 = sbr.rel (0) target = $region29
    $region28: #{tpu_custom_call.1} parent=1 // pred_region
      _
    $region29: #{tpu_custom_call.1} parent=1 // pred_fallthru
      _
    // Predicated region
    $region30: #{tpu_custom_call.1} parent=1 // pred_check
      _
    $region31: #{tpu_custom_call.1} parent=1 // pred_check_branch
      %134 = sbr.rel (0) target = $region33
    $region32: #{tpu_custom_call.1} parent=1 // pred_region
      %s136 = ssub.s32 512, 512
      %137 = vsyncadd [#allocation14], %s136
      %s138 = sshll.u32 [#allocation13], 4
      %s139 = int_to_ptr.vmem [resolvable:$true] %s138
      %144 = dma.hbm_to_vmem [thread:$0]  %s15, 512, %s139, [#allocation14], 128, 128, 8
    $region33: #{tpu_custom_call.1} parent=1 // pred_fallthru
      _
    // Predicated region
    $region34: #{tpu_custom_call.1} parent=1 // pred_check
      _
    $region35: #{tpu_custom_call.1} parent=1 // pred_check_branch
      %146 = sbr.rel (0) target = $region37
    $region36: #{tpu_custom_call.1} parent=1 // pred_region
      %s148 = ssub.s32 512, 512
      %149 = vsyncadd [#allocation14], %s148
      %s150 = sshll.u32 [#allocation15], 4
      %s151 = int_to_ptr.vmem [resolvable:$true] %s150
      %156 = dma.hbm_to_vmem [thread:$0]  %s17, 512, %s151, [#allocation14], 128, 128, 8
    $region37: #{tpu_custom_call.1} parent=1 // pred_fallthru
      _
    // Predicated region
    $region38: #{tpu_custom_call.1} parent=1 // pred_check
      _
    $region39: #{tpu_custom_call.1} parent=1 // pred_check_branch
      %158 = sbr.rel (0) target = $region41
    $region40: #{tpu_custom_call.1} parent=1 // pred_region
      _
    $region41: #{tpu_custom_call.1} parent=1 // pred_fallthru
      _
    // Predicated region
    $region42: #{tpu_custom_call.1} parent=1 // pred_check
      _
    $region43: #{tpu_custom_call.1} parent=1 // pred_check_branch
      %160 = sbr.rel (0) target = $region45
    $region44: #{tpu_custom_call.1} parent=1 // pred_region
      %s162 = ssub.s32 16, 16
      %163 = vsyncadd [#allocation17], %s162
      %s165 = sshll.u32 [#allocation16], 4
      %s166 = int_to_ptr.vmem [resolvable:$true] %s165
      %168 = dma.hbm_to_vmem [thread:$0]  %s21, 16, %s166, [#allocation17]
    $region45: #{tpu_custom_call.1} parent=1 // pred_fallthru
      _
    // Predicated region
    $region46: #{tpu_custom_call.1} parent=1 // pred_check
      _
    $region47: #{tpu_custom_call.1} parent=1 // pred_check_branch
      %170 = sbr.rel (0) target = $region49
    $region48: #{tpu_custom_call.1} parent=1 // pred_region
      _
    $region49: #{tpu_custom_call.1} parent=1 // pred_fallthru
      _
    // Predicated region
    $region50: #{tpu_custom_call.1} parent=1 // pred_check
      _
    $region51: #{tpu_custom_call.1} parent=1 // pred_check_branch
      %172 = sbr.rel (0) target = $region53
    $region52: #{tpu_custom_call.1} parent=1 // pred_region
      _
    $region53: #{tpu_custom_call.1} parent=1 // pred_fallthru
      _
    // Predicated region
    $region54: #{tpu_custom_call.1} parent=1 // pred_check
      _
    $region55: #{tpu_custom_call.1} parent=1 // pred_check_branch
      %174 = sbr.rel (0) target = $region57
    $region56: #{tpu_custom_call.1} parent=1 // pred_region
      _
    $region57: #{tpu_custom_call.1} parent=1 // pred_fallthru
      _
    // Predicated region
    $region58: #{tpu_custom_call.1} parent=1 // pred_check
      _
    $region59: #{tpu_custom_call.1} parent=1 // pred_check_branch
      %176 = sbr.rel (0) target = $region61
    $region60: #{tpu_custom_call.1} parent=1 // pred_region
      %s178 = ssub.s32 16, 16
      %179 = vsyncadd [#allocation17], %s178
      %s181 = sshll.u32 [#allocation18], 4
      %s182 = int_to_ptr.vmem [resolvable:$true] %s181
      %184 = dma.hbm_to_vmem [thread:$0]  %s29, 16, %s182, [#allocation17]
    $region61: #{tpu_custom_call.1} parent=1 // pred_fallthru
      _
    // Predicated region
    $region62: #{tpu_custom_call.1} parent=1 // pred_check
      _
    $region63: #{tpu_custom_call.1} parent=1 // pred_check_branch
      %186 = sbr.rel (0) target = $region65
    $region64: #{tpu_custom_call.1} parent=1 // pred_region
      %s188 = ssub.s32 16, 16
      %189 = vsyncadd [#allocation20], %s188
      %s191 = sshll.u32 [#allocation19], 4
      %s192 = int_to_ptr.vmem [resolvable:$true] %s191
      %194 = dma.hbm_to_vmem [thread:$0]  %s31, 16, %s192, [#allocation20]
    $region65: #{tpu_custom_call.1} parent=1 // pred_fallthru
      _
    // Predicated region
    $region66: #{tpu_custom_call.1} parent=1 // pred_check
      _
    $region67: #{tpu_custom_call.1} parent=1 // pred_check_branch
      %196 = sbr.rel (0) target = $region69
    $region68: #{tpu_custom_call.1} parent=1 // pred_region
      %s198 = ssub.s32 512, 512
      %199 = vsyncadd [#allocation20], %s198
      %s200 = sshll.u32 [#allocation21], 4
      %s201 = int_to_ptr.vmem [resolvable:$true] %s200
      %206 = dma.hbm_to_vmem [thread:$0]  %s33, 512, %s201, [#allocation20], 128, 128, 8
    $region69: #{tpu_custom_call.1} parent=1 // pred_fallthru
      _
    // Predicated region
    $region70: #{tpu_custom_call.1} parent=1 // pred_check
      _
    $region71: #{tpu_custom_call.1} parent=1 // pred_check_branch
      %208 = sbr.rel (0) target = $region73
    $region72: #{tpu_custom_call.1} parent=1 // pred_region
      %s210 = ssub.s32 512, 512
      %211 = vsyncadd [#allocation23], %s210
      %s212 = sshll.u32 [#allocation22], 4
      %s213 = int_to_ptr.vmem [resolvable:$true] %s212
      %218 = dma.hbm_to_vmem [thread:$0]  %s35, 512, %s213, [#allocation23], 128, 128, 8
    $region73: #{tpu_custom_call.1} parent=1 // pred_fallthru
      _
    // Predicated region
    $region74: #{tpu_custom_call.1} parent=1 // pred_check
      _
    $region75: #{tpu_custom_call.1} parent=1 // pred_check_branch
      %220 = sbr.rel (0) target = $region77
    $region76: #{tpu_custom_call.1} parent=1 // pred_region
      %s222 = ssub.s32 512, 512
      %223 = vsyncadd [#allocation23], %s222
      %s224 = sshll.u32 [#allocation24], 4
      %s225 = int_to_ptr.vmem [resolvable:$true] %s224
      %230 = dma.hbm_to_vmem [thread:$0]  %s37, 512, %s225, [#allocation23], 128, 128, 8
    $region77: #{tpu_custom_call.1} parent=1 // pred_fallthru
      _
    // Predicated region
    $region78: #{tpu_custom_call.1} parent=1 // pred_check
      _
    $region79: #{tpu_custom_call.1} parent=1 // pred_check_branch
      %232 = sbr.rel (0) target = $region81
    $region80: #{tpu_custom_call.1} parent=1 // pred_region
      %s234 = ssub.s32 16, 16
      %235 = vsyncadd [#allocation26], %s234
      %s237 = sshll.u32 [#allocation25], 4
      %s238 = int_to_ptr.vmem [resolvable:$true] %s237
      %240 = dma.hbm_to_vmem [thread:$0]  %s39, 16, %s238, [#allocation26]
    $region81: #{tpu_custom_call.1} parent=1 // pred_fallthru
      _
    // Predicated region
    $region82: #{tpu_custom_call.1} parent=1 // pred_check
      _
    $region83: #{tpu_custom_call.1} parent=1 // pred_check_branch
      %242 = sbr.rel (0) target = $region85
    $region84: #{tpu_custom_call.1} parent=1 // pred_region
      _
    $region85: #{tpu_custom_call.1} parent=1 // pred_fallthru
      _
    // Predicated region
    $region86: #{tpu_custom_call.1} parent=1 // pred_check
      _
    $region87: #{tpu_custom_call.1} parent=1 // pred_check_branch
      %244 = sbr.rel (0) target = $region89
    $region88: #{tpu_custom_call.1} parent=1 // pred_region
      _
    $region89: #{tpu_custom_call.1} parent=1 // pred_fallthru
      _
    // Predicated region
    $region90: #{tpu_custom_call.1} parent=1 // pred_check
      _
    $region91: #{tpu_custom_call.1} parent=1 // pred_check_branch
      %246 = sbr.rel (0) target = $region93
    $region92: #{tpu_custom_call.1} parent=1 // pred_region
      _
    $region93: #{tpu_custom_call.1} parent=1 // pred_fallthru
      _
    // Predicated region
    $region94: #{tpu_custom_call.1} parent=1 // pred_check
      _
    $region95: #{tpu_custom_call.1} parent=1 // pred_check_branch
      %248 = sbr.rel (0) target = $region97
    $region96: #{tpu_custom_call.1} parent=1 // pred_region
      %s250 = ssub.s32 512, 512
      %251 = vsyncadd [#allocation26], %s250
      %s252 = sshll.u32 [#allocation27], 4
      %s253 = int_to_ptr.vmem [resolvable:$true] %s252
      %258 = dma.hbm_to_vmem [thread:$0]  %s47, 512, %s253, [#allocation26], 128, 128, 8
    $region97: #{tpu_custom_call.1} parent=1 // pred_fallthru
      _
    // Predicated region
    $region98: #{tpu_custom_call.1} parent=1 // pred_check
      _
    $region99: #{tpu_custom_call.1} parent=1 // pred_check_branch
      %260 = sbr.rel (0) target = $region101
    $region100: #{tpu_custom_call.1} parent=1 // pred_region
      %s262 = ssub.s32 512, 512
      %263 = vsyncadd [#allocation29], %s262
      %s264 = sshll.u32 [#allocation28], 4
      %s265 = int_to_ptr.vmem [resolvable:$true] %s264
      %270 = dma.hbm_to_vmem [thread:$0]  %s49, 512, %s265, [#allocation29], 128, 128, 8
    $region101: #{tpu_custom_call.1} parent=1 // pred_fallthru
      _
    // Predicated region
    $region102: #{tpu_custom_call.1} parent=1 // pred_check
      _
    $region103: #{tpu_custom_call.1} parent=1 // pred_check_branch
      %272 = sbr.rel (0) target = $region105
    $region104: #{tpu_custom_call.1} parent=1 // pred_region
      _
    $region105: #{tpu_custom_call.1} parent=1 // pred_fallthru
      _
    // Predicated region
    $region106: #{tpu_custom_call.1} parent=1 // pred_check
      _
    $region107: #{tpu_custom_call.1} parent=1 // pred_check_branch
      %274 = sbr.rel (0) target = $region109
    $region108: #{tpu_custom_call.1} parent=1 // pred_region
      _
    $region109: #{tpu_custom_call.1} parent=1 // pred_fallthru
      _
    // Predicated region
    $region110: #{tpu_custom_call.1} parent=1 // pred_check
      _
    $region111: #{tpu_custom_call.1} parent=1 // pred_check_branch
      %276 = sbr.rel (0) target = $region113
    $region112: #{tpu_custom_call.1} parent=1 // pred_region
      _
    $region113: #{tpu_custom_call.1} parent=1 // pred_fallthru
      _
    // Predicated region
    $region114: #{tpu_custom_call.1} parent=1 // pred_check
      _
    $region115: #{tpu_custom_call.1} parent=1 // pred_check_branch
      %278 = sbr.rel (0) target = $region117
    $region116: #{tpu_custom_call.1} parent=1 // pred_region
      _
    $region117: #{tpu_custom_call.1} parent=1 // pred_fallthru
      _
    // Predicated region
    $region118: #{tpu_custom_call.1} parent=1 // pred_check
      _
    $region119: #{tpu_custom_call.1} parent=1 // pred_check_branch
      %280 = sbr.rel (0) target = $region121
    $region120: #{tpu_custom_call.1} parent=1 // pred_region
      _
    $region121: #{tpu_custom_call.1} parent=1 // pred_fallthru
      _
    // Predicated region
    $region122: #{tpu_custom_call.1} parent=1 // pred_check
      _
    $region123: #{tpu_custom_call.1} parent=1 // pred_check_branch
      %282 = sbr.rel (0) target = $region125
    $region124: #{tpu_custom_call.1} parent=1 // pred_region
      _
    $region125: #{tpu_custom_call.1} parent=1 // pred_fallthru
      _
    // Predicated region
    $region126: #{tpu_custom_call.1} parent=1 // pred_check
      _
    $region127: #{tpu_custom_call.1} parent=1 // pred_check_branch
      %284 = sbr.rel (0) target = $region129
    $region128: #{tpu_custom_call.1} parent=1 // pred_region
      %285 = dma.done [#allocation5], 32
    $region129: #{tpu_custom_call.1} parent=1 // pred_fallthru
      _
    // Predicated region
    $region130: #{tpu_custom_call.1} parent=1 // pred_check
      _
    $region131: #{tpu_custom_call.1} parent=1 // pred_check_branch
      %287 = sbr.rel (0) target = $region133
    $region132: #{tpu_custom_call.1} parent=1 // pred_region
      %288 = dma.done [#allocation8], 32
    $region133: #{tpu_custom_call.1} parent=1 // pred_fallthru
      _
    // Predicated region
    $region134: #{tpu_custom_call.1} parent=1 // pred_check
      _
    $region135: #{tpu_custom_call.1} parent=1 // pred_check_branch
      %290 = sbr.rel (0) target = $region137
    $region136: #{tpu_custom_call.1} parent=1 // pred_region
      %291 = dma.done [#allocation8], 64
    $region137: #{tpu_custom_call.1} parent=1 // pred_fallthru
      _
    // Predicated region
    $region138: #{tpu_custom_call.1} parent=1 // pred_check
      _
    $region139: #{tpu_custom_call.1} parent=1 // pred_check_branch
      %293 = sbr.rel (0) target = $region141
    $region140: #{tpu_custom_call.1} parent=1 // pred_region
      %294 = dma.done [#allocation11], 64
    $region141: #{tpu_custom_call.1} parent=1 // pred_fallthru
      _
    // Predicated region
    $region142: #{tpu_custom_call.1} parent=1 // pred_check
      _
    $region143: #{tpu_custom_call.1} parent=1 // pred_check_branch
      %296 = sbr.rel (0) target = $region145
    $region144: #{tpu_custom_call.1} parent=1 // pred_region
      %297 = dma.done [#allocation11], 64
    $region145: #{tpu_custom_call.1} parent=1 // pred_fallthru
      _
    // Predicated region
    $region146: #{tpu_custom_call.1} parent=1 // pred_check
      _
    $region147: #{tpu_custom_call.1} parent=1 // pred_check_branch
      %299 = sbr.rel (0) target = $region149
    $region148: #{tpu_custom_call.1} parent=1 // pred_region
      %300 = dma.done [#allocation14], 512
    $region149: #{tpu_custom_call.1} parent=1 // pred_fallthru
      _
    // Predicated region
    $region150: #{tpu_custom_call.1} parent=1 // pred_check
      _
    $region151: #{tpu_custom_call.1} parent=1 // pred_check_branch
      %302 = sbr.rel (0) target = $region153
    $region152: #{tpu_custom_call.1} parent=1 // pred_region
      %303 = dma.done [#allocation14], 512
    $region153: #{tpu_custom_call.1} parent=1 // pred_fallthru
      _
    // Predicated region
    $region154: #{tpu_custom_call.1} parent=1 // pred_check
      _
    $region155: #{tpu_custom_call.1} parent=1 // pred_check_branch
      %305 = sbr.rel (0) target = $region157
    $region156: #{tpu_custom_call.1} parent=1 // pred_region
      %306 = dma.done [#allocation17], 16
    $region157: #{tpu_custom_call.1} parent=1 // pred_fallthru
      _
    // Predicated region
    $region158: #{tpu_custom_call.1} parent=1 // pred_check
      _
    $region159: #{tpu_custom_call.1} parent=1 // pred_check_branch
      %308 = sbr.rel (0) target = $region161
    $region160: #{tpu_custom_call.1} parent=1 // pred_region
      %309 = dma.done [#allocation17], 16
    $region161: #{tpu_custom_call.1} parent=1 // pred_fallthru
      _
    // Predicated region
    $region162: #{tpu_custom_call.1} parent=1 // pred_check
      _
    $region163: #{tpu_custom_call.1} parent=1 // pred_check_branch
      %311 = sbr.rel (0) target = $region165
    $region164: #{tpu_custom_call.1} parent=1 // pred_region
      %312 = dma.done [#allocation20], 16
    $region165: #{tpu_custom_call.1} parent=1 // pred_fallthru
      _
    // Predicated region
    $region166: #{tpu_custom_call.1} parent=1 // pred_check
      _
    $region167: #{tpu_custom_call.1} parent=1 // pred_check_branch
      %314 = sbr.rel (0) target = $region169
    $region168: #{tpu_custom_call.1} parent=1 // pred_region
      %315 = dma.done [#allocation20], 512
    $region169: #{tpu_custom_call.1} parent=1 // pred_fallthru
      _
    // Predicated region
    $region170: #{tpu_custom_call.1} parent=1 // pred_check
      _
    $region171: #{tpu_custom_call.1} parent=1 // pred_check_branch
      %317 = sbr.rel (0) target = $region173
    $region172: #{tpu_custom_call.1} parent=1 // pred_region
      %318 = dma.done [#allocation23], 512
    $region173: #{tpu_custom_call.1} parent=1 // pred_fallthru
      _
    // Predicated region
    $region174: #{tpu_custom_call.1} parent=1 // pred_check
      _
    $region175: #{tpu_custom_call.1} parent=1 // pred_check_branch
      %320 = sbr.rel (0) target = $region177
    $region176: #{tpu_custom_call.1} parent=1 // pred_region
      %321 = dma.done [#allocation23], 512
    $region177: #{tpu_custom_call.1} parent=1 // pred_fallthru
      _
    // Predicated region
    $region178: #{tpu_custom_call.1} parent=1 // pred_check
      _
    $region179: #{tpu_custom_call.1} parent=1 // pred_check_branch
      %323 = sbr.rel (0) target = $region181
    $region180: #{tpu_custom_call.1} parent=1 // pred_region
      %324 = dma.done [#allocation26], 16
    $region181: #{tpu_custom_call.1} parent=1 // pred_fallthru
      _
    // Predicated region
    $region182: #{tpu_custom_call.1} parent=1 // pred_check
      _
    $region183: #{tpu_custom_call.1} parent=1 // pred_check_branch
      %326 = sbr.rel (0) target = $region185
    $region184: #{tpu_custom_call.1} parent=1 // pred_region
      %327 = dma.done [#allocation26], 512
    $region185: #{tpu_custom_call.1} parent=1 // pred_fallthru
      _
    // Predicated region
    $region186: #{tpu_custom_call.1} parent=1 // pred_check
      _
    $region187: #{tpu_custom_call.1} parent=1 // pred_check_branch
      %329 = sbr.rel (0) target = $region189
    $region188: #{tpu_custom_call.1} parent=1 // pred_region
      %330 = dma.done [#allocation29], 512
    $region189: #{tpu_custom_call.1} parent=1 // pred_fallthru
      _
    %v331 = vld [vmem:[%s1] sm:$0xff]
    %v332 = vld [vmem:[%s1 + $0x8] sm:$0xff]
    %v333 = vld [vmem:[#allocation4] sm:$0x3]
    %v334 = vld [vmem:[#allocation7] sm:$0x3]
    %v335 = vlaneseq
    %v336 = vshrl.u32 %v335, 7
    %v337 = vsub.s32 0, %v336
    %v338 = vrot.slane %v333, %v337
    %340 = vbcast.lane.b32.xlu0 %v338, 256
    %v341 = vpop.permute.xlu0 %340
    %v342 = vlaneseq
    %v343 = vshrl.u32 %v342, 7
    %v344 = vsub.s32 1, %v343
    %v345 = vrot.slane %v333, %v344
    %347 = vbcast.lane.b32.xlu0 %v345, 256
    %v348 = vpop.permute.xlu0 %347
    %v349 = vmul.f32 %v331, %v341
    %v350 = vmul.f32 %v332, %v348
    %v351 = vld [vmem:[#allocation9] sm:$0xf]
    %v352 = vld [vmem:[%s19] sm:$0x1]
    %v354 = vlaneseq
    %v355 = vshrl.u32 %v354, 7
    %v356 = vsub.s32 0, %v355
    %v357 = vrot.slane %v352, %v356
    %vm359 = vcmask 31744
    %v361 = vsel %vm359, %v349, 0
    %v364 = vsel %vm359, %v350, 0
    %vm366 = vcmask 1043456
    %v368 = vsel %vm366, %v351, 0
    %370 = vmatprep.subr.mxu0 0.0
    %371 = vmatpush1.msra.mxu0 %v368
    %372 = vmatprep.subr.mxu0 0.0
    %373 = vmatpush1.msra.mxu0 0.0
    %374 = vmatprep.subr.mxu0 0.0
    %375 = vmatpush1.msra.mxu0 0.0
    %376 = vmatprep.subr.mxu0 0.0
    %377 = vmatpush1.msra.mxu0 0.0
    %378 = vmatprep.subr.mxu0 0.0
    %379 = vmatpush1.msra.mxu0 0.0
    %380 = vmatprep.subr.mxu0 0.0
    %381 = vmatpush1.msra.mxu0 0.0
    %382 = vmatprep.subr.mxu0 0.0
    %383 = vmatpush1.msra.mxu0 0.0
    %384 = vmatprep.subr.mxu0 0.0
    %385 = vmatpush1.msra.mxu0 0.0
    %386 = vmatprep.subr.mxu0 0.0
    %387 = vmatpush1.msra.mxu0 0.0
    %388 = vmatprep.subr.mxu0 0.0
    %389 = vmatpush1.msra.mxu0 0.0
    %390 = vmatprep.subr.mxu0 0.0
    %391 = vmatpush1.msra.mxu0 0.0
    %392 = vmatprep.subr.mxu0 0.0
    %393 = vmatpush1.msra.mxu0 0.0
    %394 = vmatprep.subr.mxu0 0.0
    %395 = vmatpush1.msra.mxu0 0.0
    %396 = vmatprep.subr.mxu0 0.0
    %397 = vmatpush1.msra.mxu0 0.0
    %398 = vmatprep.subr.mxu0 0.0
    %399 = vmatpush1.msra.mxu0 0.0
    %400 = vmatprep.subr.mxu0 0.0
    %401 = vmatpush1.msra.mxu0 0.0
    %402 = vmatprep.subr.mxu0 0.0
    %403 = vmatpush1.msra.mxu0 0.0
    %404 = vmatprep.subr.mxu0 0.0
    %405 = vmatpush1.msra.mxu0 0.0
    %406 = vmatprep.subr.mxu0 0.0
    %407 = vmatpush1.msra.mxu0 0.0
    %408 = vmatprep.subr.mxu0 0.0
    %409 = vmatpush1.msra.mxu0 0.0
    %410 = vmatprep.subr.mxu0 0.0
    %411 = vmatpush1.msra.mxu0 0.0
    %412 = vmatprep.subr.mxu0 0.0
    %413 = vmatpush1.msra.mxu0 0.0
    %414 = vmatprep.subr.mxu0 0.0
    %415 = vmatpush1.msra.mxu0 0.0
    %416 = vmatprep.subr.mxu0 0.0
    %417 = vmatpush1.msra.mxu0 0.0
    %418 = vmatprep.subr.mxu0 0.0
    %419 = vmatpush1.msra.mxu0 0.0
    %420 = vmatprep.subr.mxu0 0.0
    %421 = vmatpush1.msra.mxu0 0.0
    %422 = vmatprep.subr.mxu0 0.0
    %423 = vmatpush1.msra.mxu0 0.0
    %424 = vmatprep.subr.mxu0 0.0
    %425 = vmatpush1.msra.mxu0 0.0
    %426 = vmatprep.subr.mxu0 0.0
    %427 = vmatpush1.msra.mxu0 0.0
    %428 = vmatprep.subr.mxu0 0.0
    %429 = vmatpush1.msra.mxu0 0.0
    %430 = vmatprep.subr.mxu0 0.0
    %431 = vmatpush1.msra.mxu0 0.0
    %432 = vmatprep.subr.mxu0 0.0
    %433 = vmatpush1.msra.mxu0 0.0
    %434 = vmatprep.mubr.f32.mxu0 0.0
    %435 = vmatmul.mubr.f32.gmra.mrb[0].mxu0 %v361
    %v436 = vpop.f32.mrb[0].mxu0
    %v437 = vadd.f32 %v357, %v436
    %v438 = vpop.f32.mrb[0].mxu0
    %439 = vmatprep.mubr.f32.mxu0 0.0
    %440 = vmatmul.mubr.f32.gmra.mrb[0].mxu0 %v364
    %v441 = vpop.f32.mrb[0].mxu0
    %v442 = vadd.f32 %v357, %v441
    %v443 = vpop.f32.mrb[0].mxu0
    %444 = vdwg.mxu0
    %v445 = vld [vmem:[#allocation10] sm:$0xf]
    %v446 = vld [vmem:[#allocation16] sm:$0x1]
    %v448 = vlaneseq
    %v449 = vshrl.u32 %v448, 7
    %v450 = vsub.s32 0, %v449
    %v451 = vrot.slane %v446, %v450
    %v454 = vsel %vm366, %v445, 0
    %456 = vmatprep.subr.mxu0 0.0
    %457 = vmatpush1.msra.mxu0 %v454
    %458 = vmatprep.subr.mxu0 0.0
    %459 = vmatpush1.msra.mxu0 0.0
    %460 = vmatprep.subr.mxu0 0.0
    %461 = vmatpush1.msra.mxu0 0.0
    %462 = vmatprep.subr.mxu0 0.0
    %463 = vmatpush1.msra.mxu0 0.0
    %464 = vmatprep.subr.mxu0 0.0
    %465 = vmatpush1.msra.mxu0 0.0
    %466 = vmatprep.subr.mxu0 0.0
    %467 = vmatpush1.msra.mxu0 0.0
    %468 = vmatprep.subr.mxu0 0.0
    %469 = vmatpush1.msra.mxu0 0.0
    %470 = vmatprep.subr.mxu0 0.0
    %471 = vmatpush1.msra.mxu0 0.0
    %472 = vmatprep.subr.mxu0 0.0
    %473 = vmatpush1.msra.mxu0 0.0
    %474 = vmatprep.subr.mxu0 0.0
    %475 = vmatpush1.msra.mxu0 0.0
    %476 = vmatprep.subr.mxu0 0.0
    %477 = vmatpush1.msra.mxu0 0.0
    %478 = vmatprep.subr.mxu0 0.0
    %479 = vmatpush1.msra.mxu0 0.0
    %480 = vmatprep.subr.mxu0 0.0
    %481 = vmatpush1.msra.mxu0 0.0
    %482 = vmatprep.subr.mxu0 0.0
    %483 = vmatpush1.msra.mxu0 0.0
    %484 = vmatprep.subr.mxu0 0.0
    %485 = vmatpush1.msra.mxu0 0.0
    %486 = vmatprep.subr.mxu0 0.0
    %487 = vmatpush1.msra.mxu0 0.0
    %488 = vmatprep.subr.mxu0 0.0
    %489 = vmatpush1.msra.mxu0 0.0
    %490 = vmatprep.subr.mxu0 0.0
    %491 = vmatpush1.msra.mxu0 0.0
    %492 = vmatprep.subr.mxu0 0.0
    %493 = vmatpush1.msra.mxu0 0.0
    %494 = vmatprep.subr.mxu0 0.0
    %495 = vmatpush1.msra.mxu0 0.0
    %496 = vmatprep.subr.mxu0 0.0
    %497 = vmatpush1.msra.mxu0 0.0
    %498 = vmatprep.subr.mxu0 0.0
    %499 = vmatpush1.msra.mxu0 0.0
    %500 = vmatprep.subr.mxu0 0.0
    %501 = vmatpush1.msra.mxu0 0.0
    %502 = vmatprep.subr.mxu0 0.0
    %503 = vmatpush1.msra.mxu0 0.0
    %504 = vmatprep.subr.mxu0 0.0
    %505 = vmatpush1.msra.mxu0 0.0
    %506 = vmatprep.subr.mxu0 0.0
    %507 = vmatpush1.msra.mxu0 0.0
    %508 = vmatprep.subr.mxu0 0.0
    %509 = vmatpush1.msra.mxu0 0.0
    %510 = vmatprep.subr.mxu0 0.0
    %511 = vmatpush1.msra.mxu0 0.0
    %512 = vmatprep.subr.mxu0 0.0
    %513 = vmatpush1.msra.mxu0 0.0
    %514 = vmatprep.subr.mxu0 0.0
    %515 = vmatpush1.msra.mxu0 0.0
    %516 = vmatprep.subr.mxu0 0.0
    %517 = vmatpush1.msra.mxu0 0.0
    %518 = vmatprep.subr.mxu0 0.0
    %519 = vmatpush1.msra.mxu0 0.0
    %520 = vmatprep.mubr.f32.mxu0 0.0
    %521 = vmatmul.mubr.f32.gmra.mrb[0].mxu0 %v361
    %v522 = vpop.f32.mrb[0].mxu0
    %v523 = vadd.f32 %v451, %v522
    %v524 = vpop.f32.mrb[0].mxu0
    %525 = vmatprep.mubr.f32.mxu0 0.0
    %526 = vmatmul.mubr.f32.gmra.mrb[0].mxu0 %v364
    %v527 = vpop.f32.mrb[0].mxu0
    %v528 = vadd.f32 %v451, %v527
    %v529 = vpop.f32.mrb[0].mxu0
    %530 = vdwg.mxu0
    %v531 = vld [vmem:[#allocation12] sm:$0xf]
    %v532 = vld [vmem:[%s23] sm:$0x1]
    %v534 = vlaneseq
    %v535 = vshrl.u32 %v534, 7
    %v536 = vsub.s32 0, %v535
    %v537 = vrot.slane %v532, %v536
    %v540 = vsel %vm366, %v531, 0
    %542 = vmatprep.subr.mxu0 0.0
    %543 = vmatpush1.msra.mxu0 %v540
    %544 = vmatprep.subr.mxu0 0.0
    %545 = vmatpush1.msra.mxu0 0.0
    %546 = vmatprep.subr.mxu0 0.0
    %547 = vmatpush1.msra.mxu0 0.0
    %548 = vmatprep.subr.mxu0 0.0
    %549 = vmatpush1.msra.mxu0 0.0
    %550 = vmatprep.subr.mxu0 0.0
    %551 = vmatpush1.msra.mxu0 0.0
    %552 = vmatprep.subr.mxu0 0.0
    %553 = vmatpush1.msra.mxu0 0.0
    %554 = vmatprep.subr.mxu0 0.0
    %555 = vmatpush1.msra.mxu0 0.0
    %556 = vmatprep.subr.mxu0 0.0
    %557 = vmatpush1.msra.mxu0 0.0
    %558 = vmatprep.subr.mxu0 0.0
    %559 = vmatpush1.msra.mxu0 0.0
    %560 = vmatprep.subr.mxu0 0.0
    %561 = vmatpush1.msra.mxu0 0.0
    %562 = vmatprep.subr.mxu0 0.0
    %563 = vmatpush1.msra.mxu0 0.0
    %564 = vmatprep.subr.mxu0 0.0
    %565 = vmatpush1.msra.mxu0 0.0
    %566 = vmatprep.subr.mxu0 0.0
    %567 = vmatpush1.msra.mxu0 0.0
    %568 = vmatprep.subr.mxu0 0.0
    %569 = vmatpush1.msra.mxu0 0.0
    %570 = vmatprep.subr.mxu0 0.0
    %571 = vmatpush1.msra.mxu0 0.0
    %572 = vmatprep.subr.mxu0 0.0
    %573 = vmatpush1.msra.mxu0 0.0
    %574 = vmatprep.subr.mxu0 0.0
    %575 = vmatpush1.msra.mxu0 0.0
    %576 = vmatprep.subr.mxu0 0.0
    %577 = vmatpush1.msra.mxu0 0.0
    %578 = vmatprep.subr.mxu0 0.0
    %579 = vmatpush1.msra.mxu0 0.0
    %580 = vmatprep.subr.mxu0 0.0
    %581 = vmatpush1.msra.mxu0 0.0
    %582 = vmatprep.subr.mxu0 0.0
    %583 = vmatpush1.msra.mxu0 0.0
    %584 = vmatprep.subr.mxu0 0.0
    %585 = vmatpush1.msra.mxu0 0.0
    %586 = vmatprep.subr.mxu0 0.0
    %587 = vmatpush1.msra.mxu0 0.0
    %588 = vmatprep.subr.mxu0 0.0
    %589 = vmatpush1.msra.mxu0 0.0
    %590 = vmatprep.subr.mxu0 0.0
    %591 = vmatpush1.msra.mxu0 0.0
    %592 = vmatprep.subr.mxu0 0.0
    %593 = vmatpush1.msra.mxu0 0.0
    %594 = vmatprep.subr.mxu0 0.0
    %595 = vmatpush1.msra.mxu0 0.0
    %596 = vmatprep.subr.mxu0 0.0
    %597 = vmatpush1.msra.mxu0 0.0
    %598 = vmatprep.subr.mxu0 0.0
    %599 = vmatpush1.msra.mxu0 0.0
    %600 = vmatprep.subr.mxu0 0.0
    %601 = vmatpush1.msra.mxu0 0.0
    %602 = vmatprep.subr.mxu0 0.0
    %603 = vmatpush1.msra.mxu0 0.0
    %604 = vmatprep.subr.mxu0 0.0
    %605 = vmatpush1.msra.mxu0 0.0
    %606 = vmatprep.mubr.f32.mxu0 0.0
    %607 = vmatmul.mubr.f32.gmra.mrb[0].mxu0 %v361
    %v608 = vpop.f32.mrb[0].mxu0
    %v609 = vadd.f32 %v537, %v608
    %v610 = vpop.f32.mrb[0].mxu0
    %611 = vmatprep.mubr.f32.mxu0 0.0
    %612 = vmatmul.mubr.f32.gmra.mrb[0].mxu0 %v364
    %v613 = vpop.f32.mrb[0].mxu0
    %v614 = vadd.f32 %v537, %v613
    %v615 = vpop.f32.mrb[0].mxu0
    %616 = vdwg.mxu0
    %v617 = vld [vmem:[%s13] sm:$0xff]
    %v618 = vld [vmem:[%s13 + $0x8] sm:$0xff]
    %v619 = vld [vmem:[%s13 + $0x10] sm:$0xff]
    %v620 = vld [vmem:[%s13 + $0x18] sm:$0xff]
    %v621 = vld [vmem:[#allocation13] sm:$0xff]
    %v622 = vld [vmem:[#allocation13 + $0x8] sm:$0xff]
    %v623 = vld [vmem:[#allocation13 + $0x10] sm:$0xff]
    %v624 = vld [vmem:[#allocation13 + $0x18] sm:$0xff]
    %v625 = vld [vmem:[#allocation15] sm:$0xff]
    %v626 = vld [vmem:[#allocation15 + $0x8] sm:$0xff]
    %v627 = vld [vmem:[#allocation15 + $0x10] sm:$0xff]
    %v628 = vld [vmem:[#allocation15 + $0x18] sm:$0xff]
    %v629 = vld [vmem:[%s25] sm:$0x1]
    %vm630 = vcmask 261120
    %v632 = vsel %vm630, 0.0, 0
    %634 = vmatprep.subr.mxu0 0.0
    %635 = vmatpush1.msra.mxu0 %v617
    %636 = vmatprep.subr.mxu0 0.0
    %637 = vmatpush1.msra.mxu0 %v618
    %638 = vmatprep.subr.mxu0 0.0
    %639 = vmatpush1.msra.mxu0 %v619
    %640 = vmatprep.subr.mxu0 0.0
    %641 = vmatpush1.msra.mxu0 %v620
    %642 = vmatprep.subr.mxu0 0.0
    %643 = vmatpush1.msra.mxu0 0.0
    %644 = vmatprep.subr.mxu0 0.0
    %645 = vmatpush1.msra.mxu0 0.0
    %646 = vmatprep.subr.mxu0 0.0
    %647 = vmatpush1.msra.mxu0 0.0
    %648 = vmatprep.subr.mxu0 0.0
    %649 = vmatpush1.msra.mxu0 0.0
    %650 = vmatprep.subr.mxu0 0.0
    %651 = vmatpush1.msra.mxu0 0.0
    %652 = vmatprep.subr.mxu0 0.0
    %653 = vmatpush1.msra.mxu0 0.0
    %654 = vmatprep.subr.mxu0 0.0
    %655 = vmatpush1.msra.mxu0 0.0
    %656 = vmatprep.subr.mxu0 0.0
    %657 = vmatpush1.msra.mxu0 0.0
    %658 = vmatprep.subr.mxu0 0.0
    %659 = vmatpush1.msra.mxu0 0.0
    %660 = vmatprep.subr.mxu0 0.0
    %661 = vmatpush1.msra.mxu0 0.0
    %662 = vmatprep.subr.mxu0 0.0
    %663 = vmatpush1.msra.mxu0 0.0
    %664 = vmatprep.subr.mxu0 0.0
    %665 = vmatpush1.msra.mxu0 0.0
    %666 = vmatprep.subr.mxu0 0.0
    %667 = vmatpush1.msra.mxu0 0.0
    %668 = vmatprep.subr.mxu0 0.0
    %669 = vmatpush1.msra.mxu0 0.0
    %670 = vmatprep.subr.mxu0 0.0
    %671 = vmatpush1.msra.mxu0 0.0
    %672 = vmatprep.subr.mxu0 0.0
    %673 = vmatpush1.msra.mxu0 0.0
    %674 = vmatprep.subr.mxu0 0.0
    %675 = vmatpush1.msra.mxu0 0.0
    %676 = vmatprep.subr.mxu0 0.0
    %677 = vmatpush1.msra.mxu0 0.0
    %678 = vmatprep.subr.mxu0 0.0
    %679 = vmatpush1.msra.mxu0 0.0
    %680 = vmatprep.subr.mxu0 0.0
    %681 = vmatpush1.msra.mxu0 0.0
    %682 = vmatprep.subr.mxu0 0.0
    %683 = vmatpush1.msra.mxu0 0.0
    %684 = vmatprep.subr.mxu0 0.0
    %685 = vmatpush1.msra.mxu0 0.0
    %686 = vmatprep.subr.mxu0 0.0
    %687 = vmatpush1.msra.mxu0 0.0
    %688 = vmatprep.subr.mxu0 0.0
    %689 = vmatpush1.msra.mxu0 0.0
    %690 = vmatprep.subr.mxu0 0.0
    %691 = vmatpush1.msra.mxu0 0.0
    %692 = vmatprep.subr.mxu0 0.0
    %693 = vmatpush1.msra.mxu0 0.0
    %694 = vmatprep.subr.mxu0 0.0
    %695 = vmatpush1.msra.mxu0 0.0
    %696 = vmatprep.subr.mxu0 0.0
    %697 = vmatpush1.msra.mxu0 0.0
    %698 = vmatprep.mubr.f32.mxu0 0.0
    %699 = vmatmul.mubr.f32.gmra.mrb[0].mxu0 %v632
    %v700 = vpop.f32.mrb[0].mxu0
    %v701 = vadd.f32 0.0, %v700
    %v702 = vpop.f32.mrb[0].mxu0
    %703 = vdwg.mxu0
    %704 = vmatprep.subr.mxu0 0.0
    %705 = vmatpush1.msra.mxu0 %v621
    %706 = vmatprep.subr.mxu0 0.0
    %707 = vmatpush1.msra.mxu0 %v622
    %708 = vmatprep.subr.mxu0 0.0
    %709 = vmatpush1.msra.mxu0 %v623
    %710 = vmatprep.subr.mxu0 0.0
    %711 = vmatpush1.msra.mxu0 %v624
    %712 = vmatprep.subr.mxu0 0.0
    %713 = vmatpush1.msra.mxu0 0.0
    %714 = vmatprep.subr.mxu0 0.0
    %715 = vmatpush1.msra.mxu0 0.0
    %716 = vmatprep.subr.mxu0 0.0
    %717 = vmatpush1.msra.mxu0 0.0
    %718 = vmatprep.subr.mxu0 0.0
    %719 = vmatpush1.msra.mxu0 0.0
    %720 = vmatprep.subr.mxu0 0.0
    %721 = vmatpush1.msra.mxu0 0.0
    %722 = vmatprep.subr.mxu0 0.0
    %723 = vmatpush1.msra.mxu0 0.0
    %724 = vmatprep.subr.mxu0 0.0
    %725 = vmatpush1.msra.mxu0 0.0
    %726 = vmatprep.subr.mxu0 0.0
    %727 = vmatpush1.msra.mxu0 0.0
    %728 = vmatprep.subr.mxu0 0.0
    %729 = vmatpush1.msra.mxu0 0.0
    %730 = vmatprep.subr.mxu0 0.0
    %731 = vmatpush1.msra.mxu0 0.0
    %732 = vmatprep.subr.mxu0 0.0
    %733 = vmatpush1.msra.mxu0 0.0
    %734 = vmatprep.subr.mxu0 0.0
    %735 = vmatpush1.msra.mxu0 0.0
    %736 = vmatprep.subr.mxu0 0.0
    %737 = vmatpush1.msra.mxu0 0.0
    %738 = vmatprep.subr.mxu0 0.0
    %739 = vmatpush1.msra.mxu0 0.0
    %740 = vmatprep.subr.mxu0 0.0
    %741 = vmatpush1.msra.mxu0 0.0
    %742 = vmatprep.subr.mxu0 0.0
    %743 = vmatpush1.msra.mxu0 0.0
    %744 = vmatprep.subr.mxu0 0.0
    %745 = vmatpush1.msra.mxu0 0.0
    %746 = vmatprep.subr.mxu0 0.0
    %747 = vmatpush1.msra.mxu0 0.0
    %748 = vmatprep.subr.mxu0 0.0
    %749 = vmatpush1.msra.mxu0 0.0
    %750 = vmatprep.subr.mxu0 0.0
    %751 = vmatpush1.msra.mxu0 0.0
    %752 = vmatprep.subr.mxu0 0.0
    %753 = vmatpush1.msra.mxu0 0.0
    %754 = vmatprep.subr.mxu0 0.0
    %755 = vmatpush1.msra.mxu0 0.0
    %756 = vmatprep.subr.mxu0 0.0
    %757 = vmatpush1.msra.mxu0 0.0
    %758 = vmatprep.subr.mxu0 0.0
    %759 = vmatpush1.msra.mxu0 0.0
    %760 = vmatprep.subr.mxu0 0.0
    %761 = vmatpush1.msra.mxu0 0.0
    %762 = vmatprep.subr.mxu0 0.0
    %763 = vmatpush1.msra.mxu0 0.0
    %764 = vmatprep.subr.mxu0 0.0
    %765 = vmatpush1.msra.mxu0 0.0
    %766 = vmatprep.subr.mxu0 0.0
    %767 = vmatpush1.msra.mxu0 0.0
    %768 = vmatprep.mubr.f32.mxu0 0.0
    %769 = vmatmul.mubr.f32.gmra.mrb[0].mxu0 %v632
    %v770 = vpop.f32.mrb[0].mxu0
    %v771 = vadd.f32 0.0, %v770
    %v772 = vpop.f32.mrb[0].mxu0
    %773 = vdwg.mxu0
    %v775 = vlaneseq
    %v776 = vshrl.u32 %v775, 7
    %v777 = vsub.s32 0, %v776
    %v778 = vrot.slane %v629, %v777
    %780 = vmatprep.subr.mxu0 0.0
    %781 = vmatpush1.msra.mxu0 %v625
    %782 = vmatprep.subr.mxu0 0.0
    %783 = vmatpush1.msra.mxu0 %v626
    %784 = vmatprep.subr.mxu0 0.0
    %785 = vmatpush1.msra.mxu0 %v627
    %786 = vmatprep.subr.mxu0 0.0
    %787 = vmatpush1.msra.mxu0 %v628
    %788 = vmatprep.subr.mxu0 0.0
    %789 = vmatpush1.msra.mxu0 0.0
    %790 = vmatprep.subr.mxu0 0.0
    %791 = vmatpush1.msra.mxu0 0.0
    %792 = vmatprep.subr.mxu0 0.0
    %793 = vmatpush1.msra.mxu0 0.0
    %794 = vmatprep.subr.mxu0 0.0
    %795 = vmatpush1.msra.mxu0 0.0
    %796 = vmatprep.subr.mxu0 0.0
    %797 = vmatpush1.msra.mxu0 0.0
    %798 = vmatprep.subr.mxu0 0.0
    %799 = vmatpush1.msra.mxu0 0.0
    %800 = vmatprep.subr.mxu0 0.0
    %801 = vmatpush1.msra.mxu0 0.0
    %802 = vmatprep.subr.mxu0 0.0
    %803 = vmatpush1.msra.mxu0 0.0
    %804 = vmatprep.subr.mxu0 0.0
    %805 = vmatpush1.msra.mxu0 0.0
    %806 = vmatprep.subr.mxu0 0.0
    %807 = vmatpush1.msra.mxu0 0.0
    %808 = vmatprep.subr.mxu0 0.0
    %809 = vmatpush1.msra.mxu0 0.0
    %810 = vmatprep.subr.mxu0 0.0
    %811 = vmatpush1.msra.mxu0 0.0
    %812 = vmatprep.subr.mxu0 0.0
    %813 = vmatpush1.msra.mxu0 0.0
    %814 = vmatprep.subr.mxu0 0.0
    %815 = vmatpush1.msra.mxu0 0.0
    %816 = vmatprep.subr.mxu0 0.0
    %817 = vmatpush1.msra.mxu0 0.0
    %818 = vmatprep.subr.mxu0 0.0
    %819 = vmatpush1.msra.mxu0 0.0
    %820 = vmatprep.subr.mxu0 0.0
    %821 = vmatpush1.msra.mxu0 0.0
    %822 = vmatprep.subr.mxu0 0.0
    %823 = vmatpush1.msra.mxu0 0.0
    %824 = vmatprep.subr.mxu0 0.0
    %825 = vmatpush1.msra.mxu0 0.0
    %826 = vmatprep.subr.mxu0 0.0
    %827 = vmatpush1.msra.mxu0 0.0
    %828 = vmatprep.subr.mxu0 0.0
    %829 = vmatpush1.msra.mxu0 0.0
    %830 = vmatprep.subr.mxu0 0.0
    %831 = vmatpush1.msra.mxu0 0.0
    %832 = vmatprep.subr.mxu0 0.0
    %833 = vmatpush1.msra.mxu0 0.0
    %834 = vmatprep.subr.mxu0 0.0
    %835 = vmatpush1.msra.mxu0 0.0
    %836 = vmatprep.subr.mxu0 0.0
    %837 = vmatpush1.msra.mxu0 0.0
    %838 = vmatprep.subr.mxu0 0.0
    %839 = vmatpush1.msra.mxu0 0.0
    %840 = vmatprep.subr.mxu0 0.0
    %841 = vmatpush1.msra.mxu0 0.0
    %842 = vmatprep.subr.mxu0 0.0
    %843 = vmatpush1.msra.mxu0 0.0
    %844 = vmatprep.mubr.f32.mxu0 0.0
    %845 = vmatmul.mubr.f32.gmra.mrb[0].mxu0 %v632
    %v846 = vpop.f32.mrb[0].mxu0
    %v847 = vadd.f32 %v778, %v846
    %v848 = vpop.f32.mrb[0].mxu0
    %849 = vdwg.mxu0
    %v851 = vrot.slane %v701, 1
    %v854 = vadd.f32 %v437, %v701
    %v855 = vadd.f32 %v442, %v851
    %v856 = vxor.u32 %v854, 2147483648
    %v857 = vxor.u32 %v855, 2147483648
    %v858 = vmul.f32 %v856, 1.442695
    %v859 = vpow.pop %v858
    %v860 = vmul.f32 %v857, 1.442695
    %v861 = vpow.pop %v860
    %v862 = vadd.f32 %v859, 1.0
    %v863 = vadd.f32 %v861, 1.0
    %v864 = vrcp.pop %v862
    %v865 = vmul.f32 1.0, %v864
    %v866 = vrcp.pop %v863
    %v867 = vmul.f32 1.0, %v866
    %v869 = vrot.slane %v771, 1
    %v872 = vadd.f32 %v523, %v771
    %v873 = vadd.f32 %v528, %v869
    %v874 = vxor.u32 %v872, 2147483648
    %v875 = vxor.u32 %v873, 2147483648
    %v876 = vmul.f32 %v874, 1.442695
    %v877 = vpow.pop %v876
    %v878 = vmul.f32 %v875, 1.442695
    %v879 = vpow.pop %v878
    %v880 = vadd.f32 %v877, 1.0
    %v881 = vadd.f32 %v879, 1.0
    %v882 = vrcp.pop %v880
    %v883 = vmul.f32 1.0, %v882
    %v884 = vrcp.pop %v881
    %v885 = vmul.f32 1.0, %v884
    %v887 = vrot.slane %v847, 1
    %v890 = vmul.f32 %v865, %v847
    %v891 = vmul.f32 %v867, %v887
    %v892 = vadd.f32 %v609, %v890
    %v893 = vadd.f32 %v614, %v891
    %v894 = vtanh.pop %v892
    %v895 = vtanh.pop %v893
    %v896 = vsub.f32 1.0, %v883
    %v897 = vsub.f32 1.0, %v885
    %v898 = vmul.f32 %v896, %v894
    %v899 = vmul.f32 %v897, %v895
    %v900 = vmul.f32 %v883, 0.0
    %v901 = vmul.f32 %v885, 0.0
    %v902 = vadd.f32 %v898, %v900
    %v903 = vadd.f32 %v899, %v901
    %vm904 = vcmask 253952
    %905 = vst.msk [vmem:[#allocation2] sm:$0x1] %vm904, %v902
    %906 = vst.msk [vmem:[#allocation2 + $0x8] sm:$0x1] %vm904, %v903
    %v909 = vrot.slane %v903, 7
    %vm910 = vcmask 1041409
    %v911 = vsel %vm910, %v909, %v902
    %v912 = vsel %vm630, %v911, 0
    %914 = vmatprep.subr.mxu0 0.0
    %915 = vmatpush1.msra.mxu0 %v617
    %916 = vmatprep.subr.mxu0 0.0
    %917 = vmatpush1.msra.mxu0 %v618
    %918 = vmatprep.subr.mxu0 0.0
    %919 = vmatpush1.msra.mxu0 %v619
    %920 = vmatprep.subr.mxu0 0.0
    %921 = vmatpush1.msra.mxu0 %v620
    %922 = vmatprep.subr.mxu0 0.0
    %923 = vmatpush1.msra.mxu0 0.0
    %924 = vmatprep.subr.mxu0 0.0
    %925 = vmatpush1.msra.mxu0 0.0
    %926 = vmatprep.subr.mxu0 0.0
    %927 = vmatpush1.msra.mxu0 0.0
    %928 = vmatprep.subr.mxu0 0.0
    %929 = vmatpush1.msra.mxu0 0.0
    %930 = vmatprep.subr.mxu0 0.0
    %931 = vmatpush1.msra.mxu0 0.0
    %932 = vmatprep.subr.mxu0 0.0
    %933 = vmatpush1.msra.mxu0 0.0
    %934 = vmatprep.subr.mxu0 0.0
    %935 = vmatpush1.msra.mxu0 0.0
    %936 = vmatprep.subr.mxu0 0.0
    %937 = vmatpush1.msra.mxu0 0.0
    %938 = vmatprep.subr.mxu0 0.0
    %939 = vmatpush1.msra.mxu0 0.0
    %940 = vmatprep.subr.mxu0 0.0
    %941 = vmatpush1.msra.mxu0 0.0
    %942 = vmatprep.subr.mxu0 0.0
    %943 = vmatpush1.msra.mxu0 0.0
    %944 = vmatprep.subr.mxu0 0.0
    %945 = vmatpush1.msra.mxu0 0.0
    %946 = vmatprep.subr.mxu0 0.0
    %947 = vmatpush1.msra.mxu0 0.0
    %948 = vmatprep.subr.mxu0 0.0
    %949 = vmatpush1.msra.mxu0 0.0
    %950 = vmatprep.subr.mxu0 0.0
    %951 = vmatpush1.msra.mxu0 0.0
    %952 = vmatprep.subr.mxu0 0.0
    %953 = vmatpush1.msra.mxu0 0.0
    %954 = vmatprep.subr.mxu0 0.0
    %955 = vmatpush1.msra.mxu0 0.0
    %956 = vmatprep.subr.mxu0 0.0
    %957 = vmatpush1.msra.mxu0 0.0
    %958 = vmatprep.subr.mxu0 0.0
    %959 = vmatpush1.msra.mxu0 0.0
    %960 = vmatprep.subr.mxu0 0.0
    %961 = vmatpush1.msra.mxu0 0.0
    %962 = vmatprep.subr.mxu0 0.0
    %963 = vmatpush1.msra.mxu0 0.0
    %964 = vmatprep.subr.mxu0 0.0
    %965 = vmatpush1.msra.mxu0 0.0
    %966 = vmatprep.subr.mxu0 0.0
    %967 = vmatpush1.msra.mxu0 0.0
    %968 = vmatprep.subr.mxu0 0.0
    %969 = vmatpush1.msra.mxu0 0.0
    %970 = vmatprep.subr.mxu0 0.0
    %971 = vmatpush1.msra.mxu0 0.0
    %972 = vmatprep.subr.mxu0 0.0
    %973 = vmatpush1.msra.mxu0 0.0
    %974 = vmatprep.subr.mxu0 0.0
    %975 = vmatpush1.msra.mxu0 0.0
    %976 = vmatprep.subr.mxu0 0.0
    %977 = vmatpush1.msra.mxu0 0.0
    %978 = vmatprep.mubr.f32.mxu0 0.0
    %979 = vmatmul.mubr.f32.gmra.mrb[0].mxu0 %v912
    %v980 = vpop.f32.mrb[0].mxu0
    %v981 = vadd.f32 0.0, %v980
    %v982 = vpop.f32.mrb[0].mxu0
    %983 = vdwg.mxu0
    %984 = vmatprep.subr.mxu0 0.0
    %985 = vmatpush1.msra.mxu0 %v621
    %986 = vmatprep.subr.mxu0 0.0
    %987 = vmatpush1.msra.mxu0 %v622
    %988 = vmatprep.subr.mxu0 0.0
    %989 = vmatpush1.msra.mxu0 %v623
    %990 = vmatprep.subr.mxu0 0.0
    %991 = vmatpush1.msra.mxu0 %v624
    %992 = vmatprep.subr.mxu0 0.0
    %993 = vmatpush1.msra.mxu0 0.0
    %994 = vmatprep.subr.mxu0 0.0
    %995 = vmatpush1.msra.mxu0 0.0
    %996 = vmatprep.subr.mxu0 0.0
    %997 = vmatpush1.msra.mxu0 0.0
    %998 = vmatprep.subr.mxu0 0.0
    %999 = vmatpush1.msra.mxu0 0.0
    %1000 = vmatprep.subr.mxu0 0.0
    %1001 = vmatpush1.msra.mxu0 0.0
    %1002 = vmatprep.subr.mxu0 0.0
    %1003 = vmatpush1.msra.mxu0 0.0
    %1004 = vmatprep.subr.mxu0 0.0
    %1005 = vmatpush1.msra.mxu0 0.0
    %1006 = vmatprep.subr.mxu0 0.0
    %1007 = vmatpush1.msra.mxu0 0.0
    %1008 = vmatprep.subr.mxu0 0.0
    %1009 = vmatpush1.msra.mxu0 0.0
    %1010 = vmatprep.subr.mxu0 0.0
    %1011 = vmatpush1.msra.mxu0 0.0
    %1012 = vmatprep.subr.mxu0 0.0
    %1013 = vmatpush1.msra.mxu0 0.0
    %1014 = vmatprep.subr.mxu0 0.0
    %1015 = vmatpush1.msra.mxu0 0.0
    %1016 = vmatprep.subr.mxu0 0.0
    %1017 = vmatpush1.msra.mxu0 0.0
    %1018 = vmatprep.subr.mxu0 0.0
    %1019 = vmatpush1.msra.mxu0 0.0
    %1020 = vmatprep.subr.mxu0 0.0
    %1021 = vmatpush1.msra.mxu0 0.0
    %1022 = vmatprep.subr.mxu0 0.0
    %1023 = vmatpush1.msra.mxu0 0.0
    %1024 = vmatprep.subr.mxu0 0.0
    %1025 = vmatpush1.msra.mxu0 0.0
    %1026 = vmatprep.subr.mxu0 0.0
    %1027 = vmatpush1.msra.mxu0 0.0
    %1028 = vmatprep.subr.mxu0 0.0
    %1029 = vmatpush1.msra.mxu0 0.0
    %1030 = vmatprep.subr.mxu0 0.0
    %1031 = vmatpush1.msra.mxu0 0.0
    %1032 = vmatprep.subr.mxu0 0.0
    %1033 = vmatpush1.msra.mxu0 0.0
    %1034 = vmatprep.subr.mxu0 0.0
    %1035 = vmatpush1.msra.mxu0 0.0
    %1036 = vmatprep.subr.mxu0 0.0
    %1037 = vmatpush1.msra.mxu0 0.0
    %1038 = vmatprep.subr.mxu0 0.0
    %1039 = vmatpush1.msra.mxu0 0.0
    %1040 = vmatprep.subr.mxu0 0.0
    %1041 = vmatpush1.msra.mxu0 0.0
    %1042 = vmatprep.subr.mxu0 0.0
    %1043 = vmatpush1.msra.mxu0 0.0
    %1044 = vmatprep.subr.mxu0 0.0
    %1045 = vmatpush1.msra.mxu0 0.0
    %1046 = vmatprep.subr.mxu0 0.0
    %1047 = vmatpush1.msra.mxu0 0.0
    %1048 = vmatprep.mubr.f32.mxu0 0.0
    %1049 = vmatmul.mubr.f32.gmra.mrb[0].mxu0 %v912
    %v1050 = vpop.f32.mrb[0].mxu0
    %v1051 = vadd.f32 0.0, %v1050
    %v1052 = vpop.f32.mrb[0].mxu0
    %1053 = vdwg.mxu0
    %1054 = vmatprep.subr.mxu0 0.0
    %1055 = vmatpush1.msra.mxu0 %v625
    %1056 = vmatprep.subr.mxu0 0.0
    %1057 = vmatpush1.msra.mxu0 %v626
    %1058 = vmatprep.subr.mxu0 0.0
    %1059 = vmatpush1.msra.mxu0 %v627
    %1060 = vmatprep.subr.mxu0 0.0
    %1061 = vmatpush1.msra.mxu0 %v628
    %1062 = vmatprep.subr.mxu0 0.0
    %1063 = vmatpush1.msra.mxu0 0.0
    %1064 = vmatprep.subr.mxu0 0.0
    %1065 = vmatpush1.msra.mxu0 0.0
    %1066 = vmatprep.subr.mxu0 0.0
    %1067 = vmatpush1.msra.mxu0 0.0
    %1068 = vmatprep.subr.mxu0 0.0
    %1069 = vmatpush1.msra.mxu0 0.0
    %1070 = vmatprep.subr.mxu0 0.0
    %1071 = vmatpush1.msra.mxu0 0.0
    %1072 = vmatprep.subr.mxu0 0.0
    %1073 = vmatpush1.msra.mxu0 0.0
    %1074 = vmatprep.subr.mxu0 0.0
    %1075 = vmatpush1.msra.mxu0 0.0
    %1076 = vmatprep.subr.mxu0 0.0
    %1077 = vmatpush1.msra.mxu0 0.0
    %1078 = vmatprep.subr.mxu0 0.0
    %1079 = vmatpush1.msra.mxu0 0.0
    %1080 = vmatprep.subr.mxu0 0.0
    %1081 = vmatpush1.msra.mxu0 0.0
    %1082 = vmatprep.subr.mxu0 0.0
    %1083 = vmatpush1.msra.mxu0 0.0
    %1084 = vmatprep.subr.mxu0 0.0
    %1085 = vmatpush1.msra.mxu0 0.0
    %1086 = vmatprep.subr.mxu0 0.0
    %1087 = vmatpush1.msra.mxu0 0.0
    %1088 = vmatprep.subr.mxu0 0.0
    %1089 = vmatpush1.msra.mxu0 0.0
    %1090 = vmatprep.subr.mxu0 0.0
    %1091 = vmatpush1.msra.mxu0 0.0
    %1092 = vmatprep.subr.mxu0 0.0
    %1093 = vmatpush1.msra.mxu0 0.0
    %1094 = vmatprep.subr.mxu0 0.0
    %1095 = vmatpush1.msra.mxu0 0.0
    %1096 = vmatprep.subr.mxu0 0.0
    %1097 = vmatpush1.msra.mxu0 0.0
    %1098 = vmatprep.subr.mxu0 0.0
    %1099 = vmatpush1.msra.mxu0 0.0
    %1100 = vmatprep.subr.mxu0 0.0
    %1101 = vmatpush1.msra.mxu0 0.0
    %1102 = vmatprep.subr.mxu0 0.0
    %1103 = vmatpush1.msra.mxu0 0.0
    %1104 = vmatprep.subr.mxu0 0.0
    %1105 = vmatpush1.msra.mxu0 0.0
    %1106 = vmatprep.subr.mxu0 0.0
    %1107 = vmatpush1.msra.mxu0 0.0
    %1108 = vmatprep.subr.mxu0 0.0
    %1109 = vmatpush1.msra.mxu0 0.0
    %1110 = vmatprep.subr.mxu0 0.0
    %1111 = vmatpush1.msra.mxu0 0.0
    %1112 = vmatprep.subr.mxu0 0.0
    %1113 = vmatpush1.msra.mxu0 0.0
    %1114 = vmatprep.subr.mxu0 0.0
    %1115 = vmatpush1.msra.mxu0 0.0
    %1116 = vmatprep.subr.mxu0 0.0
    %1117 = vmatpush1.msra.mxu0 0.0
    %1118 = vmatprep.mubr.f32.mxu0 0.0
    %1119 = vmatmul.mubr.f32.gmra.mrb[0].mxu0 %v912
    %v1120 = vpop.f32.mrb[0].mxu0
    %v1121 = vadd.f32 %v778, %v1120
    %v1122 = vpop.f32.mrb[0].mxu0
    %1123 = vdwg.mxu0
    %v1125 = vrot.slane %v981, 7
    %v1128 = vadd.f32 %v437, %v1125
    %v1129 = vadd.f32 %v442, %v981
    %v1130 = vxor.u32 %v1128, 2147483648
    %v1131 = vxor.u32 %v1129, 2147483648
    %v1132 = vmul.f32 %v1130, 1.442695
    %v1133 = vpow.pop %v1132
    %v1134 = vmul.f32 %v1131, 1.442695
    %v1135 = vpow.pop %v1134
    %v1136 = vadd.f32 %v1133, 1.0
    %v1137 = vadd.f32 %v1135, 1.0
    %v1138 = vrcp.pop %v1136
    %v1139 = vmul.f32 1.0, %v1138
    %v1140 = vrcp.pop %v1137
    %v1141 = vmul.f32 1.0, %v1140
    %v1143 = vrot.slane %v1051, 7
    %v1146 = vadd.f32 %v523, %v1143
    %v1147 = vadd.f32 %v528, %v1051
    %v1148 = vxor.u32 %v1146, 2147483648
    %v1149 = vxor.u32 %v1147, 2147483648
    %v1150 = vmul.f32 %v1148, 1.442695
    %v1151 = vpow.pop %v1150
    %v1152 = vmul.f32 %v1149, 1.442695
    %v1153 = vpow.pop %v1152
    %v1154 = vadd.f32 %v1151, 1.0
    %v1155 = vadd.f32 %v1153, 1.0
    %v1156 = vrcp.pop %v1154
    %v1157 = vmul.f32 1.0, %v1156
    %v1158 = vrcp.pop %v1155
    %v1159 = vmul.f32 1.0, %v1158
    %v1161 = vrot.slane %v1121, 7
    %v1164 = vmul.f32 %v1139, %v1161
    %v1165 = vmul.f32 %v1141, %v1121
    %v1166 = vadd.f32 %v609, %v1164
    %v1167 = vadd.f32 %v614, %v1165
    %v1168 = vtanh.pop %v1166
    %v1169 = vtanh.pop %v1167
    %v1170 = vsub.f32 1.0, %v1157
    %v1171 = vsub.f32 1.0, %v1159
    %v1172 = vmul.f32 %v1170, %v1168
    %v1173 = vmul.f32 %v1171, %v1169
    %v1174 = vrot.slane %v902, 7
    %v1177 = vmul.f32 %v1157, %v1174
    %v1178 = vmul.f32 %v1159, %v909
    %v1179 = vadd.f32 %v1172, %v1177
    %v1180 = vadd.f32 %v1173, %v1178
    %vm1181 = vcmask 254977
    %1182 = vst.msk [vmem:[#allocation2] sm:$0x2] %vm1181, %v1179
    %1183 = vst.msk [vmem:[#allocation2 + $0x8] sm:$0x2] %vm1181, %v1180
    %v1186 = vrot.slane %v1179, 1
    %v1187 = vsel %vm910, %v1180, %v1186
    %v1188 = vsel %vm630, %v1187, 0
    %1190 = vmatprep.subr.mxu0 0.0
    %1191 = vmatpush1.msra.mxu0 %v617
    %1192 = vmatprep.subr.mxu0 0.0
    %1193 = vmatpush1.msra.mxu0 %v618
    %1194 = vmatprep.subr.mxu0 0.0
    %1195 = vmatpush1.msra.mxu0 %v619
    %1196 = vmatprep.subr.mxu0 0.0
    %1197 = vmatpush1.msra.mxu0 %v620
    %1198 = vmatprep.subr.mxu0 0.0
    %1199 = vmatpush1.msra.mxu0 0.0
    %1200 = vmatprep.subr.mxu0 0.0
    %1201 = vmatpush1.msra.mxu0 0.0
    %1202 = vmatprep.subr.mxu0 0.0
    %1203 = vmatpush1.msra.mxu0 0.0
    %1204 = vmatprep.subr.mxu0 0.0
    %1205 = vmatpush1.msra.mxu0 0.0
    %1206 = vmatprep.subr.mxu0 0.0
    %1207 = vmatpush1.msra.mxu0 0.0
    %1208 = vmatprep.subr.mxu0 0.0
    %1209 = vmatpush1.msra.mxu0 0.0
    %1210 = vmatprep.subr.mxu0 0.0
    %1211 = vmatpush1.msra.mxu0 0.0
    %1212 = vmatprep.subr.mxu0 0.0
    %1213 = vmatpush1.msra.mxu0 0.0
    %1214 = vmatprep.subr.mxu0 0.0
    %1215 = vmatpush1.msra.mxu0 0.0
    %1216 = vmatprep.subr.mxu0 0.0
    %1217 = vmatpush1.msra.mxu0 0.0
    %1218 = vmatprep.subr.mxu0 0.0
    %1219 = vmatpush1.msra.mxu0 0.0
    %1220 = vmatprep.subr.mxu0 0.0
    %1221 = vmatpush1.msra.mxu0 0.0
    %1222 = vmatprep.subr.mxu0 0.0
    %1223 = vmatpush1.msra.mxu0 0.0
    %1224 = vmatprep.subr.mxu0 0.0
    %1225 = vmatpush1.msra.mxu0 0.0
    %1226 = vmatprep.subr.mxu0 0.0
    %1227 = vmatpush1.msra.mxu0 0.0
    %1228 = vmatprep.subr.mxu0 0.0
    %1229 = vmatpush1.msra.mxu0 0.0
    %1230 = vmatprep.subr.mxu0 0.0
    %1231 = vmatpush1.msra.mxu0 0.0
    %1232 = vmatprep.subr.mxu0 0.0
    %1233 = vmatpush1.msra.mxu0 0.0
    %1234 = vmatprep.subr.mxu0 0.0
    %1235 = vmatpush1.msra.mxu0 0.0
    %1236 = vmatprep.subr.mxu0 0.0
    %1237 = vmatpush1.msra.mxu0 0.0
    %1238 = vmatprep.subr.mxu0 0.0
    %1239 = vmatpush1.msra.mxu0 0.0
    %1240 = vmatprep.subr.mxu0 0.0
    %1241 = vmatpush1.msra.mxu0 0.0
    %1242 = vmatprep.subr.mxu0 0.0
    %1243 = vmatpush1.msra.mxu0 0.0
    %1244 = vmatprep.subr.mxu0 0.0
    %1245 = vmatpush1.msra.mxu0 0.0
    %1246 = vmatprep.subr.mxu0 0.0
    %1247 = vmatpush1.msra.mxu0 0.0
    %1248 = vmatprep.subr.mxu0 0.0
    %1249 = vmatpush1.msra.mxu0 0.0
    %1250 = vmatprep.subr.mxu0 0.0
    %1251 = vmatpush1.msra.mxu0 0.0
    %1252 = vmatprep.subr.mxu0 0.0
    %1253 = vmatpush1.msra.mxu0 0.0
    %1254 = vmatprep.mubr.f32.mxu0 0.0
    %1255 = vmatmul.mubr.f32.gmra.mrb[0].mxu0 %v1188
    %v1256 = vpop.f32.mrb[0].mxu0
    %v1257 = vadd.f32 0.0, %v1256
    %v1258 = vpop.f32.mrb[0].mxu0
    %1259 = vdwg.mxu0
    %1260 = vmatprep.subr.mxu0 0.0
    %1261 = vmatpush1.msra.mxu0 %v621
    %1262 = vmatprep.subr.mxu0 0.0
    %1263 = vmatpush1.msra.mxu0 %v622
    %1264 = vmatprep.subr.mxu0 0.0
    %1265 = vmatpush1.msra.mxu0 %v623
    %1266 = vmatprep.subr.mxu0 0.0
    %1267 = vmatpush1.msra.mxu0 %v624
    %1268 = vmatprep.subr.mxu0 0.0
    %1269 = vmatpush1.msra.mxu0 0.0
    %1270 = vmatprep.subr.mxu0 0.0
    %1271 = vmatpush1.msra.mxu0 0.0
    %1272 = vmatprep.subr.mxu0 0.0
    %1273 = vmatpush1.msra.mxu0 0.0
    %1274 = vmatprep.subr.mxu0 0.0
    %1275 = vmatpush1.msra.mxu0 0.0
    %1276 = vmatprep.subr.mxu0 0.0
    %1277 = vmatpush1.msra.mxu0 0.0
    %1278 = vmatprep.subr.mxu0 0.0
    %1279 = vmatpush1.msra.mxu0 0.0
    %1280 = vmatprep.subr.mxu0 0.0
    %1281 = vmatpush1.msra.mxu0 0.0
    %1282 = vmatprep.subr.mxu0 0.0
    %1283 = vmatpush1.msra.mxu0 0.0
    %1284 = vmatprep.subr.mxu0 0.0
    %1285 = vmatpush1.msra.mxu0 0.0
    %1286 = vmatprep.subr.mxu0 0.0
    %1287 = vmatpush1.msra.mxu0 0.0
    %1288 = vmatprep.subr.mxu0 0.0
    %1289 = vmatpush1.msra.mxu0 0.0
    %1290 = vmatprep.subr.mxu0 0.0
    %1291 = vmatpush1.msra.mxu0 0.0
    %1292 = vmatprep.subr.mxu0 0.0
    %1293 = vmatpush1.msra.mxu0 0.0
    %1294 = vmatprep.subr.mxu0 0.0
    %1295 = vmatpush1.msra.mxu0 0.0
    %1296 = vmatprep.subr.mxu0 0.0
    %1297 = vmatpush1.msra.mxu0 0.0
    %1298 = vmatprep.subr.mxu0 0.0
    %1299 = vmatpush1.msra.mxu0 0.0
    %1300 = vmatprep.subr.mxu0 0.0
    %1301 = vmatpush1.msra.mxu0 0.0
    %1302 = vmatprep.subr.mxu0 0.0
    %1303 = vmatpush1.msra.mxu0 0.0
    %1304 = vmatprep.subr.mxu0 0.0
    %1305 = vmatpush1.msra.mxu0 0.0
    %1306 = vmatprep.subr.mxu0 0.0
    %1307 = vmatpush1.msra.mxu0 0.0
    %1308 = vmatprep.subr.mxu0 0.0
    %1309 = vmatpush1.msra.mxu0 0.0
    %1310 = vmatprep.subr.mxu0 0.0
    %1311 = vmatpush1.msra.mxu0 0.0
    %1312 = vmatprep.subr.mxu0 0.0
    %1313 = vmatpush1.msra.mxu0 0.0
    %1314 = vmatprep.subr.mxu0 0.0
    %1315 = vmatpush1.msra.mxu0 0.0
    %1316 = vmatprep.subr.mxu0 0.0
    %1317 = vmatpush1.msra.mxu0 0.0
    %1318 = vmatprep.subr.mxu0 0.0
    %1319 = vmatpush1.msra.mxu0 0.0
    %1320 = vmatprep.subr.mxu0 0.0
    %1321 = vmatpush1.msra.mxu0 0.0
    %1322 = vmatprep.subr.mxu0 0.0
    %1323 = vmatpush1.msra.mxu0 0.0
    %1324 = vmatprep.mubr.f32.mxu0 0.0
    %1325 = vmatmul.mubr.f32.gmra.mrb[0].mxu0 %v1188
    %v1326 = vpop.f32.mrb[0].mxu0
    %v1327 = vadd.f32 0.0, %v1326
    %v1328 = vpop.f32.mrb[0].mxu0
    %1329 = vdwg.mxu0
    %1330 = vmatprep.subr.mxu0 0.0
    %1331 = vmatpush1.msra.mxu0 %v625
    %1332 = vmatprep.subr.mxu0 0.0
    %1333 = vmatpush1.msra.mxu0 %v626
    %1334 = vmatprep.subr.mxu0 0.0
    %1335 = vmatpush1.msra.mxu0 %v627
    %1336 = vmatprep.subr.mxu0 0.0
    %1337 = vmatpush1.msra.mxu0 %v628
    %1338 = vmatprep.subr.mxu0 0.0
    %1339 = vmatpush1.msra.mxu0 0.0
    %1340 = vmatprep.subr.mxu0 0.0
    %1341 = vmatpush1.msra.mxu0 0.0
    %1342 = vmatprep.subr.mxu0 0.0
    %1343 = vmatpush1.msra.mxu0 0.0
    %1344 = vmatprep.subr.mxu0 0.0
    %1345 = vmatpush1.msra.mxu0 0.0
    %1346 = vmatprep.subr.mxu0 0.0
    %1347 = vmatpush1.msra.mxu0 0.0
    %1348 = vmatprep.subr.mxu0 0.0
    %1349 = vmatpush1.msra.mxu0 0.0
    %1350 = vmatprep.subr.mxu0 0.0
    %1351 = vmatpush1.msra.mxu0 0.0
    %1352 = vmatprep.subr.mxu0 0.0
    %1353 = vmatpush1.msra.mxu0 0.0
    %1354 = vmatprep.subr.mxu0 0.0
    %1355 = vmatpush1.msra.mxu0 0.0
    %1356 = vmatprep.subr.mxu0 0.0
    %1357 = vmatpush1.msra.mxu0 0.0
    %1358 = vmatprep.subr.mxu0 0.0
    %1359 = vmatpush1.msra.mxu0 0.0
    %1360 = vmatprep.subr.mxu0 0.0
    %1361 = vmatpush1.msra.mxu0 0.0
    %1362 = vmatprep.subr.mxu0 0.0
    %1363 = vmatpush1.msra.mxu0 0.0
    %1364 = vmatprep.subr.mxu0 0.0
    %1365 = vmatpush1.msra.mxu0 0.0
    %1366 = vmatprep.subr.mxu0 0.0
    %1367 = vmatpush1.msra.mxu0 0.0
    %1368 = vmatprep.subr.mxu0 0.0
    %1369 = vmatpush1.msra.mxu0 0.0
    %1370 = vmatprep.subr.mxu0 0.0
    %1371 = vmatpush1.msra.mxu0 0.0
    %1372 = vmatprep.subr.mxu0 0.0
    %1373 = vmatpush1.msra.mxu0 0.0
    %1374 = vmatprep.subr.mxu0 0.0
    %1375 = vmatpush1.msra.mxu0 0.0
    %1376 = vmatprep.subr.mxu0 0.0
    %1377 = vmatpush1.msra.mxu0 0.0
    %1378 = vmatprep.subr.mxu0 0.0
    %1379 = vmatpush1.msra.mxu0 0.0
    %1380 = vmatprep.subr.mxu0 0.0
    %1381 = vmatpush1.msra.mxu0 0.0
    %1382 = vmatprep.subr.mxu0 0.0
    %1383 = vmatpush1.msra.mxu0 0.0
    %1384 = vmatprep.subr.mxu0 0.0
    %1385 = vmatpush1.msra.mxu0 0.0
    %1386 = vmatprep.subr.mxu0 0.0
    %1387 = vmatpush1.msra.mxu0 0.0
    %1388 = vmatprep.subr.mxu0 0.0
    %1389 = vmatpush1.msra.mxu0 0.0
    %1390 = vmatprep.subr.mxu0 0.0
    %1391 = vmatpush1.msra.mxu0 0.0
    %1392 = vmatprep.subr.mxu0 0.0
    %1393 = vmatpush1.msra.mxu0 0.0
    %1394 = vmatprep.mubr.f32.mxu0 0.0
    %1395 = vmatmul.mubr.f32.gmra.mrb[0].mxu0 %v1188
    %v1396 = vpop.f32.mrb[0].mxu0
    %v1397 = vadd.f32 %v778, %v1396
    %v1398 = vpop.f32.mrb[0].mxu0
    %1399 = vdwg.mxu0
    %v1401 = vrot.slane %v1257, 6
    %v1402 = vrot.slane %v1257, 7
    %v1405 = vadd.f32 %v437, %v1401
    %v1406 = vadd.f32 %v442, %v1402
    %v1407 = vxor.u32 %v1405, 2147483648
    %v1408 = vxor.u32 %v1406, 2147483648
    %v1409 = vmul.f32 %v1407, 1.442695
    %v1410 = vpow.pop %v1409
    %v1411 = vmul.f32 %v1408, 1.442695
    %v1412 = vpow.pop %v1411
    %v1413 = vadd.f32 %v1410, 1.0
    %v1414 = vadd.f32 %v1412, 1.0
    %v1415 = vrcp.pop %v1413
    %v1416 = vmul.f32 1.0, %v1415
    %v1417 = vrcp.pop %v1414
    %v1418 = vmul.f32 1.0, %v1417
    %v1420 = vrot.slane %v1327, 6
    %v1421 = vrot.slane %v1327, 7
    %v1424 = vadd.f32 %v523, %v1420
    %v1425 = vadd.f32 %v528, %v1421
    %v1426 = vxor.u32 %v1424, 2147483648
    %v1427 = vxor.u32 %v1425, 2147483648
    %v1428 = vmul.f32 %v1426, 1.442695
    %v1429 = vpow.pop %v1428
    %v1430 = vmul.f32 %v1427, 1.442695
    %v1431 = vpow.pop %v1430
    %v1432 = vadd.f32 %v1429, 1.0
    %v1433 = vadd.f32 %v1431, 1.0
    %v1434 = vrcp.pop %v1432
    %v1435 = vmul.f32 1.0, %v1434
    %v1436 = vrcp.pop %v1433
    %v1437 = vmul.f32 1.0, %v1436
    %v1439 = vrot.slane %v1397, 6
    %v1440 = vrot.slane %v1397, 7
    %v1443 = vmul.f32 %v1416, %v1439
    %v1444 = vmul.f32 %v1418, %v1440
    %v1445 = vadd.f32 %v609, %v1443
    %v1446 = vadd.f32 %v614, %v1444
    %v1447 = vtanh.pop %v1445
    %v1448 = vtanh.pop %v1446
    %v1449 = vsub.f32 1.0, %v1435
    %v1450 = vsub.f32 1.0, %v1437
    %v1451 = vmul.f32 %v1449, %v1447
    %v1452 = vmul.f32 %v1450, %v1448
    %v1453 = vrot.slane %v1179, 7
    %v1454 = vrot.slane %v1180, 7
    %v1457 = vmul.f32 %v1435, %v1453
    %v1458 = vmul.f32 %v1437, %v1454
    %v1459 = vadd.f32 %v1451, %v1457
    %v1460 = vadd.f32 %v1452, %v1458
    %vm1461 = vcmask 256002
    %1462 = vst.msk [vmem:[#allocation2] sm:$0x4] %vm1461, %v1459
    %1463 = vst.msk [vmem:[#allocation2 + $0x8] sm:$0x4] %vm1461, %v1460
    %v1466 = vrot.slane %v1459, 2
    %v1467 = vrot.slane %v1460, 1
    %v1468 = vsel %vm910, %v1467, %v1466
    %v1469 = vsel %vm630, %v1468, 0
    %1471 = vmatprep.subr.mxu0 0.0
    %1472 = vmatpush1.msra.mxu0 %v617
    %1473 = vmatprep.subr.mxu0 0.0
    %1474 = vmatpush1.msra.mxu0 %v618
    %1475 = vmatprep.subr.mxu0 0.0
    %1476 = vmatpush1.msra.mxu0 %v619
    %1477 = vmatprep.subr.mxu0 0.0
    %1478 = vmatpush1.msra.mxu0 %v620
    %1479 = vmatprep.subr.mxu0 0.0
    %1480 = vmatpush1.msra.mxu0 0.0
    %1481 = vmatprep.subr.mxu0 0.0
    %1482 = vmatpush1.msra.mxu0 0.0
    %1483 = vmatprep.subr.mxu0 0.0
    %1484 = vmatpush1.msra.mxu0 0.0
    %1485 = vmatprep.subr.mxu0 0.0
    %1486 = vmatpush1.msra.mxu0 0.0
    %1487 = vmatprep.subr.mxu0 0.0
    %1488 = vmatpush1.msra.mxu0 0.0
    %1489 = vmatprep.subr.mxu0 0.0
    %1490 = vmatpush1.msra.mxu0 0.0
    %1491 = vmatprep.subr.mxu0 0.0
    %1492 = vmatpush1.msra.mxu0 0.0
    %1493 = vmatprep.subr.mxu0 0.0
    %1494 = vmatpush1.msra.mxu0 0.0
    %1495 = vmatprep.subr.mxu0 0.0
    %1496 = vmatpush1.msra.mxu0 0.0
    %1497 = vmatprep.subr.mxu0 0.0
    %1498 = vmatpush1.msra.mxu0 0.0
    %1499 = vmatprep.subr.mxu0 0.0
    %1500 = vmatpush1.msra.mxu0 0.0
    %1501 = vmatprep.subr.mxu0 0.0
    %1502 = vmatpush1.msra.mxu0 0.0
    %1503 = vmatprep.subr.mxu0 0.0
    %1504 = vmatpush1.msra.mxu0 0.0
    %1505 = vmatprep.subr.mxu0 0.0
    %1506 = vmatpush1.msra.mxu0 0.0
    %1507 = vmatprep.subr.mxu0 0.0
    %1508 = vmatpush1.msra.mxu0 0.0
    %1509 = vmatprep.subr.mxu0 0.0
    %1510 = vmatpush1.msra.mxu0 0.0
    %1511 = vmatprep.subr.mxu0 0.0
    %1512 = vmatpush1.msra.mxu0 0.0
    %1513 = vmatprep.subr.mxu0 0.0
    %1514 = vmatpush1.msra.mxu0 0.0
    %1515 = vmatprep.subr.mxu0 0.0
    %1516 = vmatpush1.msra.mxu0 0.0
    %1517 = vmatprep.subr.mxu0 0.0
    %1518 = vmatpush1.msra.mxu0 0.0
    %1519 = vmatprep.subr.mxu0 0.0
    %1520 = vmatpush1.msra.mxu0 0.0
    %1521 = vmatprep.subr.mxu0 0.0
    %1522 = vmatpush1.msra.mxu0 0.0
    %1523 = vmatprep.subr.mxu0 0.0
    %1524 = vmatpush1.msra.mxu0 0.0
    %1525 = vmatprep.subr.mxu0 0.0
    %1526 = vmatpush1.msra.mxu0 0.0
    %1527 = vmatprep.subr.mxu0 0.0
    %1528 = vmatpush1.msra.mxu0 0.0
    %1529 = vmatprep.subr.mxu0 0.0
    %1530 = vmatpush1.msra.mxu0 0.0
    %1531 = vmatprep.subr.mxu0 0.0
    %1532 = vmatpush1.msra.mxu0 0.0
    %1533 = vmatprep.subr.mxu0 0.0
    %1534 = vmatpush1.msra.mxu0 0.0
    %1535 = vmatprep.mubr.f32.mxu0 0.0
    %1536 = vmatmul.mubr.f32.gmra.mrb[0].mxu0 %v1469
    %v1537 = vpop.f32.mrb[0].mxu0
    %v1538 = vadd.f32 0.0, %v1537
    %v1539 = vpop.f32.mrb[0].mxu0
    %1540 = vdwg.mxu0
    %1541 = vmatprep.subr.mxu0 0.0
    %1542 = vmatpush1.msra.mxu0 %v621
    %1543 = vmatprep.subr.mxu0 0.0
    %1544 = vmatpush1.msra.mxu0 %v622
    %1545 = vmatprep.subr.mxu0 0.0
    %1546 = vmatpush1.msra.mxu0 %v623
    %1547 = vmatprep.subr.mxu0 0.0
    %1548 = vmatpush1.msra.mxu0 %v624
    %1549 = vmatprep.subr.mxu0 0.0
    %1550 = vmatpush1.msra.mxu0 0.0
    %1551 = vmatprep.subr.mxu0 0.0
    %1552 = vmatpush1.msra.mxu0 0.0
    %1553 = vmatprep.subr.mxu0 0.0
    %1554 = vmatpush1.msra.mxu0 0.0
    %1555 = vmatprep.subr.mxu0 0.0
    %1556 = vmatpush1.msra.mxu0 0.0
    %1557 = vmatprep.subr.mxu0 0.0
    %1558 = vmatpush1.msra.mxu0 0.0
    %1559 = vmatprep.subr.mxu0 0.0
    %1560 = vmatpush1.msra.mxu0 0.0
    %1561 = vmatprep.subr.mxu0 0.0
    %1562 = vmatpush1.msra.mxu0 0.0
    %1563 = vmatprep.subr.mxu0 0.0
    %1564 = vmatpush1.msra.mxu0 0.0
    %1565 = vmatprep.subr.mxu0 0.0
    %1566 = vmatpush1.msra.mxu0 0.0
    %1567 = vmatprep.subr.mxu0 0.0
    %1568 = vmatpush1.msra.mxu0 0.0
    %1569 = vmatprep.subr.mxu0 0.0
    %1570 = vmatpush1.msra.mxu0 0.0
    %1571 = vmatprep.subr.mxu0 0.0
    %1572 = vmatpush1.msra.mxu0 0.0
    %1573 = vmatprep.subr.mxu0 0.0
    %1574 = vmatpush1.msra.mxu0 0.0
    %1575 = vmatprep.subr.mxu0 0.0
    %1576 = vmatpush1.msra.mxu0 0.0
    %1577 = vmatprep.subr.mxu0 0.0
    %1578 = vmatpush1.msra.mxu0 0.0
    %1579 = vmatprep.subr.mxu0 0.0
    %1580 = vmatpush1.msra.mxu0 0.0
    %1581 = vmatprep.subr.mxu0 0.0
    %1582 = vmatpush1.msra.mxu0 0.0
    %1583 = vmatprep.subr.mxu0 0.0
    %1584 = vmatpush1.msra.mxu0 0.0
    %1585 = vmatprep.subr.mxu0 0.0
    %1586 = vmatpush1.msra.mxu0 0.0
    %1587 = vmatprep.subr.mxu0 0.0
    %1588 = vmatpush1.msra.mxu0 0.0
    %1589 = vmatprep.subr.mxu0 0.0
    %1590 = vmatpush1.msra.mxu0 0.0
    %1591 = vmatprep.subr.mxu0 0.0
    %1592 = vmatpush1.msra.mxu0 0.0
    %1593 = vmatprep.subr.mxu0 0.0
    %1594 = vmatpush1.msra.mxu0 0.0
    %1595 = vmatprep.subr.mxu0 0.0
    %1596 = vmatpush1.msra.mxu0 0.0
    %1597 = vmatprep.subr.mxu0 0.0
    %1598 = vmatpush1.msra.mxu0 0.0
    %1599 = vmatprep.subr.mxu0 0.0
    %1600 = vmatpush1.msra.mxu0 0.0
    %1601 = vmatprep.subr.mxu0 0.0
    %1602 = vmatpush1.msra.mxu0 0.0
    %1603 = vmatprep.subr.mxu0 0.0
    %1604 = vmatpush1.msra.mxu0 0.0
    %1605 = vmatprep.mubr.f32.mxu0 0.0
    %1606 = vmatmul.mubr.f32.gmra.mrb[0].mxu0 %v1469
    %v1607 = vpop.f32.mrb[0].mxu0
    %v1608 = vadd.f32 0.0, %v1607
    %v1609 = vpop.f32.mrb[0].mxu0
    %1610 = vdwg.mxu0
    %1611 = vmatprep.subr.mxu0 0.0
    %1612 = vmatpush1.msra.mxu0 %v625
    %1613 = vmatprep.subr.mxu0 0.0
    %1614 = vmatpush1.msra.mxu0 %v626
    %1615 = vmatprep.subr.mxu0 0.0
    %1616 = vmatpush1.msra.mxu0 %v627
    %1617 = vmatprep.subr.mxu0 0.0
    %1618 = vmatpush1.msra.mxu0 %v628
    %1619 = vmatprep.subr.mxu0 0.0
    %1620 = vmatpush1.msra.mxu0 0.0
    %1621 = vmatprep.subr.mxu0 0.0
    %1622 = vmatpush1.msra.mxu0 0.0
    %1623 = vmatprep.subr.mxu0 0.0
    %1624 = vmatpush1.msra.mxu0 0.0
    %1625 = vmatprep.subr.mxu0 0.0
    %1626 = vmatpush1.msra.mxu0 0.0
    %1627 = vmatprep.subr.mxu0 0.0
    %1628 = vmatpush1.msra.mxu0 0.0
    %1629 = vmatprep.subr.mxu0 0.0
    %1630 = vmatpush1.msra.mxu0 0.0
    %1631 = vmatprep.subr.mxu0 0.0
    %1632 = vmatpush1.msra.mxu0 0.0
    %1633 = vmatprep.subr.mxu0 0.0
    %1634 = vmatpush1.msra.mxu0 0.0
    %1635 = vmatprep.subr.mxu0 0.0
    %1636 = vmatpush1.msra.mxu0 0.0
    %1637 = vmatprep.subr.mxu0 0.0
    %1638 = vmatpush1.msra.mxu0 0.0
    %1639 = vmatprep.subr.mxu0 0.0
    %1640 = vmatpush1.msra.mxu0 0.0
    %1641 = vmatprep.subr.mxu0 0.0
    %1642 = vmatpush1.msra.mxu0 0.0
    %1643 = vmatprep.subr.mxu0 0.0
    %1644 = vmatpush1.msra.mxu0 0.0
    %1645 = vmatprep.subr.mxu0 0.0
    %1646 = vmatpush1.msra.mxu0 0.0
    %1647 = vmatprep.subr.mxu0 0.0
    %1648 = vmatpush1.msra.mxu0 0.0
    %1649 = vmatprep.subr.mxu0 0.0
    %1650 = vmatpush1.msra.mxu0 0.0
    %1651 = vmatprep.subr.mxu0 0.0
    %1652 = vmatpush1.msra.mxu0 0.0
    %1653 = vmatprep.subr.mxu0 0.0
    %1654 = vmatpush1.msra.mxu0 0.0
    %1655 = vmatprep.subr.mxu0 0.0
    %1656 = vmatpush1.msra.mxu0 0.0
    %1657 = vmatprep.subr.mxu0 0.0
    %1658 = vmatpush1.msra.mxu0 0.0
    %1659 = vmatprep.subr.mxu0 0.0
    %1660 = vmatpush1.msra.mxu0 0.0
    %1661 = vmatprep.subr.mxu0 0.0
    %1662 = vmatpush1.msra.mxu0 0.0
    %1663 = vmatprep.subr.mxu0 0.0
    %1664 = vmatpush1.msra.mxu0 0.0
    %1665 = vmatprep.subr.mxu0 0.0
    %1666 = vmatpush1.msra.mxu0 0.0
    %1667 = vmatprep.subr.mxu0 0.0
    %1668 = vmatpush1.msra.mxu0 0.0
    %1669 = vmatprep.subr.mxu0 0.0
    %1670 = vmatpush1.msra.mxu0 0.0
    %1671 = vmatprep.subr.mxu0 0.0
    %1672 = vmatpush1.msra.mxu0 0.0
    %1673 = vmatprep.subr.mxu0 0.0
    %1674 = vmatpush1.msra.mxu0 0.0
    %1675 = vmatprep.mubr.f32.mxu0 0.0
    %1676 = vmatmul.mubr.f32.gmra.mrb[0].mxu0 %v1469
    %v1677 = vpop.f32.mrb[0].mxu0
    %v1678 = vadd.f32 %v778, %v1677
    %v1679 = vpop.f32.mrb[0].mxu0
    %1680 = vdwg.mxu0
    %v1682 = vrot.slane %v1538, 5
    %v1683 = vrot.slane %v1538, 6
    %v1686 = vadd.f32 %v437, %v1682
    %v1687 = vadd.f32 %v442, %v1683
    %v1688 = vxor.u32 %v1686, 2147483648
    %v1689 = vxor.u32 %v1687, 2147483648
    %v1690 = vmul.f32 %v1688, 1.442695
    %v1691 = vpow.pop %v1690
    %v1692 = vmul.f32 %v1689, 1.442695
    %v1693 = vpow.pop %v1692
    %v1694 = vadd.f32 %v1691, 1.0
    %v1695 = vadd.f32 %v1693, 1.0
    %v1696 = vrcp.pop %v1694
    %v1697 = vmul.f32 1.0, %v1696
    %v1698 = vrcp.pop %v1695
    %v1699 = vmul.f32 1.0, %v1698
    %v1701 = vrot.slane %v1608, 5
    %v1702 = vrot.slane %v1608, 6
    %v1705 = vadd.f32 %v523, %v1701
    %v1706 = vadd.f32 %v528, %v1702
    %v1707 = vxor.u32 %v1705, 2147483648
    %v1708 = vxor.u32 %v1706, 2147483648
    %v1709 = vmul.f32 %v1707, 1.442695
    %v1710 = vpow.pop %v1709
    %v1711 = vmul.f32 %v1708, 1.442695
    %v1712 = vpow.pop %v1711
    %v1713 = vadd.f32 %v1710, 1.0
    %v1714 = vadd.f32 %v1712, 1.0
    %v1715 = vrcp.pop %v1713
    %v1716 = vmul.f32 1.0, %v1715
    %v1717 = vrcp.pop %v1714
    %v1718 = vmul.f32 1.0, %v1717
    %v1720 = vrot.slane %v1678, 5
    %v1721 = vrot.slane %v1678, 6
    %v1724 = vmul.f32 %v1697, %v1720
    %v1725 = vmul.f32 %v1699, %v1721
    %v1726 = vadd.f32 %v609, %v1724
    %v1727 = vadd.f32 %v614, %v1725
    %v1728 = vtanh.pop %v1726
    %v1729 = vtanh.pop %v1727
    %v1730 = vsub.f32 1.0, %v1716
    %v1731 = vsub.f32 1.0, %v1718
    %v1732 = vmul.f32 %v1730, %v1728
    %v1733 = vmul.f32 %v1731, %v1729
    %v1734 = vrot.slane %v1459, 7
    %v1735 = vrot.slane %v1460, 7
    %v1738 = vmul.f32 %v1716, %v1734
    %v1739 = vmul.f32 %v1718, %v1735
    %v1740 = vadd.f32 %v1732, %v1738
    %v1741 = vadd.f32 %v1733, %v1739
    %vm1742 = vcmask 257027
    %1743 = vst.msk [vmem:[#allocation2] sm:$0x8] %vm1742, %v1740
    %1744 = vst.msk [vmem:[#allocation2 + $0x8] sm:$0x8] %vm1742, %v1741
    %v1747 = vrot.slane %v1740, 3
    %v1748 = vrot.slane %v1741, 2
    %v1749 = vsel %vm910, %v1748, %v1747
    %v1750 = vsel %vm630, %v1749, 0
    %1752 = vmatprep.subr.mxu0 0.0
    %1753 = vmatpush1.msra.mxu0 %v617
    %1754 = vmatprep.subr.mxu0 0.0
    %1755 = vmatpush1.msra.mxu0 %v618
    %1756 = vmatprep.subr.mxu0 0.0
    %1757 = vmatpush1.msra.mxu0 %v619
    %1758 = vmatprep.subr.mxu0 0.0
    %1759 = vmatpush1.msra.mxu0 %v620
    %1760 = vmatprep.subr.mxu0 0.0
    %1761 = vmatpush1.msra.mxu0 0.0
    %1762 = vmatprep.subr.mxu0 0.0
    %1763 = vmatpush1.msra.mxu0 0.0
    %1764 = vmatprep.subr.mxu0 0.0
    %1765 = vmatpush1.msra.mxu0 0.0
    %1766 = vmatprep.subr.mxu0 0.0
    %1767 = vmatpush1.msra.mxu0 0.0
    %1768 = vmatprep.subr.mxu0 0.0
    %1769 = vmatpush1.msra.mxu0 0.0
    %1770 = vmatprep.subr.mxu0 0.0
    %1771 = vmatpush1.msra.mxu0 0.0
    %1772 = vmatprep.subr.mxu0 0.0
    %1773 = vmatpush1.msra.mxu0 0.0
    %1774 = vmatprep.subr.mxu0 0.0
    %1775 = vmatpush1.msra.mxu0 0.0
    %1776 = vmatprep.subr.mxu0 0.0
    %1777 = vmatpush1.msra.mxu0 0.0
    %1778 = vmatprep.subr.mxu0 0.0
    %1779 = vmatpush1.msra.mxu0 0.0
    %1780 = vmatprep.subr.mxu0 0.0
    %1781 = vmatpush1.msra.mxu0 0.0
    %1782 = vmatprep.subr.mxu0 0.0
    %1783 = vmatpush1.msra.mxu0 0.0
    %1784 = vmatprep.subr.mxu0 0.0
    %1785 = vmatpush1.msra.mxu0 0.0
    %1786 = vmatprep.subr.mxu0 0.0
    %1787 = vmatpush1.msra.mxu0 0.0
    %1788 = vmatprep.subr.mxu0 0.0
    %1789 = vmatpush1.msra.mxu0 0.0
    %1790 = vmatprep.subr.mxu0 0.0
    %1791 = vmatpush1.msra.mxu0 0.0
    %1792 = vmatprep.subr.mxu0 0.0
    %1793 = vmatpush1.msra.mxu0 0.0
    %1794 = vmatprep.subr.mxu0 0.0
    %1795 = vmatpush1.msra.mxu0 0.0
    %1796 = vmatprep.subr.mxu0 0.0
    %1797 = vmatpush1.msra.mxu0 0.0
    %1798 = vmatprep.subr.mxu0 0.0
    %1799 = vmatpush1.msra.mxu0 0.0
    %1800 = vmatprep.subr.mxu0 0.0
    %1801 = vmatpush1.msra.mxu0 0.0
    %1802 = vmatprep.subr.mxu0 0.0
    %1803 = vmatpush1.msra.mxu0 0.0
    %1804 = vmatprep.subr.mxu0 0.0
    %1805 = vmatpush1.msra.mxu0 0.0
    %1806 = vmatprep.subr.mxu0 0.0
    %1807 = vmatpush1.msra.mxu0 0.0
    %1808 = vmatprep.subr.mxu0 0.0
    %1809 = vmatpush1.msra.mxu0 0.0
    %1810 = vmatprep.subr.mxu0 0.0
    %1811 = vmatpush1.msra.mxu0 0.0
    %1812 = vmatprep.subr.mxu0 0.0
    %1813 = vmatpush1.msra.mxu0 0.0
    %1814 = vmatprep.subr.mxu0 0.0
    %1815 = vmatpush1.msra.mxu0 0.0
    %1816 = vmatprep.mubr.f32.mxu0 0.0
    %1817 = vmatmul.mubr.f32.gmra.mrb[0].mxu0 %v1750
    %v1818 = vpop.f32.mrb[0].mxu0
    %v1819 = vadd.f32 0.0, %v1818
    %v1820 = vpop.f32.mrb[0].mxu0
    %1821 = vdwg.mxu0
    %1822 = vmatprep.subr.mxu0 0.0
    %1823 = vmatpush1.msra.mxu0 %v621
    %1824 = vmatprep.subr.mxu0 0.0
    %1825 = vmatpush1.msra.mxu0 %v622
    %1826 = vmatprep.subr.mxu0 0.0
    %1827 = vmatpush1.msra.mxu0 %v623
    %1828 = vmatprep.subr.mxu0 0.0
    %1829 = vmatpush1.msra.mxu0 %v624
    %1830 = vmatprep.subr.mxu0 0.0
    %1831 = vmatpush1.msra.mxu0 0.0
    %1832 = vmatprep.subr.mxu0 0.0
    %1833 = vmatpush1.msra.mxu0 0.0
    %1834 = vmatprep.subr.mxu0 0.0
    %1835 = vmatpush1.msra.mxu0 0.0
    %1836 = vmatprep.subr.mxu0 0.0
    %1837 = vmatpush1.msra.mxu0 0.0
    %1838 = vmatprep.subr.mxu0 0.0
    %1839 = vmatpush1.msra.mxu0 0.0
    %1840 = vmatprep.subr.mxu0 0.0
    %1841 = vmatpush1.msra.mxu0 0.0
    %1842 = vmatprep.subr.mxu0 0.0
    %1843 = vmatpush1.msra.mxu0 0.0
    %1844 = vmatprep.subr.mxu0 0.0
    %1845 = vmatpush1.msra.mxu0 0.0
    %1846 = vmatprep.subr.mxu0 0.0
    %1847 = vmatpush1.msra.mxu0 0.0
    %1848 = vmatprep.subr.mxu0 0.0
    %1849 = vmatpush1.msra.mxu0 0.0
    %1850 = vmatprep.subr.mxu0 0.0
    %1851 = vmatpush1.msra.mxu0 0.0
    %1852 = vmatprep.subr.mxu0 0.0
    %1853 = vmatpush1.msra.mxu0 0.0
    %1854 = vmatprep.subr.mxu0 0.0
    %1855 = vmatpush1.msra.mxu0 0.0
    %1856 = vmatprep.subr.mxu0 0.0
    %1857 = vmatpush1.msra.mxu0 0.0
    %1858 = vmatprep.subr.mxu0 0.0
    %1859 = vmatpush1.msra.mxu0 0.0
    %1860 = vmatprep.subr.mxu0 0.0
    %1861 = vmatpush1.msra.mxu0 0.0
    %1862 = vmatprep.subr.mxu0 0.0
    %1863 = vmatpush1.msra.mxu0 0.0
    %1864 = vmatprep.subr.mxu0 0.0
    %1865 = vmatpush1.msra.mxu0 0.0
    %1866 = vmatprep.subr.mxu0 0.0
    %1867 = vmatpush1.msra.mxu0 0.0
    %1868 = vmatprep.subr.mxu0 0.0
    %1869 = vmatpush1.msra.mxu0 0.0
    %1870 = vmatprep.subr.mxu0 0.0
    %1871 = vmatpush1.msra.mxu0 0.0
    %1872 = vmatprep.subr.mxu0 0.0
    %1873 = vmatpush1.msra.mxu0 0.0
    %1874 = vmatprep.subr.mxu0 0.0
    %1875 = vmatpush1.msra.mxu0 0.0
    %1876 = vmatprep.subr.mxu0 0.0
    %1877 = vmatpush1.msra.mxu0 0.0
    %1878 = vmatprep.subr.mxu0 0.0
    %1879 = vmatpush1.msra.mxu0 0.0
    %1880 = vmatprep.subr.mxu0 0.0
    %1881 = vmatpush1.msra.mxu0 0.0
    %1882 = vmatprep.subr.mxu0 0.0
    %1883 = vmatpush1.msra.mxu0 0.0
    %1884 = vmatprep.subr.mxu0 0.0
    %1885 = vmatpush1.msra.mxu0 0.0
    %1886 = vmatprep.mubr.f32.mxu0 0.0
    %1887 = vmatmul.mubr.f32.gmra.mrb[0].mxu0 %v1750
    %v1888 = vpop.f32.mrb[0].mxu0
    %v1889 = vadd.f32 0.0, %v1888
    %v1890 = vpop.f32.mrb[0].mxu0
    %1891 = vdwg.mxu0
    %1892 = vmatprep.subr.mxu0 0.0
    %1893 = vmatpush1.msra.mxu0 %v625
    %1894 = vmatprep.subr.mxu0 0.0
    %1895 = vmatpush1.msra.mxu0 %v626
    %1896 = vmatprep.subr.mxu0 0.0
    %1897 = vmatpush1.msra.mxu0 %v627
    %1898 = vmatprep.subr.mxu0 0.0
    %1899 = vmatpush1.msra.mxu0 %v628
    %1900 = vmatprep.subr.mxu0 0.0
    %1901 = vmatpush1.msra.mxu0 0.0
    %1902 = vmatprep.subr.mxu0 0.0
    %1903 = vmatpush1.msra.mxu0 0.0
    %1904 = vmatprep.subr.mxu0 0.0
    %1905 = vmatpush1.msra.mxu0 0.0
    %1906 = vmatprep.subr.mxu0 0.0
    %1907 = vmatpush1.msra.mxu0 0.0
    %1908 = vmatprep.subr.mxu0 0.0
    %1909 = vmatpush1.msra.mxu0 0.0
    %1910 = vmatprep.subr.mxu0 0.0
    %1911 = vmatpush1.msra.mxu0 0.0
    %1912 = vmatprep.subr.mxu0 0.0
    %1913 = vmatpush1.msra.mxu0 0.0
    %1914 = vmatprep.subr.mxu0 0.0
    %1915 = vmatpush1.msra.mxu0 0.0
    %1916 = vmatprep.subr.mxu0 0.0
    %1917 = vmatpush1.msra.mxu0 0.0
    %1918 = vmatprep.subr.mxu0 0.0
    %1919 = vmatpush1.msra.mxu0 0.0
    %1920 = vmatprep.subr.mxu0 0.0
    %1921 = vmatpush1.msra.mxu0 0.0
    %1922 = vmatprep.subr.mxu0 0.0
    %1923 = vmatpush1.msra.mxu0 0.0
    %1924 = vmatprep.subr.mxu0 0.0
    %1925 = vmatpush1.msra.mxu0 0.0
    %1926 = vmatprep.subr.mxu0 0.0
    %1927 = vmatpush1.msra.mxu0 0.0
    %1928 = vmatprep.subr.mxu0 0.0
    %1929 = vmatpush1.msra.mxu0 0.0
    %1930 = vmatprep.subr.mxu0 0.0
    %1931 = vmatpush1.msra.mxu0 0.0
    %1932 = vmatprep.subr.mxu0 0.0
    %1933 = vmatpush1.msra.mxu0 0.0
    %1934 = vmatprep.subr.mxu0 0.0
    %1935 = vmatpush1.msra.mxu0 0.0
    %1936 = vmatprep.subr.mxu0 0.0
    %1937 = vmatpush1.msra.mxu0 0.0
    %1938 = vmatprep.subr.mxu0 0.0
    %1939 = vmatpush1.msra.mxu0 0.0
    %1940 = vmatprep.subr.mxu0 0.0
    %1941 = vmatpush1.msra.mxu0 0.0
    %1942 = vmatprep.subr.mxu0 0.0
    %1943 = vmatpush1.msra.mxu0 0.0
    %1944 = vmatprep.subr.mxu0 0.0
    %1945 = vmatpush1.msra.mxu0 0.0
    %1946 = vmatprep.subr.mxu0 0.0
    %1947 = vmatpush1.msra.mxu0 0.0
    %1948 = vmatprep.subr.mxu0 0.0
    %1949 = vmatpush1.msra.mxu0 0.0
    %1950 = vmatprep.subr.mxu0 0.0
    %1951 = vmatpush1.msra.mxu0 0.0
    %1952 = vmatprep.subr.mxu0 0.0
    %1953 = vmatpush1.msra.mxu0 0.0
    %1954 = vmatprep.subr.mxu0 0.0
    %1955 = vmatpush1.msra.mxu0 0.0
    %1956 = vmatprep.mubr.f32.mxu0 0.0
    %1957 = vmatmul.mubr.f32.gmra.mrb[0].mxu0 %v1750
    %v1958 = vpop.f32.mrb[0].mxu0
    %v1959 = vadd.f32 %v778, %v1958
    %v1960 = vpop.f32.mrb[0].mxu0
    %1961 = vdwg.mxu0
    %v1963 = vrot.slane %v1819, 4
    %v1964 = vrot.slane %v1819, 5
    %v1967 = vadd.f32 %v437, %v1963
    %v1968 = vadd.f32 %v442, %v1964
    %v1969 = vxor.u32 %v1967, 2147483648
    %v1970 = vxor.u32 %v1968, 2147483648
    %v1971 = vmul.f32 %v1969, 1.442695
    %v1972 = vpow.pop %v1971
    %v1973 = vmul.f32 %v1970, 1.442695
    %v1974 = vpow.pop %v1973
    %v1975 = vadd.f32 %v1972, 1.0
    %v1976 = vadd.f32 %v1974, 1.0
    %v1977 = vrcp.pop %v1975
    %v1978 = vmul.f32 1.0, %v1977
    %v1979 = vrcp.pop %v1976
    %v1980 = vmul.f32 1.0, %v1979
    %v1982 = vrot.slane %v1889, 4
    %v1983 = vrot.slane %v1889, 5
    %v1986 = vadd.f32 %v523, %v1982
    %v1987 = vadd.f32 %v528, %v1983
    %v1988 = vxor.u32 %v1986, 2147483648
    %v1989 = vxor.u32 %v1987, 2147483648
    %v1990 = vmul.f32 %v1988, 1.442695
    %v1991 = vpow.pop %v1990
    %v1992 = vmul.f32 %v1989, 1.442695
    %v1993 = vpow.pop %v1992
    %v1994 = vadd.f32 %v1991, 1.0
    %v1995 = vadd.f32 %v1993, 1.0
    %v1996 = vrcp.pop %v1994
    %v1997 = vmul.f32 1.0, %v1996
    %v1998 = vrcp.pop %v1995
    %v1999 = vmul.f32 1.0, %v1998
    %v2001 = vrot.slane %v1959, 4
    %v2002 = vrot.slane %v1959, 5
    %v2005 = vmul.f32 %v1978, %v2001
    %v2006 = vmul.f32 %v1980, %v2002
    %v2007 = vadd.f32 %v609, %v2005
    %v2008 = vadd.f32 %v614, %v2006
    %v2009 = vtanh.pop %v2007
    %v2010 = vtanh.pop %v2008
    %v2011 = vsub.f32 1.0, %v1997
    %v2012 = vsub.f32 1.0, %v1999
    %v2013 = vmul.f32 %v2011, %v2009
    %v2014 = vmul.f32 %v2012, %v2010
    %v2015 = vrot.slane %v1740, 7
    %v2016 = vrot.slane %v1741, 7
    %v2019 = vmul.f32 %v1997, %v2015
    %v2020 = vmul.f32 %v1999, %v2016
    %v2021 = vadd.f32 %v2013, %v2019
    %v2022 = vadd.f32 %v2014, %v2020
    %vm2023 = vcmask 258052
    %2024 = vst.msk [vmem:[#allocation2] sm:$0x10] %vm2023, %v2021
    %2025 = vst.msk [vmem:[#allocation2 + $0x8] sm:$0x10] %vm2023, %v2022
    %v2028 = vrot.slane %v2021, 4
    %v2029 = vrot.slane %v2022, 3
    %v2030 = vsel %vm910, %v2029, %v2028
    %v2031 = vsel %vm630, %v2030, 0
    %2033 = vmatprep.subr.mxu0 0.0
    %2034 = vmatpush1.msra.mxu0 %v617
    %2035 = vmatprep.subr.mxu0 0.0
    %2036 = vmatpush1.msra.mxu0 %v618
    %2037 = vmatprep.subr.mxu0 0.0
    %2038 = vmatpush1.msra.mxu0 %v619
    %2039 = vmatprep.subr.mxu0 0.0
    %2040 = vmatpush1.msra.mxu0 %v620
    %2041 = vmatprep.subr.mxu0 0.0
    %2042 = vmatpush1.msra.mxu0 0.0
    %2043 = vmatprep.subr.mxu0 0.0
    %2044 = vmatpush1.msra.mxu0 0.0
    %2045 = vmatprep.subr.mxu0 0.0
    %2046 = vmatpush1.msra.mxu0 0.0
    %2047 = vmatprep.subr.mxu0 0.0
    %2048 = vmatpush1.msra.mxu0 0.0
    %2049 = vmatprep.subr.mxu0 0.0
    %2050 = vmatpush1.msra.mxu0 0.0
    %2051 = vmatprep.subr.mxu0 0.0
    %2052 = vmatpush1.msra.mxu0 0.0
    %2053 = vmatprep.subr.mxu0 0.0
    %2054 = vmatpush1.msra.mxu0 0.0
    %2055 = vmatprep.subr.mxu0 0.0
    %2056 = vmatpush1.msra.mxu0 0.0
    %2057 = vmatprep.subr.mxu0 0.0
    %2058 = vmatpush1.msra.mxu0 0.0
    %2059 = vmatprep.subr.mxu0 0.0
    %2060 = vmatpush1.msra.mxu0 0.0
    %2061 = vmatprep.subr.mxu0 0.0
    %2062 = vmatpush1.msra.mxu0 0.0
    %2063 = vmatprep.subr.mxu0 0.0
    %2064 = vmatpush1.msra.mxu0 0.0
    %2065 = vmatprep.subr.mxu0 0.0
    %2066 = vmatpush1.msra.mxu0 0.0
    %2067 = vmatprep.subr.mxu0 0.0
    %2068 = vmatpush1.msra.mxu0 0.0
    %2069 = vmatprep.subr.mxu0 0.0
    %2070 = vmatpush1.msra.mxu0 0.0
    %2071 = vmatprep.subr.mxu0 0.0
    %2072 = vmatpush1.msra.mxu0 0.0
    %2073 = vmatprep.subr.mxu0 0.0
    %2074 = vmatpush1.msra.mxu0 0.0
    %2075 = vmatprep.subr.mxu0 0.0
    %2076 = vmatpush1.msra.mxu0 0.0
    %2077 = vmatprep.subr.mxu0 0.0
    %2078 = vmatpush1.msra.mxu0 0.0
    %2079 = vmatprep.subr.mxu0 0.0
    %2080 = vmatpush1.msra.mxu0 0.0
    %2081 = vmatprep.subr.mxu0 0.0
    %2082 = vmatpush1.msra.mxu0 0.0
    %2083 = vmatprep.subr.mxu0 0.0
    %2084 = vmatpush1.msra.mxu0 0.0
    %2085 = vmatprep.subr.mxu0 0.0
    %2086 = vmatpush1.msra.mxu0 0.0
    %2087 = vmatprep.subr.mxu0 0.0
    %2088 = vmatpush1.msra.mxu0 0.0
    %2089 = vmatprep.subr.mxu0 0.0
    %2090 = vmatpush1.msra.mxu0 0.0
    %2091 = vmatprep.subr.mxu0 0.0
    %2092 = vmatpush1.msra.mxu0 0.0
    %2093 = vmatprep.subr.mxu0 0.0
    %2094 = vmatpush1.msra.mxu0 0.0
    %2095 = vmatprep.subr.mxu0 0.0
    %2096 = vmatpush1.msra.mxu0 0.0
    %2097 = vmatprep.mubr.f32.mxu0 0.0
    %2098 = vmatmul.mubr.f32.gmra.mrb[0].mxu0 %v2031
    %v2099 = vpop.f32.mrb[0].mxu0
    %v2100 = vadd.f32 0.0, %v2099
    %v2101 = vpop.f32.mrb[0].mxu0
    %2102 = vdwg.mxu0
    %2103 = vmatprep.subr.mxu0 0.0
    %2104 = vmatpush1.msra.mxu0 %v621
    %2105 = vmatprep.subr.mxu0 0.0
    %2106 = vmatpush1.msra.mxu0 %v622
    %2107 = vmatprep.subr.mxu0 0.0
    %2108 = vmatpush1.msra.mxu0 %v623
    %2109 = vmatprep.subr.mxu0 0.0
    %2110 = vmatpush1.msra.mxu0 %v624
    %2111 = vmatprep.subr.mxu0 0.0
    %2112 = vmatpush1.msra.mxu0 0.0
    %2113 = vmatprep.subr.mxu0 0.0
    %2114 = vmatpush1.msra.mxu0 0.0
    %2115 = vmatprep.subr.mxu0 0.0
    %2116 = vmatpush1.msra.mxu0 0.0
    %2117 = vmatprep.subr.mxu0 0.0
    %2118 = vmatpush1.msra.mxu0 0.0
    %2119 = vmatprep.subr.mxu0 0.0
    %2120 = vmatpush1.msra.mxu0 0.0
    %2121 = vmatprep.subr.mxu0 0.0
    %2122 = vmatpush1.msra.mxu0 0.0
    %2123 = vmatprep.subr.mxu0 0.0
    %2124 = vmatpush1.msra.mxu0 0.0
    %2125 = vmatprep.subr.mxu0 0.0
    %2126 = vmatpush1.msra.mxu0 0.0
    %2127 = vmatprep.subr.mxu0 0.0
    %2128 = vmatpush1.msra.mxu0 0.0
    %2129 = vmatprep.subr.mxu0 0.0
    %2130 = vmatpush1.msra.mxu0 0.0
    %2131 = vmatprep.subr.mxu0 0.0
    %2132 = vmatpush1.msra.mxu0 0.0
    %2133 = vmatprep.subr.mxu0 0.0
    %2134 = vmatpush1.msra.mxu0 0.0
    %2135 = vmatprep.subr.mxu0 0.0
    %2136 = vmatpush1.msra.mxu0 0.0
    %2137 = vmatprep.subr.mxu0 0.0
    %2138 = vmatpush1.msra.mxu0 0.0
    %2139 = vmatprep.subr.mxu0 0.0
    %2140 = vmatpush1.msra.mxu0 0.0
    %2141 = vmatprep.subr.mxu0 0.0
    %2142 = vmatpush1.msra.mxu0 0.0
    %2143 = vmatprep.subr.mxu0 0.0
    %2144 = vmatpush1.msra.mxu0 0.0
    %2145 = vmatprep.subr.mxu0 0.0
    %2146 = vmatpush1.msra.mxu0 0.0
    %2147 = vmatprep.subr.mxu0 0.0
    %2148 = vmatpush1.msra.mxu0 0.0
    %2149 = vmatprep.subr.mxu0 0.0
    %2150 = vmatpush1.msra.mxu0 0.0
    %2151 = vmatprep.subr.mxu0 0.0
    %2152 = vmatpush1.msra.mxu0 0.0
    %2153 = vmatprep.subr.mxu0 0.0
    %2154 = vmatpush1.msra.mxu0 0.0
    %2155 = vmatprep.subr.mxu0 0.0
    %2156 = vmatpush1.msra.mxu0 0.0
    %2157 = vmatprep.subr.mxu0 0.0
    %2158 = vmatpush1.msra.mxu0 0.0
    %2159 = vmatprep.subr.mxu0 0.0
    %2160 = vmatpush1.msra.mxu0 0.0
    %2161 = vmatprep.subr.mxu0 0.0
    %2162 = vmatpush1.msra.mxu0 0.0
    %2163 = vmatprep.subr.mxu0 0.0
    %2164 = vmatpush1.msra.mxu0 0.0
    %2165 = vmatprep.subr.mxu0 0.0
    %2166 = vmatpush1.msra.mxu0 0.0
    %2167 = vmatprep.mubr.f32.mxu0 0.0
    %2168 = vmatmul.mubr.f32.gmra.mrb[0].mxu0 %v2031
    %v2169 = vpop.f32.mrb[0].mxu0
    %v2170 = vadd.f32 0.0, %v2169
    %v2171 = vpop.f32.mrb[0].mxu0
    %2172 = vdwg.mxu0
    %2173 = vmatprep.subr.mxu0 0.0
    %2174 = vmatpush1.msra.mxu0 %v625
    %2175 = vmatprep.subr.mxu0 0.0
    %2176 = vmatpush1.msra.mxu0 %v626
    %2177 = vmatprep.subr.mxu0 0.0
    %2178 = vmatpush1.msra.mxu0 %v627
    %2179 = vmatprep.subr.mxu0 0.0
    %2180 = vmatpush1.msra.mxu0 %v628
    %2181 = vmatprep.subr.mxu0 0.0
    %2182 = vmatpush1.msra.mxu0 0.0
    %2183 = vmatprep.subr.mxu0 0.0
    %2184 = vmatpush1.msra.mxu0 0.0
    %2185 = vmatprep.subr.mxu0 0.0
    %2186 = vmatpush1.msra.mxu0 0.0
    %2187 = vmatprep.subr.mxu0 0.0
    %2188 = vmatpush1.msra.mxu0 0.0
    %2189 = vmatprep.subr.mxu0 0.0
    %2190 = vmatpush1.msra.mxu0 0.0
    %2191 = vmatprep.subr.mxu0 0.0
    %2192 = vmatpush1.msra.mxu0 0.0
    %2193 = vmatprep.subr.mxu0 0.0
    %2194 = vmatpush1.msra.mxu0 0.0
    %2195 = vmatprep.subr.mxu0 0.0
    %2196 = vmatpush1.msra.mxu0 0.0
    %2197 = vmatprep.subr.mxu0 0.0
    %2198 = vmatpush1.msra.mxu0 0.0
    %2199 = vmatprep.subr.mxu0 0.0
    %2200 = vmatpush1.msra.mxu0 0.0
    %2201 = vmatprep.subr.mxu0 0.0
    %2202 = vmatpush1.msra.mxu0 0.0
    %2203 = vmatprep.subr.mxu0 0.0
    %2204 = vmatpush1.msra.mxu0 0.0
    %2205 = vmatprep.subr.mxu0 0.0
    %2206 = vmatpush1.msra.mxu0 0.0
    %2207 = vmatprep.subr.mxu0 0.0
    %2208 = vmatpush1.msra.mxu0 0.0
    %2209 = vmatprep.subr.mxu0 0.0
    %2210 = vmatpush1.msra.mxu0 0.0
    %2211 = vmatprep.subr.mxu0 0.0
    %2212 = vmatpush1.msra.mxu0 0.0
    %2213 = vmatprep.subr.mxu0 0.0
    %2214 = vmatpush1.msra.mxu0 0.0
    %2215 = vmatprep.subr.mxu0 0.0
    %2216 = vmatpush1.msra.mxu0 0.0
    %2217 = vmatprep.subr.mxu0 0.0
    %2218 = vmatpush1.msra.mxu0 0.0
    %2219 = vmatprep.subr.mxu0 0.0
    %2220 = vmatpush1.msra.mxu0 0.0
    %2221 = vmatprep.subr.mxu0 0.0
    %2222 = vmatpush1.msra.mxu0 0.0
    %2223 = vmatprep.subr.mxu0 0.0
    %2224 = vmatpush1.msra.mxu0 0.0
    %2225 = vmatprep.subr.mxu0 0.0
    %2226 = vmatpush1.msra.mxu0 0.0
    %2227 = vmatprep.subr.mxu0 0.0
    %2228 = vmatpush1.msra.mxu0 0.0
    %2229 = vmatprep.subr.mxu0 0.0
    %2230 = vmatpush1.msra.mxu0 0.0
    %2231 = vmatprep.subr.mxu0 0.0
    %2232 = vmatpush1.msra.mxu0 0.0
    %2233 = vmatprep.subr.mxu0 0.0
    %2234 = vmatpush1.msra.mxu0 0.0
    %2235 = vmatprep.subr.mxu0 0.0
    %2236 = vmatpush1.msra.mxu0 0.0
    %2237 = vmatprep.mubr.f32.mxu0 0.0
    %2238 = vmatmul.mubr.f32.gmra.mrb[0].mxu0 %v2031
    %v2239 = vpop.f32.mrb[0].mxu0
    %v2240 = vadd.f32 %v778, %v2239
    %v2241 = vpop.f32.mrb[0].mxu0
    %2242 = vdwg.mxu0
    %v2244 = vrot.slane %v2100, 3
    %v2245 = vrot.slane %v2100, 4
    %v2248 = vadd.f32 %v437, %v2244
    %v2249 = vadd.f32 %v442, %v2245
    %v2250 = vxor.u32 %v2248, 2147483648
    %v2251 = vxor.u32 %v2249, 2147483648
    %v2252 = vmul.f32 %v2250, 1.442695
    %v2253 = vpow.pop %v2252
    %v2254 = vmul.f32 %v2251, 1.442695
    %v2255 = vpow.pop %v2254
    %v2256 = vadd.f32 %v2253, 1.0
    %v2257 = vadd.f32 %v2255, 1.0
    %v2258 = vrcp.pop %v2256
    %v2259 = vmul.f32 1.0, %v2258
    %v2260 = vrcp.pop %v2257
    %v2261 = vmul.f32 1.0, %v2260
    %v2263 = vrot.slane %v2170, 3
    %v2264 = vrot.slane %v2170, 4
    %v2267 = vadd.f32 %v523, %v2263
    %v2268 = vadd.f32 %v528, %v2264
    %v2269 = vxor.u32 %v2267, 2147483648
    %v2270 = vxor.u32 %v2268, 2147483648
    %v2271 = vmul.f32 %v2269, 1.442695
    %v2272 = vpow.pop %v2271
    %v2273 = vmul.f32 %v2270, 1.442695
    %v2274 = vpow.pop %v2273
    %v2275 = vadd.f32 %v2272, 1.0
    %v2276 = vadd.f32 %v2274, 1.0
    %v2277 = vrcp.pop %v2275
    %v2278 = vmul.f32 1.0, %v2277
    %v2279 = vrcp.pop %v2276
    %v2280 = vmul.f32 1.0, %v2279
    %v2282 = vrot.slane %v2240, 3
    %v2283 = vrot.slane %v2240, 4
    %v2286 = vmul.f32 %v2259, %v2282
    %v2287 = vmul.f32 %v2261, %v2283
    %v2288 = vadd.f32 %v609, %v2286
    %v2289 = vadd.f32 %v614, %v2287
    %v2290 = vtanh.pop %v2288
    %v2291 = vtanh.pop %v2289
    %v2292 = vsub.f32 1.0, %v2278
    %v2293 = vsub.f32 1.0, %v2280
    %v2294 = vmul.f32 %v2292, %v2290
    %v2295 = vmul.f32 %v2293, %v2291
    %v2296 = vrot.slane %v2021, 7
    %v2297 = vrot.slane %v2022, 7
    %v2300 = vmul.f32 %v2278, %v2296
    %v2301 = vmul.f32 %v2280, %v2297
    %v2302 = vadd.f32 %v2294, %v2300
    %v2303 = vadd.f32 %v2295, %v2301
    %vm2304 = vcmask 259077
    %2305 = vst.msk [vmem:[#allocation2] sm:$0x20] %vm2304, %v2302
    %2306 = vst.msk [vmem:[#allocation2 + $0x8] sm:$0x20] %vm2304, %v2303
    %v2309 = vrot.slane %v2302, 5
    %v2310 = vrot.slane %v2303, 4
    %v2311 = vsel %vm910, %v2310, %v2309
    %v2312 = vsel %vm630, %v2311, 0
    %2314 = vmatprep.subr.mxu0 0.0
    %2315 = vmatpush1.msra.mxu0 %v617
    %2316 = vmatprep.subr.mxu0 0.0
    %2317 = vmatpush1.msra.mxu0 %v618
    %2318 = vmatprep.subr.mxu0 0.0
    %2319 = vmatpush1.msra.mxu0 %v619
    %2320 = vmatprep.subr.mxu0 0.0
    %2321 = vmatpush1.msra.mxu0 %v620
    %2322 = vmatprep.subr.mxu0 0.0
    %2323 = vmatpush1.msra.mxu0 0.0
    %2324 = vmatprep.subr.mxu0 0.0
    %2325 = vmatpush1.msra.mxu0 0.0
    %2326 = vmatprep.subr.mxu0 0.0
    %2327 = vmatpush1.msra.mxu0 0.0
    %2328 = vmatprep.subr.mxu0 0.0
    %2329 = vmatpush1.msra.mxu0 0.0
    %2330 = vmatprep.subr.mxu0 0.0
    %2331 = vmatpush1.msra.mxu0 0.0
    %2332 = vmatprep.subr.mxu0 0.0
    %2333 = vmatpush1.msra.mxu0 0.0
    %2334 = vmatprep.subr.mxu0 0.0
    %2335 = vmatpush1.msra.mxu0 0.0
    %2336 = vmatprep.subr.mxu0 0.0
    %2337 = vmatpush1.msra.mxu0 0.0
    %2338 = vmatprep.subr.mxu0 0.0
    %2339 = vmatpush1.msra.mxu0 0.0
    %2340 = vmatprep.subr.mxu0 0.0
    %2341 = vmatpush1.msra.mxu0 0.0
    %2342 = vmatprep.subr.mxu0 0.0
    %2343 = vmatpush1.msra.mxu0 0.0
    %2344 = vmatprep.subr.mxu0 0.0
    %2345 = vmatpush1.msra.mxu0 0.0
    %2346 = vmatprep.subr.mxu0 0.0
    %2347 = vmatpush1.msra.mxu0 0.0
    %2348 = vmatprep.subr.mxu0 0.0
    %2349 = vmatpush1.msra.mxu0 0.0
    %2350 = vmatprep.subr.mxu0 0.0
    %2351 = vmatpush1.msra.mxu0 0.0
    %2352 = vmatprep.subr.mxu0 0.0
    %2353 = vmatpush1.msra.mxu0 0.0
    %2354 = vmatprep.subr.mxu0 0.0
    %2355 = vmatpush1.msra.mxu0 0.0
    %2356 = vmatprep.subr.mxu0 0.0
    %2357 = vmatpush1.msra.mxu0 0.0
    %2358 = vmatprep.subr.mxu0 0.0
    %2359 = vmatpush1.msra.mxu0 0.0
    %2360 = vmatprep.subr.mxu0 0.0
    %2361 = vmatpush1.msra.mxu0 0.0
    %2362 = vmatprep.subr.mxu0 0.0
    %2363 = vmatpush1.msra.mxu0 0.0
    %2364 = vmatprep.subr.mxu0 0.0
    %2365 = vmatpush1.msra.mxu0 0.0
    %2366 = vmatprep.subr.mxu0 0.0
    %2367 = vmatpush1.msra.mxu0 0.0
    %2368 = vmatprep.subr.mxu0 0.0
    %2369 = vmatpush1.msra.mxu0 0.0
    %2370 = vmatprep.subr.mxu0 0.0
    %2371 = vmatpush1.msra.mxu0 0.0
    %2372 = vmatprep.subr.mxu0 0.0
    %2373 = vmatpush1.msra.mxu0 0.0
    %2374 = vmatprep.subr.mxu0 0.0
    %2375 = vmatpush1.msra.mxu0 0.0
    %2376 = vmatprep.subr.mxu0 0.0
    %2377 = vmatpush1.msra.mxu0 0.0
    %2378 = vmatprep.mubr.f32.mxu0 0.0
    %2379 = vmatmul.mubr.f32.gmra.mrb[0].mxu0 %v2312
    %v2380 = vpop.f32.mrb[0].mxu0
    %v2381 = vadd.f32 0.0, %v2380
    %v2382 = vpop.f32.mrb[0].mxu0
    %2383 = vdwg.mxu0
    %2384 = vmatprep.subr.mxu0 0.0
    %2385 = vmatpush1.msra.mxu0 %v621
    %2386 = vmatprep.subr.mxu0 0.0
    %2387 = vmatpush1.msra.mxu0 %v622
    %2388 = vmatprep.subr.mxu0 0.0
    %2389 = vmatpush1.msra.mxu0 %v623
    %2390 = vmatprep.subr.mxu0 0.0
    %2391 = vmatpush1.msra.mxu0 %v624
    %2392 = vmatprep.subr.mxu0 0.0
    %2393 = vmatpush1.msra.mxu0 0.0
    %2394 = vmatprep.subr.mxu0 0.0
    %2395 = vmatpush1.msra.mxu0 0.0
    %2396 = vmatprep.subr.mxu0 0.0
    %2397 = vmatpush1.msra.mxu0 0.0
    %2398 = vmatprep.subr.mxu0 0.0
    %2399 = vmatpush1.msra.mxu0 0.0
    %2400 = vmatprep.subr.mxu0 0.0
    %2401 = vmatpush1.msra.mxu0 0.0
    %2402 = vmatprep.subr.mxu0 0.0
    %2403 = vmatpush1.msra.mxu0 0.0
    %2404 = vmatprep.subr.mxu0 0.0
    %2405 = vmatpush1.msra.mxu0 0.0
    %2406 = vmatprep.subr.mxu0 0.0
    %2407 = vmatpush1.msra.mxu0 0.0
    %2408 = vmatprep.subr.mxu0 0.0
    %2409 = vmatpush1.msra.mxu0 0.0
    %2410 = vmatprep.subr.mxu0 0.0
    %2411 = vmatpush1.msra.mxu0 0.0
    %2412 = vmatprep.subr.mxu0 0.0
    %2413 = vmatpush1.msra.mxu0 0.0
    %2414 = vmatprep.subr.mxu0 0.0
    %2415 = vmatpush1.msra.mxu0 0.0
    %2416 = vmatprep.subr.mxu0 0.0
    %2417 = vmatpush1.msra.mxu0 0.0
    %2418 = vmatprep.subr.mxu0 0.0
    %2419 = vmatpush1.msra.mxu0 0.0
    %2420 = vmatprep.subr.mxu0 0.0
    %2421 = vmatpush1.msra.mxu0 0.0
    %2422 = vmatprep.subr.mxu0 0.0
    %2423 = vmatpush1.msra.mxu0 0.0
    %2424 = vmatprep.subr.mxu0 0.0
    %2425 = vmatpush1.msra.mxu0 0.0
    %2426 = vmatprep.subr.mxu0 0.0
    %2427 = vmatpush1.msra.mxu0 0.0
    %2428 = vmatprep.subr.mxu0 0.0
    %2429 = vmatpush1.msra.mxu0 0.0
    %2430 = vmatprep.subr.mxu0 0.0
    %2431 = vmatpush1.msra.mxu0 0.0
    %2432 = vmatprep.subr.mxu0 0.0
    %2433 = vmatpush1.msra.mxu0 0.0
    %2434 = vmatprep.subr.mxu0 0.0
    %2435 = vmatpush1.msra.mxu0 0.0
    %2436 = vmatprep.subr.mxu0 0.0
    %2437 = vmatpush1.msra.mxu0 0.0
    %2438 = vmatprep.subr.mxu0 0.0
    %2439 = vmatpush1.msra.mxu0 0.0
    %2440 = vmatprep.subr.mxu0 0.0
    %2441 = vmatpush1.msra.mxu0 0.0
    %2442 = vmatprep.subr.mxu0 0.0
    %2443 = vmatpush1.msra.mxu0 0.0
    %2444 = vmatprep.subr.mxu0 0.0
    %2445 = vmatpush1.msra.mxu0 0.0
    %2446 = vmatprep.subr.mxu0 0.0
    %2447 = vmatpush1.msra.mxu0 0.0
    %2448 = vmatprep.mubr.f32.mxu0 0.0
    %2449 = vmatmul.mubr.f32.gmra.mrb[0].mxu0 %v2312
    %v2450 = vpop.f32.mrb[0].mxu0
    %v2451 = vadd.f32 0.0, %v2450
    %v2452 = vpop.f32.mrb[0].mxu0
    %2453 = vdwg.mxu0
    %2454 = vmatprep.subr.mxu0 0.0
    %2455 = vmatpush1.msra.mxu0 %v625
    %2456 = vmatprep.subr.mxu0 0.0
    %2457 = vmatpush1.msra.mxu0 %v626
    %2458 = vmatprep.subr.mxu0 0.0
    %2459 = vmatpush1.msra.mxu0 %v627
    %2460 = vmatprep.subr.mxu0 0.0
    %2461 = vmatpush1.msra.mxu0 %v628
    %2462 = vmatprep.subr.mxu0 0.0
    %2463 = vmatpush1.msra.mxu0 0.0
    %2464 = vmatprep.subr.mxu0 0.0
    %2465 = vmatpush1.msra.mxu0 0.0
    %2466 = vmatprep.subr.mxu0 0.0
    %2467 = vmatpush1.msra.mxu0 0.0
    %2468 = vmatprep.subr.mxu0 0.0
    %2469 = vmatpush1.msra.mxu0 0.0
    %2470 = vmatprep.subr.mxu0 0.0
    %2471 = vmatpush1.msra.mxu0 0.0
    %2472 = vmatprep.subr.mxu0 0.0
    %2473 = vmatpush1.msra.mxu0 0.0
    %2474 = vmatprep.subr.mxu0 0.0
    %2475 = vmatpush1.msra.mxu0 0.0
    %2476 = vmatprep.subr.mxu0 0.0
    %2477 = vmatpush1.msra.mxu0 0.0
    %2478 = vmatprep.subr.mxu0 0.0
    %2479 = vmatpush1.msra.mxu0 0.0
    %2480 = vmatprep.subr.mxu0 0.0
    %2481 = vmatpush1.msra.mxu0 0.0
    %2482 = vmatprep.subr.mxu0 0.0
    %2483 = vmatpush1.msra.mxu0 0.0
    %2484 = vmatprep.subr.mxu0 0.0
    %2485 = vmatpush1.msra.mxu0 0.0
    %2486 = vmatprep.subr.mxu0 0.0
    %2487 = vmatpush1.msra.mxu0 0.0
    %2488 = vmatprep.subr.mxu0 0.0
    %2489 = vmatpush1.msra.mxu0 0.0
    %2490 = vmatprep.subr.mxu0 0.0
    %2491 = vmatpush1.msra.mxu0 0.0
    %2492 = vmatprep.subr.mxu0 0.0
    %2493 = vmatpush1.msra.mxu0 0.0
    %2494 = vmatprep.subr.mxu0 0.0
    %2495 = vmatpush1.msra.mxu0 0.0
    %2496 = vmatprep.subr.mxu0 0.0
    %2497 = vmatpush1.msra.mxu0 0.0
    %2498 = vmatprep.subr.mxu0 0.0
    %2499 = vmatpush1.msra.mxu0 0.0
    %2500 = vmatprep.subr.mxu0 0.0
    %2501 = vmatpush1.msra.mxu0 0.0
    %2502 = vmatprep.subr.mxu0 0.0
    %2503 = vmatpush1.msra.mxu0 0.0
    %2504 = vmatprep.subr.mxu0 0.0
    %2505 = vmatpush1.msra.mxu0 0.0
    %2506 = vmatprep.subr.mxu0 0.0
    %2507 = vmatpush1.msra.mxu0 0.0
    %2508 = vmatprep.subr.mxu0 0.0
    %2509 = vmatpush1.msra.mxu0 0.0
    %2510 = vmatprep.subr.mxu0 0.0
    %2511 = vmatpush1.msra.mxu0 0.0
    %2512 = vmatprep.subr.mxu0 0.0
    %2513 = vmatpush1.msra.mxu0 0.0
    %2514 = vmatprep.subr.mxu0 0.0
    %2515 = vmatpush1.msra.mxu0 0.0
    %2516 = vmatprep.subr.mxu0 0.0
    %2517 = vmatpush1.msra.mxu0 0.0
    %2518 = vmatprep.mubr.f32.mxu0 0.0
    %2519 = vmatmul.mubr.f32.gmra.mrb[0].mxu0 %v2312
    %v2520 = vpop.f32.mrb[0].mxu0
    %v2521 = vadd.f32 %v778, %v2520
    %v2522 = vpop.f32.mrb[0].mxu0
    %2523 = vdwg.mxu0
    %v2525 = vrot.slane %v2381, 2
    %v2526 = vrot.slane %v2381, 3
    %v2529 = vadd.f32 %v437, %v2525
    %v2530 = vadd.f32 %v442, %v2526
    %v2531 = vxor.u32 %v2529, 2147483648
    %v2532 = vxor.u32 %v2530, 2147483648
    %v2533 = vmul.f32 %v2531, 1.442695
    %v2534 = vpow.pop %v2533
    %v2535 = vmul.f32 %v2532, 1.442695
    %v2536 = vpow.pop %v2535
    %v2537 = vadd.f32 %v2534, 1.0
    %v2538 = vadd.f32 %v2536, 1.0
    %v2539 = vrcp.pop %v2537
    %v2540 = vmul.f32 1.0, %v2539
    %v2541 = vrcp.pop %v2538
    %v2542 = vmul.f32 1.0, %v2541
    %v2544 = vrot.slane %v2451, 2
    %v2545 = vrot.slane %v2451, 3
    %v2548 = vadd.f32 %v523, %v2544
    %v2549 = vadd.f32 %v528, %v2545
    %v2550 = vxor.u32 %v2548, 2147483648
    %v2551 = vxor.u32 %v2549, 2147483648
    %v2552 = vmul.f32 %v2550, 1.442695
    %v2553 = vpow.pop %v2552
    %v2554 = vmul.f32 %v2551, 1.442695
    %v2555 = vpow.pop %v2554
    %v2556 = vadd.f32 %v2553, 1.0
    %v2557 = vadd.f32 %v2555, 1.0
    %v2558 = vrcp.pop %v2556
    %v2559 = vmul.f32 1.0, %v2558
    %v2560 = vrcp.pop %v2557
    %v2561 = vmul.f32 1.0, %v2560
    %v2563 = vrot.slane %v2521, 2
    %v2564 = vrot.slane %v2521, 3
    %v2567 = vmul.f32 %v2540, %v2563
    %v2568 = vmul.f32 %v2542, %v2564
    %v2569 = vadd.f32 %v609, %v2567
    %v2570 = vadd.f32 %v614, %v2568
    %v2571 = vtanh.pop %v2569
    %v2572 = vtanh.pop %v2570
    %v2573 = vsub.f32 1.0, %v2559
    %v2574 = vsub.f32 1.0, %v2561
    %v2575 = vmul.f32 %v2573, %v2571
    %v2576 = vmul.f32 %v2574, %v2572
    %v2577 = vrot.slane %v2302, 7
    %v2578 = vrot.slane %v2303, 7
    %v2581 = vmul.f32 %v2559, %v2577
    %v2582 = vmul.f32 %v2561, %v2578
    %v2583 = vadd.f32 %v2575, %v2581
    %v2584 = vadd.f32 %v2576, %v2582
    %vm2585 = vcmask 260102
    %2586 = vst.msk [vmem:[#allocation2] sm:$0x40] %vm2585, %v2583
    %2587 = vst.msk [vmem:[#allocation2 + $0x8] sm:$0x40] %vm2585, %v2584
    %v2590 = vrot.slane %v2583, 6
    %v2591 = vrot.slane %v2584, 5
    %v2592 = vsel %vm910, %v2591, %v2590
    %v2593 = vsel %vm630, %v2592, 0
    %2595 = vmatprep.subr.mxu0 0.0
    %2596 = vmatpush1.msra.mxu0 %v617
    %2597 = vmatprep.subr.mxu0 0.0
    %2598 = vmatpush1.msra.mxu0 %v618
    %2599 = vmatprep.subr.mxu0 0.0
    %2600 = vmatpush1.msra.mxu0 %v619
    %2601 = vmatprep.subr.mxu0 0.0
    %2602 = vmatpush1.msra.mxu0 %v620
    %2603 = vmatprep.subr.mxu0 0.0
    %2604 = vmatpush1.msra.mxu0 0.0
    %2605 = vmatprep.subr.mxu0 0.0
    %2606 = vmatpush1.msra.mxu0 0.0
    %2607 = vmatprep.subr.mxu0 0.0
    %2608 = vmatpush1.msra.mxu0 0.0
    %2609 = vmatprep.subr.mxu0 0.0
    %2610 = vmatpush1.msra.mxu0 0.0
    %2611 = vmatprep.subr.mxu0 0.0
    %2612 = vmatpush1.msra.mxu0 0.0
    %2613 = vmatprep.subr.mxu0 0.0
    %2614 = vmatpush1.msra.mxu0 0.0
    %2615 = vmatprep.subr.mxu0 0.0
    %2616 = vmatpush1.msra.mxu0 0.0
    %2617 = vmatprep.subr.mxu0 0.0
    %2618 = vmatpush1.msra.mxu0 0.0
    %2619 = vmatprep.subr.mxu0 0.0
    %2620 = vmatpush1.msra.mxu0 0.0
    %2621 = vmatprep.subr.mxu0 0.0
    %2622 = vmatpush1.msra.mxu0 0.0
    %2623 = vmatprep.subr.mxu0 0.0
    %2624 = vmatpush1.msra.mxu0 0.0
    %2625 = vmatprep.subr.mxu0 0.0
    %2626 = vmatpush1.msra.mxu0 0.0
    %2627 = vmatprep.subr.mxu0 0.0
    %2628 = vmatpush1.msra.mxu0 0.0
    %2629 = vmatprep.subr.mxu0 0.0
    %2630 = vmatpush1.msra.mxu0 0.0
    %2631 = vmatprep.subr.mxu0 0.0
    %2632 = vmatpush1.msra.mxu0 0.0
    %2633 = vmatprep.subr.mxu0 0.0
    %2634 = vmatpush1.msra.mxu0 0.0
    %2635 = vmatprep.subr.mxu0 0.0
    %2636 = vmatpush1.msra.mxu0 0.0
    %2637 = vmatprep.subr.mxu0 0.0
    %2638 = vmatpush1.msra.mxu0 0.0
    %2639 = vmatprep.subr.mxu0 0.0
    %2640 = vmatpush1.msra.mxu0 0.0
    %2641 = vmatprep.subr.mxu0 0.0
    %2642 = vmatpush1.msra.mxu0 0.0
    %2643 = vmatprep.subr.mxu0 0.0
    %2644 = vmatpush1.msra.mxu0 0.0
    %2645 = vmatprep.subr.mxu0 0.0
    %2646 = vmatpush1.msra.mxu0 0.0
    %2647 = vmatprep.subr.mxu0 0.0
    %2648 = vmatpush1.msra.mxu0 0.0
    %2649 = vmatprep.subr.mxu0 0.0
    %2650 = vmatpush1.msra.mxu0 0.0
    %2651 = vmatprep.subr.mxu0 0.0
    %2652 = vmatpush1.msra.mxu0 0.0
    %2653 = vmatprep.subr.mxu0 0.0
    %2654 = vmatpush1.msra.mxu0 0.0
    %2655 = vmatprep.subr.mxu0 0.0
    %2656 = vmatpush1.msra.mxu0 0.0
    %2657 = vmatprep.subr.mxu0 0.0
    %2658 = vmatpush1.msra.mxu0 0.0
    %2659 = vmatprep.mubr.f32.mxu0 0.0
    %2660 = vmatmul.mubr.f32.gmra.mrb[0].mxu0 %v2593
    %v2661 = vpop.f32.mrb[0].mxu0
    %v2662 = vadd.f32 0.0, %v2661
    %v2663 = vpop.f32.mrb[0].mxu0
    %2664 = vdwg.mxu0
    %2665 = vmatprep.subr.mxu0 0.0
    %2666 = vmatpush1.msra.mxu0 %v621
    %2667 = vmatprep.subr.mxu0 0.0
    %2668 = vmatpush1.msra.mxu0 %v622
    %2669 = vmatprep.subr.mxu0 0.0
    %2670 = vmatpush1.msra.mxu0 %v623
    %2671 = vmatprep.subr.mxu0 0.0
    %2672 = vmatpush1.msra.mxu0 %v624
    %2673 = vmatprep.subr.mxu0 0.0
    %2674 = vmatpush1.msra.mxu0 0.0
    %2675 = vmatprep.subr.mxu0 0.0
    %2676 = vmatpush1.msra.mxu0 0.0
    %2677 = vmatprep.subr.mxu0 0.0
    %2678 = vmatpush1.msra.mxu0 0.0
    %2679 = vmatprep.subr.mxu0 0.0
    %2680 = vmatpush1.msra.mxu0 0.0
    %2681 = vmatprep.subr.mxu0 0.0
    %2682 = vmatpush1.msra.mxu0 0.0
    %2683 = vmatprep.subr.mxu0 0.0
    %2684 = vmatpush1.msra.mxu0 0.0
    %2685 = vmatprep.subr.mxu0 0.0
    %2686 = vmatpush1.msra.mxu0 0.0
    %2687 = vmatprep.subr.mxu0 0.0
    %2688 = vmatpush1.msra.mxu0 0.0
    %2689 = vmatprep.subr.mxu0 0.0
    %2690 = vmatpush1.msra.mxu0 0.0
    %2691 = vmatprep.subr.mxu0 0.0
    %2692 = vmatpush1.msra.mxu0 0.0
    %2693 = vmatprep.subr.mxu0 0.0
    %2694 = vmatpush1.msra.mxu0 0.0
    %2695 = vmatprep.subr.mxu0 0.0
    %2696 = vmatpush1.msra.mxu0 0.0
    %2697 = vmatprep.subr.mxu0 0.0
    %2698 = vmatpush1.msra.mxu0 0.0
    %2699 = vmatprep.subr.mxu0 0.0
    %2700 = vmatpush1.msra.mxu0 0.0
    %2701 = vmatprep.subr.mxu0 0.0
    %2702 = vmatpush1.msra.mxu0 0.0
    %2703 = vmatprep.subr.mxu0 0.0
    %2704 = vmatpush1.msra.mxu0 0.0
    %2705 = vmatprep.subr.mxu0 0.0
    %2706 = vmatpush1.msra.mxu0 0.0
    %2707 = vmatprep.subr.mxu0 0.0
    %2708 = vmatpush1.msra.mxu0 0.0
    %2709 = vmatprep.subr.mxu0 0.0
    %2710 = vmatpush1.msra.mxu0 0.0
    %2711 = vmatprep.subr.mxu0 0.0
    %2712 = vmatpush1.msra.mxu0 0.0
    %2713 = vmatprep.subr.mxu0 0.0
    %2714 = vmatpush1.msra.mxu0 0.0
    %2715 = vmatprep.subr.mxu0 0.0
    %2716 = vmatpush1.msra.mxu0 0.0
    %2717 = vmatprep.subr.mxu0 0.0
    %2718 = vmatpush1.msra.mxu0 0.0
    %2719 = vmatprep.subr.mxu0 0.0
    %2720 = vmatpush1.msra.mxu0 0.0
    %2721 = vmatprep.subr.mxu0 0.0
    %2722 = vmatpush1.msra.mxu0 0.0
    %2723 = vmatprep.subr.mxu0 0.0
    %2724 = vmatpush1.msra.mxu0 0.0
    %2725 = vmatprep.subr.mxu0 0.0
    %2726 = vmatpush1.msra.mxu0 0.0
    %2727 = vmatprep.subr.mxu0 0.0
    %2728 = vmatpush1.msra.mxu0 0.0
    %2729 = vmatprep.mubr.f32.mxu0 0.0
    %2730 = vmatmul.mubr.f32.gmra.mrb[0].mxu0 %v2593
    %v2731 = vpop.f32.mrb[0].mxu0
    %v2732 = vadd.f32 0.0, %v2731
    %v2733 = vpop.f32.mrb[0].mxu0
    %2734 = vdwg.mxu0
    %2735 = vmatprep.subr.mxu0 0.0
    %2736 = vmatpush1.msra.mxu0 %v625
    %2737 = vmatprep.subr.mxu0 0.0
    %2738 = vmatpush1.msra.mxu0 %v626
    %2739 = vmatprep.subr.mxu0 0.0
    %2740 = vmatpush1.msra.mxu0 %v627
    %2741 = vmatprep.subr.mxu0 0.0
    %2742 = vmatpush1.msra.mxu0 %v628
    %2743 = vmatprep.subr.mxu0 0.0
    %2744 = vmatpush1.msra.mxu0 0.0
    %2745 = vmatprep.subr.mxu0 0.0
    %2746 = vmatpush1.msra.mxu0 0.0
    %2747 = vmatprep.subr.mxu0 0.0
    %2748 = vmatpush1.msra.mxu0 0.0
    %2749 = vmatprep.subr.mxu0 0.0
    %2750 = vmatpush1.msra.mxu0 0.0
    %2751 = vmatprep.subr.mxu0 0.0
    %2752 = vmatpush1.msra.mxu0 0.0
    %2753 = vmatprep.subr.mxu0 0.0
    %2754 = vmatpush1.msra.mxu0 0.0
    %2755 = vmatprep.subr.mxu0 0.0
    %2756 = vmatpush1.msra.mxu0 0.0
    %2757 = vmatprep.subr.mxu0 0.0
    %2758 = vmatpush1.msra.mxu0 0.0
    %2759 = vmatprep.subr.mxu0 0.0
    %2760 = vmatpush1.msra.mxu0 0.0
    %2761 = vmatprep.subr.mxu0 0.0
    %2762 = vmatpush1.msra.mxu0 0.0
    %2763 = vmatprep.subr.mxu0 0.0
    %2764 = vmatpush1.msra.mxu0 0.0
    %2765 = vmatprep.subr.mxu0 0.0
    %2766 = vmatpush1.msra.mxu0 0.0
    %2767 = vmatprep.subr.mxu0 0.0
    %2768 = vmatpush1.msra.mxu0 0.0
    %2769 = vmatprep.subr.mxu0 0.0
    %2770 = vmatpush1.msra.mxu0 0.0
    %2771 = vmatprep.subr.mxu0 0.0
    %2772 = vmatpush1.msra.mxu0 0.0
    %2773 = vmatprep.subr.mxu0 0.0
    %2774 = vmatpush1.msra.mxu0 0.0
    %2775 = vmatprep.subr.mxu0 0.0
    %2776 = vmatpush1.msra.mxu0 0.0
    %2777 = vmatprep.subr.mxu0 0.0
    %2778 = vmatpush1.msra.mxu0 0.0
    %2779 = vmatprep.subr.mxu0 0.0
    %2780 = vmatpush1.msra.mxu0 0.0
    %2781 = vmatprep.subr.mxu0 0.0
    %2782 = vmatpush1.msra.mxu0 0.0
    %2783 = vmatprep.subr.mxu0 0.0
    %2784 = vmatpush1.msra.mxu0 0.0
    %2785 = vmatprep.subr.mxu0 0.0
    %2786 = vmatpush1.msra.mxu0 0.0
    %2787 = vmatprep.subr.mxu0 0.0
    %2788 = vmatpush1.msra.mxu0 0.0
    %2789 = vmatprep.subr.mxu0 0.0
    %2790 = vmatpush1.msra.mxu0 0.0
    %2791 = vmatprep.subr.mxu0 0.0
    %2792 = vmatpush1.msra.mxu0 0.0
    %2793 = vmatprep.subr.mxu0 0.0
    %2794 = vmatpush1.msra.mxu0 0.0
    %2795 = vmatprep.subr.mxu0 0.0
    %2796 = vmatpush1.msra.mxu0 0.0
    %2797 = vmatprep.subr.mxu0 0.0
    %2798 = vmatpush1.msra.mxu0 0.0
    %2799 = vmatprep.mubr.f32.mxu0 0.0
    %2800 = vmatmul.mubr.f32.gmra.mrb[0].mxu0 %v2593
    %v2801 = vpop.f32.mrb[0].mxu0
    %v2802 = vadd.f32 %v778, %v2801
    %v2803 = vpop.f32.mrb[0].mxu0
    %2804 = vdwg.mxu0
    %v2806 = vrot.slane %v2662, 1
    %v2807 = vrot.slane %v2662, 2
    %v2810 = vadd.f32 %v437, %v2806
    %v2811 = vadd.f32 %v442, %v2807
    %v2812 = vxor.u32 %v2810, 2147483648
    %v2813 = vxor.u32 %v2811, 2147483648
    %v2814 = vmul.f32 %v2812, 1.442695
    %v2815 = vpow.pop %v2814
    %v2816 = vmul.f32 %v2813, 1.442695
    %v2817 = vpow.pop %v2816
    %v2818 = vadd.f32 %v2815, 1.0
    %v2819 = vadd.f32 %v2817, 1.0
    %v2820 = vrcp.pop %v2818
    %v2821 = vmul.f32 1.0, %v2820
    %v2822 = vrcp.pop %v2819
    %v2823 = vmul.f32 1.0, %v2822
    %v2825 = vrot.slane %v2732, 1
    %v2826 = vrot.slane %v2732, 2
    %v2829 = vadd.f32 %v523, %v2825
    %v2830 = vadd.f32 %v528, %v2826
    %v2831 = vxor.u32 %v2829, 2147483648
    %v2832 = vxor.u32 %v2830, 2147483648
    %v2833 = vmul.f32 %v2831, 1.442695
    %v2834 = vpow.pop %v2833
    %v2835 = vmul.f32 %v2832, 1.442695
    %v2836 = vpow.pop %v2835
    %v2837 = vadd.f32 %v2834, 1.0
    %v2838 = vadd.f32 %v2836, 1.0
    %v2839 = vrcp.pop %v2837
    %v2840 = vmul.f32 1.0, %v2839
    %v2841 = vrcp.pop %v2838
    %v2842 = vmul.f32 1.0, %v2841
    %v2844 = vrot.slane %v2802, 1
    %v2845 = vrot.slane %v2802, 2
    %v2848 = vmul.f32 %v2821, %v2844
    %v2849 = vmul.f32 %v2823, %v2845
    %v2850 = vadd.f32 %v609, %v2848
    %v2851 = vadd.f32 %v614, %v2849
    %v2852 = vtanh.pop %v2850
    %v2853 = vtanh.pop %v2851
    %v2854 = vsub.f32 1.0, %v2840
    %v2855 = vsub.f32 1.0, %v2842
    %v2856 = vmul.f32 %v2854, %v2852
    %v2857 = vmul.f32 %v2855, %v2853
    %v2858 = vrot.slane %v2583, 7
    %v2859 = vrot.slane %v2584, 7
    %v2862 = vmul.f32 %v2840, %v2858
    %v2863 = vmul.f32 %v2842, %v2859
    %v2864 = vadd.f32 %v2856, %v2862
    %v2865 = vadd.f32 %v2857, %v2863
    %vm2866 = vcmask 261127
    %2867 = vst.msk [vmem:[#allocation2] sm:$0x80] %vm2866, %v2864
    %2868 = vst.msk [vmem:[#allocation2 + $0x8] sm:$0x80] %vm2866, %v2865
    %v2869 = vld [vmem:[#allocation2] sm:$0xff]
    %v2870 = vld [vmem:[#allocation2 + $0x8] sm:$0xff]
    %v2871 = vld [vmem:[%s27] sm:$0xff]
    %v2872 = vld [vmem:[%s27 + $0x8] sm:$0xff]
    %v2873 = vld [vmem:[%s27 + $0x10] sm:$0xff]
    %v2874 = vld [vmem:[%s27 + $0x18] sm:$0xff]
    %v2875 = vld [vmem:[#allocation18] sm:$0x1]
    %v2877 = vlaneseq
    %v2878 = vshrl.u32 %v2877, 7
    %v2879 = vsub.s32 0, %v2878
    %v2880 = vrot.slane %v2875, %v2879
    %v2883 = vsel %vm630, %v2869, 0
    %v2886 = vsel %vm630, %v2870, 0
    %2888 = vmatprep.subr.mxu0 0.0
    %2889 = vmatpush1.msra.mxu0 %v2871
    %2890 = vmatprep.subr.mxu0 0.0
    %2891 = vmatpush1.msra.mxu0 %v2872
    %2892 = vmatprep.subr.mxu0 0.0
    %2893 = vmatpush1.msra.mxu0 %v2873
    %2894 = vmatprep.subr.mxu0 0.0
    %2895 = vmatpush1.msra.mxu0 %v2874
    %2896 = vmatprep.subr.mxu0 0.0
    %2897 = vmatpush1.msra.mxu0 0.0
    %2898 = vmatprep.subr.mxu0 0.0
    %2899 = vmatpush1.msra.mxu0 0.0
    %2900 = vmatprep.subr.mxu0 0.0
    %2901 = vmatpush1.msra.mxu0 0.0
    %2902 = vmatprep.subr.mxu0 0.0
    %2903 = vmatpush1.msra.mxu0 0.0
    %2904 = vmatprep.subr.mxu0 0.0
    %2905 = vmatpush1.msra.mxu0 0.0
    %2906 = vmatprep.subr.mxu0 0.0
    %2907 = vmatpush1.msra.mxu0 0.0
    %2908 = vmatprep.subr.mxu0 0.0
    %2909 = vmatpush1.msra.mxu0 0.0
    %2910 = vmatprep.subr.mxu0 0.0
    %2911 = vmatpush1.msra.mxu0 0.0
    %2912 = vmatprep.subr.mxu0 0.0
    %2913 = vmatpush1.msra.mxu0 0.0
    %2914 = vmatprep.subr.mxu0 0.0
    %2915 = vmatpush1.msra.mxu0 0.0
    %2916 = vmatprep.subr.mxu0 0.0
    %2917 = vmatpush1.msra.mxu0 0.0
    %2918 = vmatprep.subr.mxu0 0.0
    %2919 = vmatpush1.msra.mxu0 0.0
    %2920 = vmatprep.subr.mxu0 0.0
    %2921 = vmatpush1.msra.mxu0 0.0
    %2922 = vmatprep.subr.mxu0 0.0
    %2923 = vmatpush1.msra.mxu0 0.0
    %2924 = vmatprep.subr.mxu0 0.0
    %2925 = vmatpush1.msra.mxu0 0.0
    %2926 = vmatprep.subr.mxu0 0.0
    %2927 = vmatpush1.msra.mxu0 0.0
    %2928 = vmatprep.subr.mxu0 0.0
    %2929 = vmatpush1.msra.mxu0 0.0
    %2930 = vmatprep.subr.mxu0 0.0
    %2931 = vmatpush1.msra.mxu0 0.0
    %2932 = vmatprep.subr.mxu0 0.0
    %2933 = vmatpush1.msra.mxu0 0.0
    %2934 = vmatprep.subr.mxu0 0.0
    %2935 = vmatpush1.msra.mxu0 0.0
    %2936 = vmatprep.subr.mxu0 0.0
    %2937 = vmatpush1.msra.mxu0 0.0
    %2938 = vmatprep.subr.mxu0 0.0
    %2939 = vmatpush1.msra.mxu0 0.0
    %2940 = vmatprep.subr.mxu0 0.0
    %2941 = vmatpush1.msra.mxu0 0.0
    %2942 = vmatprep.subr.mxu0 0.0
    %2943 = vmatpush1.msra.mxu0 0.0
    %2944 = vmatprep.subr.mxu0 0.0
    %2945 = vmatpush1.msra.mxu0 0.0
    %2946 = vmatprep.subr.mxu0 0.0
    %2947 = vmatpush1.msra.mxu0 0.0
    %2948 = vmatprep.subr.mxu0 0.0
    %2949 = vmatpush1.msra.mxu0 0.0
    %2950 = vmatprep.subr.mxu0 0.0
    %2951 = vmatpush1.msra.mxu0 0.0
    %2952 = vmatprep.mubr.f32.mxu0 0.0
    %2953 = vmatmul.mubr.f32.gmra.mrb[0].mxu0 %v2883
    %v2954 = vpop.f32.mrb[0].mxu0
    %v2955 = vadd.f32 %v2880, %v2954
    %v2956 = vpop.f32.mrb[0].mxu0
    %2957 = vmatprep.mubr.f32.mxu0 0.0
    %2958 = vmatmul.mubr.f32.gmra.mrb[0].mxu0 %v2886
    %v2959 = vpop.f32.mrb[0].mxu0
    %v2960 = vadd.f32 %v2880, %v2959
    %v2961 = vpop.f32.mrb[0].mxu0
    %2962 = vdwg.mxu0
    %v2963 = vtanh.pop %v2955
    %v2964 = vtanh.pop %v2960
    %v2965 = vld [vmem:[#allocation19] sm:$0x1]
    %v2967 = vlaneseq
    %v2968 = vshrl.u32 %v2967, 7
    %v2969 = vsub.s32 0, %v2968
    %v2970 = vrot.slane %v2965, %v2969
    %v2972 = vmul.f32 %v2963, %v2970
    %v2973 = vmul.f32 %v2964, %v2970
    %v2974 = vsel %vm630, %v2972, 0.0
    %2975 = vadd.xlane.f32.xlu0 %v2974
    %v2976 = vpop.xlane.xlu0 %2975
    %v2977 = vsel %vm630, %v2973, 0.0
    %2978 = vadd.xlane.f32.xlu0 %v2977
    %v2979 = vpop.xlane.xlu0 %2978
    %vm2980 = vcmp.gt.f32.partialorder %v333, 0.0
    %v2983 = vlaneseq
    %v2984 = vand.u32 %v2983, 127
    %v2985 = vlaneseq
    %v2986 = vshrl.u32 %v2985, 7
    %v2987 = vsub.s32 %v2984, %v2986
    %v2988 = vrot.slane %v2976, %v2987
    %v2989 = vlaneseq
    %v2990 = vshrl.u32 %v2989, 7
    %v2991 = vsub.s32 %v2984, %v2990
    %v2992 = vrot.slane %v2979, %v2991
    %v2993 = vsel %vm910, %v2992, %v2988
    %v2995 = vsel %vm2980, %v2993, -1e+30
    %vm2996 = vcmask 58368
    %v2997 = vsel %vm2996, %v2995, -inf
    %2998 = vmax.xlane.f32.xlu0 %v2997
    %v2999 = vpop.xlane.xlu0 %2998
    %v3000 = vsub.f32 %v2995, %v2999
    %v3001 = vmul.f32 %v3000, 1.442695
    %v3002 = vpow.pop %v3001
    %v3003 = vsel %vm2980, %v3002, 0.0
    %v3004 = vsel %vm2996, %v3003, 0.0
    %3005 = vadd.xlane.f32.xlu0 %v3004
    %v3006 = vpop.xlane.xlu0 %3005
    %v3007 = vmax.f32 %v3006, 1e-30
    %v3008 = vrcp.pop %v3007
    %v3009 = vmul.f32 %v3003, %v3008
    %v3010 = vlaneseq
    %v3011 = vshrl.u32 %v3010, 7
    %v3012 = vsub.s32 0, %v3011
    %v3013 = vrot.slane %v3009, %v3012
    %3015 = vbcast.lane.b32.xlu0 %v3013, 256
    %v3016 = vpop.permute.xlu0 %3015
    %v3017 = vlaneseq
    %v3018 = vshrl.u32 %v3017, 7
    %v3019 = vsub.s32 1, %v3018
    %v3020 = vrot.slane %v3009, %v3019
    %3022 = vbcast.lane.b32.xlu0 %v3020, 256
    %v3023 = vpop.permute.xlu0 %3022
    %v3024 = vmul.f32 %v3016, %v2869
    %v3025 = vmul.f32 %v3023, %v2870
    %v3026 = vsel %vm630, %v3024, 0.0
    %v3027 = vrot.slane %v3026, 4
    %v3028 = vadd.f32 %v3026, %v3027
    %v3029 = vrot.slane %v3028, 2
    %v3030 = vadd.f32 %v3028, %v3029
    %v3031 = vrot.slane %v3030, 1
    %v3032 = vadd.f32 %v3030, %v3031
    %v3033 = vsel %vm630, %v3025, 0.0
    %v3034 = vrot.slane %v3033, 4
    %v3035 = vadd.f32 %v3033, %v3034
    %v3036 = vrot.slane %v3035, 2
    %v3037 = vadd.f32 %v3035, %v3036
    %v3038 = vrot.slane %v3037, 1
    %v3039 = vadd.f32 %v3037, %v3038
    %v3040 = vld [vmem:[#allocation21] sm:$0xff]
    %v3041 = vld [vmem:[#allocation21 + $0x8] sm:$0xff]
    %v3042 = vld [vmem:[#allocation21 + $0x10] sm:$0xff]
    %v3043 = vld [vmem:[#allocation21 + $0x18] sm:$0xff]
    %v3044 = vld [vmem:[%s51] sm:$0x1]
    %v3046 = vlaneseq
    %v3047 = vshrl.u32 %v3046, 7
    %v3048 = vsub.s32 0, %v3047
    %v3049 = vrot.slane %v3044, %v3048
    %v3053 = vsel %vm910, %v3039, %v3032
    %v3054 = vsel %vm630, %v3053, 0
    %3056 = vmatprep.subr.mxu0 0.0
    %3057 = vmatpush1.msra.mxu0 %v3040
    %3058 = vmatprep.subr.mxu0 0.0
    %3059 = vmatpush1.msra.mxu0 %v3041
    %3060 = vmatprep.subr.mxu0 0.0
    %3061 = vmatpush1.msra.mxu0 %v3042
    %3062 = vmatprep.subr.mxu0 0.0
    %3063 = vmatpush1.msra.mxu0 %v3043
    %3064 = vmatprep.subr.mxu0 0.0
    %3065 = vmatpush1.msra.mxu0 0.0
    %3066 = vmatprep.subr.mxu0 0.0
    %3067 = vmatpush1.msra.mxu0 0.0
    %3068 = vmatprep.subr.mxu0 0.0
    %3069 = vmatpush1.msra.mxu0 0.0
    %3070 = vmatprep.subr.mxu0 0.0
    %3071 = vmatpush1.msra.mxu0 0.0
    %3072 = vmatprep.subr.mxu0 0.0
    %3073 = vmatpush1.msra.mxu0 0.0
    %3074 = vmatprep.subr.mxu0 0.0
    %3075 = vmatpush1.msra.mxu0 0.0
    %3076 = vmatprep.subr.mxu0 0.0
    %3077 = vmatpush1.msra.mxu0 0.0
    %3078 = vmatprep.subr.mxu0 0.0
    %3079 = vmatpush1.msra.mxu0 0.0
    %3080 = vmatprep.subr.mxu0 0.0
    %3081 = vmatpush1.msra.mxu0 0.0
    %3082 = vmatprep.subr.mxu0 0.0
    %3083 = vmatpush1.msra.mxu0 0.0
    %3084 = vmatprep.subr.mxu0 0.0
    %3085 = vmatpush1.msra.mxu0 0.0
    %3086 = vmatprep.subr.mxu0 0.0
    %3087 = vmatpush1.msra.mxu0 0.0
    %3088 = vmatprep.subr.mxu0 0.0
    %3089 = vmatpush1.msra.mxu0 0.0
    %3090 = vmatprep.subr.mxu0 0.0
    %3091 = vmatpush1.msra.mxu0 0.0
    %3092 = vmatprep.subr.mxu0 0.0
    %3093 = vmatpush1.msra.mxu0 0.0
    %3094 = vmatprep.subr.mxu0 0.0
    %3095 = vmatpush1.msra.mxu0 0.0
    %3096 = vmatprep.subr.mxu0 0.0
    %3097 = vmatpush1.msra.mxu0 0.0
    %3098 = vmatprep.subr.mxu0 0.0
    %3099 = vmatpush1.msra.mxu0 0.0
    %3100 = vmatprep.subr.mxu0 0.0
    %3101 = vmatpush1.msra.mxu0 0.0
    %3102 = vmatprep.subr.mxu0 0.0
    %3103 = vmatpush1.msra.mxu0 0.0
    %3104 = vmatprep.subr.mxu0 0.0
    %3105 = vmatpush1.msra.mxu0 0.0
    %3106 = vmatprep.subr.mxu0 0.0
    %3107 = vmatpush1.msra.mxu0 0.0
    %3108 = vmatprep.subr.mxu0 0.0
    %3109 = vmatpush1.msra.mxu0 0.0
    %3110 = vmatprep.subr.mxu0 0.0
    %3111 = vmatpush1.msra.mxu0 0.0
    %3112 = vmatprep.subr.mxu0 0.0
    %3113 = vmatpush1.msra.mxu0 0.0
    %3114 = vmatprep.subr.mxu0 0.0
    %3115 = vmatpush1.msra.mxu0 0.0
    %3116 = vmatprep.subr.mxu0 0.0
    %3117 = vmatpush1.msra.mxu0 0.0
    %3118 = vmatprep.subr.mxu0 0.0
    %3119 = vmatpush1.msra.mxu0 0.0
    %3120 = vmatprep.mubr.f32.mxu0 0.0
    %3121 = vmatmul.mubr.f32.gmra.mrb[0].mxu0 %v3054
    %v3122 = vpop.f32.mrb[0].mxu0
    %v3123 = vadd.f32 %v3049, %v3122
    %v3124 = vpop.f32.mrb[0].mxu0
    %3125 = vdwg.mxu0
    %v3126 = vld [vmem:[#allocation22] sm:$0xff]
    %v3127 = vld [vmem:[#allocation22 + $0x8] sm:$0xff]
    %v3128 = vld [vmem:[#allocation22 + $0x10] sm:$0xff]
    %v3129 = vld [vmem:[#allocation22 + $0x18] sm:$0xff]
    %v3130 = vld [vmem:[%s53] sm:$0x1]
    %v3132 = vlaneseq
    %v3133 = vshrl.u32 %v3132, 7
    %v3134 = vsub.s32 0, %v3133
    %v3135 = vrot.slane %v3130, %v3134
    %3137 = vmatprep.subr.mxu0 0.0
    %3138 = vmatpush1.msra.mxu0 %v3126
    %3139 = vmatprep.subr.mxu0 0.0
    %3140 = vmatpush1.msra.mxu0 %v3127
    %3141 = vmatprep.subr.mxu0 0.0
    %3142 = vmatpush1.msra.mxu0 %v3128
    %3143 = vmatprep.subr.mxu0 0.0
    %3144 = vmatpush1.msra.mxu0 %v3129
    %3145 = vmatprep.subr.mxu0 0.0
    %3146 = vmatpush1.msra.mxu0 0.0
    %3147 = vmatprep.subr.mxu0 0.0
    %3148 = vmatpush1.msra.mxu0 0.0
    %3149 = vmatprep.subr.mxu0 0.0
    %3150 = vmatpush1.msra.mxu0 0.0
    %3151 = vmatprep.subr.mxu0 0.0
    %3152 = vmatpush1.msra.mxu0 0.0
    %3153 = vmatprep.subr.mxu0 0.0
    %3154 = vmatpush1.msra.mxu0 0.0
    %3155 = vmatprep.subr.mxu0 0.0
    %3156 = vmatpush1.msra.mxu0 0.0
    %3157 = vmatprep.subr.mxu0 0.0
    %3158 = vmatpush1.msra.mxu0 0.0
    %3159 = vmatprep.subr.mxu0 0.0
    %3160 = vmatpush1.msra.mxu0 0.0
    %3161 = vmatprep.subr.mxu0 0.0
    %3162 = vmatpush1.msra.mxu0 0.0
    %3163 = vmatprep.subr.mxu0 0.0
    %3164 = vmatpush1.msra.mxu0 0.0
    %3165 = vmatprep.subr.mxu0 0.0
    %3166 = vmatpush1.msra.mxu0 0.0
    %3167 = vmatprep.subr.mxu0 0.0
    %3168 = vmatpush1.msra.mxu0 0.0
    %3169 = vmatprep.subr.mxu0 0.0
    %3170 = vmatpush1.msra.mxu0 0.0
    %3171 = vmatprep.subr.mxu0 0.0
    %3172 = vmatpush1.msra.mxu0 0.0
    %3173 = vmatprep.subr.mxu0 0.0
    %3174 = vmatpush1.msra.mxu0 0.0
    %3175 = vmatprep.subr.mxu0 0.0
    %3176 = vmatpush1.msra.mxu0 0.0
    %3177 = vmatprep.subr.mxu0 0.0
    %3178 = vmatpush1.msra.mxu0 0.0
    %3179 = vmatprep.subr.mxu0 0.0
    %3180 = vmatpush1.msra.mxu0 0.0
    %3181 = vmatprep.subr.mxu0 0.0
    %3182 = vmatpush1.msra.mxu0 0.0
    %3183 = vmatprep.subr.mxu0 0.0
    %3184 = vmatpush1.msra.mxu0 0.0
    %3185 = vmatprep.subr.mxu0 0.0
    %3186 = vmatpush1.msra.mxu0 0.0
    %3187 = vmatprep.subr.mxu0 0.0
    %3188 = vmatpush1.msra.mxu0 0.0
    %3189 = vmatprep.subr.mxu0 0.0
    %3190 = vmatpush1.msra.mxu0 0.0
    %3191 = vmatprep.subr.mxu0 0.0
    %3192 = vmatpush1.msra.mxu0 0.0
    %3193 = vmatprep.subr.mxu0 0.0
    %3194 = vmatpush1.msra.mxu0 0.0
    %3195 = vmatprep.subr.mxu0 0.0
    %3196 = vmatpush1.msra.mxu0 0.0
    %3197 = vmatprep.subr.mxu0 0.0
    %3198 = vmatpush1.msra.mxu0 0.0
    %3199 = vmatprep.subr.mxu0 0.0
    %3200 = vmatpush1.msra.mxu0 0.0
    %3201 = vmatprep.mubr.f32.mxu0 0.0
    %3202 = vmatmul.mubr.f32.gmra.mrb[0].mxu0 %v3054
    %v3203 = vpop.f32.mrb[0].mxu0
    %v3204 = vadd.f32 %v3135, %v3203
    %v3205 = vpop.f32.mrb[0].mxu0
    %3206 = vdwg.mxu0
    %v3207 = vld [vmem:[#allocation24] sm:$0xff]
    %v3208 = vld [vmem:[#allocation24 + $0x8] sm:$0xff]
    %v3209 = vld [vmem:[#allocation24 + $0x10] sm:$0xff]
    %v3210 = vld [vmem:[#allocation24 + $0x18] sm:$0xff]
    %v3211 = vld [vmem:[%s55] sm:$0x1]
    %v3213 = vlaneseq
    %v3214 = vshrl.u32 %v3213, 7
    %v3215 = vsub.s32 0, %v3214
    %v3216 = vrot.slane %v3211, %v3215
    %3218 = vmatprep.subr.mxu0 0.0
    %3219 = vmatpush1.msra.mxu0 %v3207
    %3220 = vmatprep.subr.mxu0 0.0
    %3221 = vmatpush1.msra.mxu0 %v3208
    %3222 = vmatprep.subr.mxu0 0.0
    %3223 = vmatpush1.msra.mxu0 %v3209
    %3224 = vmatprep.subr.mxu0 0.0
    %3225 = vmatpush1.msra.mxu0 %v3210
    %3226 = vmatprep.subr.mxu0 0.0
    %3227 = vmatpush1.msra.mxu0 0.0
    %3228 = vmatprep.subr.mxu0 0.0
    %3229 = vmatpush1.msra.mxu0 0.0
    %3230 = vmatprep.subr.mxu0 0.0
    %3231 = vmatpush1.msra.mxu0 0.0
    %3232 = vmatprep.subr.mxu0 0.0
    %3233 = vmatpush1.msra.mxu0 0.0
    %3234 = vmatprep.subr.mxu0 0.0
    %3235 = vmatpush1.msra.mxu0 0.0
    %3236 = vmatprep.subr.mxu0 0.0
    %3237 = vmatpush1.msra.mxu0 0.0
    %3238 = vmatprep.subr.mxu0 0.0
    %3239 = vmatpush1.msra.mxu0 0.0
    %3240 = vmatprep.subr.mxu0 0.0
    %3241 = vmatpush1.msra.mxu0 0.0
    %3242 = vmatprep.subr.mxu0 0.0
    %3243 = vmatpush1.msra.mxu0 0.0
    %3244 = vmatprep.subr.mxu0 0.0
    %3245 = vmatpush1.msra.mxu0 0.0
    %3246 = vmatprep.subr.mxu0 0.0
    %3247 = vmatpush1.msra.mxu0 0.0
    %3248 = vmatprep.subr.mxu0 0.0
    %3249 = vmatpush1.msra.mxu0 0.0
    %3250 = vmatprep.subr.mxu0 0.0
    %3251 = vmatpush1.msra.mxu0 0.0
    %3252 = vmatprep.subr.mxu0 0.0
    %3253 = vmatpush1.msra.mxu0 0.0
    %3254 = vmatprep.subr.mxu0 0.0
    %3255 = vmatpush1.msra.mxu0 0.0
    %3256 = vmatprep.subr.mxu0 0.0
    %3257 = vmatpush1.msra.mxu0 0.0
    %3258 = vmatprep.subr.mxu0 0.0
    %3259 = vmatpush1.msra.mxu0 0.0
    %3260 = vmatprep.subr.mxu0 0.0
    %3261 = vmatpush1.msra.mxu0 0.0
    %3262 = vmatprep.subr.mxu0 0.0
    %3263 = vmatpush1.msra.mxu0 0.0
    %3264 = vmatprep.subr.mxu0 0.0
    %3265 = vmatpush1.msra.mxu0 0.0
    %3266 = vmatprep.subr.mxu0 0.0
    %3267 = vmatpush1.msra.mxu0 0.0
    %3268 = vmatprep.subr.mxu0 0.0
    %3269 = vmatpush1.msra.mxu0 0.0
    %3270 = vmatprep.subr.mxu0 0.0
    %3271 = vmatpush1.msra.mxu0 0.0
    %3272 = vmatprep.subr.mxu0 0.0
    %3273 = vmatpush1.msra.mxu0 0.0
    %3274 = vmatprep.subr.mxu0 0.0
    %3275 = vmatpush1.msra.mxu0 0.0
    %3276 = vmatprep.subr.mxu0 0.0
    %3277 = vmatpush1.msra.mxu0 0.0
    %3278 = vmatprep.subr.mxu0 0.0
    %3279 = vmatpush1.msra.mxu0 0.0
    %3280 = vmatprep.subr.mxu0 0.0
    %3281 = vmatpush1.msra.mxu0 0.0
    %3282 = vmatprep.mubr.f32.mxu0 0.0
    %3283 = vmatmul.mubr.f32.gmra.mrb[0].mxu0 %v3054
    %v3284 = vpop.f32.mrb[0].mxu0
    %v3285 = vadd.f32 %v3216, %v3284
    %v3286 = vpop.f32.mrb[0].mxu0
    %3287 = vdwg.mxu0
    %v3288 = vld [vmem:[#allocation25] sm:$0x1]
    %v3289 = vld [vmem:[%s41] sm:$0x1]
    %v3290 = vld [vmem:[%s43] sm:$0x1]
    %v3291 = vld [vmem:[%s45] sm:$0xff]
    %v3292 = vld [vmem:[%s45 + $0x8] sm:$0xff]
    %v3293 = vld [vmem:[%s45 + $0x10] sm:$0xff]
    %v3294 = vld [vmem:[%s45 + $0x18] sm:$0xff]
    %v3295 = vld [vmem:[#allocation27] sm:$0xff]
    %v3296 = vld [vmem:[#allocation27 + $0x8] sm:$0xff]
    %v3297 = vld [vmem:[#allocation27 + $0x10] sm:$0xff]
    %v3298 = vld [vmem:[#allocation27 + $0x18] sm:$0xff]
    %v3299 = vld [vmem:[#allocation28] sm:$0xff]
    %v3300 = vld [vmem:[#allocation28 + $0x8] sm:$0xff]
    %v3301 = vld [vmem:[#allocation28 + $0x10] sm:$0xff]
    %v3302 = vld [vmem:[#allocation28 + $0x18] sm:$0xff]
    %v3303 = vld [vmem:[%s57] sm:$0x1]
    %v3304 = vld [vmem:[%s59] sm:$0x1]
    %s3305 = sld [smem:[#allocation3]]
    %3307 = vset.pattern.permute.xlu0 0
    %3308 = vperm.xlu0 %3307, %v334
    %v3309 = vpop.permute.xlu0 %3308
    %v3312 = vlaneseq
    %v3313 = vshrl.u32 %v3312, 7
    %v3314 = vsub.s32 0, %v3313
    %v3315 = vrot.slane %v3288, %v3314
    %v3317 = vmul.f32 %v3309, %v3315
    %v3318 = vadd.f32 %v3123, %v3317
    %v3320 = vlaneseq
    %v3321 = vshrl.u32 %v3320, 7
    %v3322 = vsub.s32 0, %v3321
    %v3323 = vrot.slane %v3289, %v3322
    %v3325 = vmul.f32 %v3309, %v3323
    %v3326 = vadd.f32 %v3204, %v3325
    %v3328 = vlaneseq
    %v3329 = vshrl.u32 %v3328, 7
    %v3330 = vsub.s32 0, %v3329
    %v3331 = vrot.slane %v3290, %v3330
    %v3333 = vmul.f32 %v3309, %v3331
    %v3334 = vadd.f32 %v3285, %v3333
    %3335 = vmatprep.subr.mxu0 0.0
    %3336 = vmatpush1.msra.mxu0 %v3291
    %3337 = vmatprep.subr.mxu0 0.0
    %3338 = vmatpush1.msra.mxu0 %v3292
    %3339 = vmatprep.subr.mxu0 0.0
    %3340 = vmatpush1.msra.mxu0 %v3293
    %3341 = vmatprep.subr.mxu0 0.0
    %3342 = vmatpush1.msra.mxu0 %v3294
    %3343 = vmatprep.subr.mxu0 0.0
    %3344 = vmatpush1.msra.mxu0 0.0
    %3345 = vmatprep.subr.mxu0 0.0
    %3346 = vmatpush1.msra.mxu0 0.0
    %3347 = vmatprep.subr.mxu0 0.0
    %3348 = vmatpush1.msra.mxu0 0.0
    %3349 = vmatprep.subr.mxu0 0.0
    %3350 = vmatpush1.msra.mxu0 0.0
    %3351 = vmatprep.subr.mxu0 0.0
    %3352 = vmatpush1.msra.mxu0 0.0
    %3353 = vmatprep.subr.mxu0 0.0
    %3354 = vmatpush1.msra.mxu0 0.0
    %3355 = vmatprep.subr.mxu0 0.0
    %3356 = vmatpush1.msra.mxu0 0.0
    %3357 = vmatprep.subr.mxu0 0.0
    %3358 = vmatpush1.msra.mxu0 0.0
    %3359 = vmatprep.subr.mxu0 0.0
    %3360 = vmatpush1.msra.mxu0 0.0
    %3361 = vmatprep.subr.mxu0 0.0
    %3362 = vmatpush1.msra.mxu0 0.0
    %3363 = vmatprep.subr.mxu0 0.0
    %3364 = vmatpush1.msra.mxu0 0.0
    %3365 = vmatprep.subr.mxu0 0.0
    %3366 = vmatpush1.msra.mxu0 0.0
    %3367 = vmatprep.subr.mxu0 0.0
    %3368 = vmatpush1.msra.mxu0 0.0
    %3369 = vmatprep.subr.mxu0 0.0
    %3370 = vmatpush1.msra.mxu0 0.0
    %3371 = vmatprep.subr.mxu0 0.0
    %3372 = vmatpush1.msra.mxu0 0.0
    %3373 = vmatprep.subr.mxu0 0.0
    %3374 = vmatpush1.msra.mxu0 0.0
    %3375 = vmatprep.subr.mxu0 0.0
    %3376 = vmatpush1.msra.mxu0 0.0
    %3377 = vmatprep.subr.mxu0 0.0
    %3378 = vmatpush1.msra.mxu0 0.0
    %3379 = vmatprep.subr.mxu0 0.0
    %3380 = vmatpush1.msra.mxu0 0.0
    %3381 = vmatprep.subr.mxu0 0.0
    %3382 = vmatpush1.msra.mxu0 0.0
    %3383 = vmatprep.subr.mxu0 0.0
    %3384 = vmatpush1.msra.mxu0 0.0
    %3385 = vmatprep.subr.mxu0 0.0
    %3386 = vmatpush1.msra.mxu0 0.0
    %3387 = vmatprep.subr.mxu0 0.0
    %3388 = vmatpush1.msra.mxu0 0.0
    %3389 = vmatprep.subr.mxu0 0.0
    %3390 = vmatpush1.msra.mxu0 0.0
    %3391 = vmatprep.subr.mxu0 0.0
    %3392 = vmatpush1.msra.mxu0 0.0
    %3393 = vmatprep.subr.mxu0 0.0
    %3394 = vmatpush1.msra.mxu0 0.0
    %3395 = vmatprep.subr.mxu0 0.0
    %3396 = vmatpush1.msra.mxu0 0.0
    %3397 = vmatprep.subr.mxu0 0.0
    %3398 = vmatpush1.msra.mxu0 0.0
    %3399 = vmatprep.mubr.f32.mxu0 0.0
    %3400 = vmatmul.mubr.f32.gmra.mrb[0].mxu0 %v3054
    %v3401 = vpop.f32.mrb[0].mxu0
    %v3402 = vadd.f32 0.0, %v3401
    %v3403 = vpop.f32.mrb[0].mxu0
    %3404 = vdwg.mxu0
    %3405 = vmatprep.subr.mxu0 0.0
    %3406 = vmatpush1.msra.mxu0 %v3295
    %3407 = vmatprep.subr.mxu0 0.0
    %3408 = vmatpush1.msra.mxu0 %v3296
    %3409 = vmatprep.subr.mxu0 0.0
    %3410 = vmatpush1.msra.mxu0 %v3297
    %3411 = vmatprep.subr.mxu0 0.0
    %3412 = vmatpush1.msra.mxu0 %v3298
    %3413 = vmatprep.subr.mxu0 0.0
    %3414 = vmatpush1.msra.mxu0 0.0
    %3415 = vmatprep.subr.mxu0 0.0
    %3416 = vmatpush1.msra.mxu0 0.0
    %3417 = vmatprep.subr.mxu0 0.0
    %3418 = vmatpush1.msra.mxu0 0.0
    %3419 = vmatprep.subr.mxu0 0.0
    %3420 = vmatpush1.msra.mxu0 0.0
    %3421 = vmatprep.subr.mxu0 0.0
    %3422 = vmatpush1.msra.mxu0 0.0
    %3423 = vmatprep.subr.mxu0 0.0
    %3424 = vmatpush1.msra.mxu0 0.0
    %3425 = vmatprep.subr.mxu0 0.0
    %3426 = vmatpush1.msra.mxu0 0.0
    %3427 = vmatprep.subr.mxu0 0.0
    %3428 = vmatpush1.msra.mxu0 0.0
    %3429 = vmatprep.subr.mxu0 0.0
    %3430 = vmatpush1.msra.mxu0 0.0
    %3431 = vmatprep.subr.mxu0 0.0
    %3432 = vmatpush1.msra.mxu0 0.0
    %3433 = vmatprep.subr.mxu0 0.0
    %3434 = vmatpush1.msra.mxu0 0.0
    %3435 = vmatprep.subr.mxu0 0.0
    %3436 = vmatpush1.msra.mxu0 0.0
    %3437 = vmatprep.subr.mxu0 0.0
    %3438 = vmatpush1.msra.mxu0 0.0
    %3439 = vmatprep.subr.mxu0 0.0
    %3440 = vmatpush1.msra.mxu0 0.0
    %3441 = vmatprep.subr.mxu0 0.0
    %3442 = vmatpush1.msra.mxu0 0.0
    %3443 = vmatprep.subr.mxu0 0.0
    %3444 = vmatpush1.msra.mxu0 0.0
    %3445 = vmatprep.subr.mxu0 0.0
    %3446 = vmatpush1.msra.mxu0 0.0
    %3447 = vmatprep.subr.mxu0 0.0
    %3448 = vmatpush1.msra.mxu0 0.0
    %3449 = vmatprep.subr.mxu0 0.0
    %3450 = vmatpush1.msra.mxu0 0.0
    %3451 = vmatprep.subr.mxu0 0.0
    %3452 = vmatpush1.msra.mxu0 0.0
    %3453 = vmatprep.subr.mxu0 0.0
    %3454 = vmatpush1.msra.mxu0 0.0
    %3455 = vmatprep.subr.mxu0 0.0
    %3456 = vmatpush1.msra.mxu0 0.0
    %3457 = vmatprep.subr.mxu0 0.0
    %3458 = vmatpush1.msra.mxu0 0.0
    %3459 = vmatprep.subr.mxu0 0.0
    %3460 = vmatpush1.msra.mxu0 0.0
    %3461 = vmatprep.subr.mxu0 0.0
    %3462 = vmatpush1.msra.mxu0 0.0
    %3463 = vmatprep.subr.mxu0 0.0
    %3464 = vmatpush1.msra.mxu0 0.0
    %3465 = vmatprep.subr.mxu0 0.0
    %3466 = vmatpush1.msra.mxu0 0.0
    %3467 = vmatprep.subr.mxu0 0.0
    %3468 = vmatpush1.msra.mxu0 0.0
    %3469 = vmatprep.mubr.f32.mxu0 0.0
    %3470 = vmatmul.mubr.f32.gmra.mrb[0].mxu0 %v3054
    %v3471 = vpop.f32.mrb[0].mxu0
    %v3472 = vadd.f32 0.0, %v3471
    %v3473 = vpop.f32.mrb[0].mxu0
    %3474 = vdwg.mxu0
    %v3476 = vlaneseq
    %v3477 = vshrl.u32 %v3476, 7
    %v3478 = vsub.s32 0, %v3477
    %v3479 = vrot.slane %v3303, %v3478
    %3481 = vmatprep.subr.mxu0 0.0
    %3482 = vmatpush1.msra.mxu0 %v3299
    %3483 = vmatprep.subr.mxu0 0.0
    %3484 = vmatpush1.msra.mxu0 %v3300
    %3485 = vmatprep.subr.mxu0 0.0
    %3486 = vmatpush1.msra.mxu0 %v3301
    %3487 = vmatprep.subr.mxu0 0.0
    %3488 = vmatpush1.msra.mxu0 %v3302
    %3489 = vmatprep.subr.mxu0 0.0
    %3490 = vmatpush1.msra.mxu0 0.0
    %3491 = vmatprep.subr.mxu0 0.0
    %3492 = vmatpush1.msra.mxu0 0.0
    %3493 = vmatprep.subr.mxu0 0.0
    %3494 = vmatpush1.msra.mxu0 0.0
    %3495 = vmatprep.subr.mxu0 0.0
    %3496 = vmatpush1.msra.mxu0 0.0
    %3497 = vmatprep.subr.mxu0 0.0
    %3498 = vmatpush1.msra.mxu0 0.0
    %3499 = vmatprep.subr.mxu0 0.0
    %3500 = vmatpush1.msra.mxu0 0.0
    %3501 = vmatprep.subr.mxu0 0.0
    %3502 = vmatpush1.msra.mxu0 0.0
    %3503 = vmatprep.subr.mxu0 0.0
    %3504 = vmatpush1.msra.mxu0 0.0
    %3505 = vmatprep.subr.mxu0 0.0
    %3506 = vmatpush1.msra.mxu0 0.0
    %3507 = vmatprep.subr.mxu0 0.0
    %3508 = vmatpush1.msra.mxu0 0.0
    %3509 = vmatprep.subr.mxu0 0.0
    %3510 = vmatpush1.msra.mxu0 0.0
    %3511 = vmatprep.subr.mxu0 0.0
    %3512 = vmatpush1.msra.mxu0 0.0
    %3513 = vmatprep.subr.mxu0 0.0
    %3514 = vmatpush1.msra.mxu0 0.0
    %3515 = vmatprep.subr.mxu0 0.0
    %3516 = vmatpush1.msra.mxu0 0.0
    %3517 = vmatprep.subr.mxu0 0.0
    %3518 = vmatpush1.msra.mxu0 0.0
    %3519 = vmatprep.subr.mxu0 0.0
    %3520 = vmatpush1.msra.mxu0 0.0
    %3521 = vmatprep.subr.mxu0 0.0
    %3522 = vmatpush1.msra.mxu0 0.0
    %3523 = vmatprep.subr.mxu0 0.0
    %3524 = vmatpush1.msra.mxu0 0.0
    %3525 = vmatprep.subr.mxu0 0.0
    %3526 = vmatpush1.msra.mxu0 0.0
    %3527 = vmatprep.subr.mxu0 0.0
    %3528 = vmatpush1.msra.mxu0 0.0
    %3529 = vmatprep.subr.mxu0 0.0
    %3530 = vmatpush1.msra.mxu0 0.0
    %3531 = vmatprep.subr.mxu0 0.0
    %3532 = vmatpush1.msra.mxu0 0.0
    %3533 = vmatprep.subr.mxu0 0.0
    %3534 = vmatpush1.msra.mxu0 0.0
    %3535 = vmatprep.subr.mxu0 0.0
    %3536 = vmatpush1.msra.mxu0 0.0
    %3537 = vmatprep.subr.mxu0 0.0
    %3538 = vmatpush1.msra.mxu0 0.0
    %3539 = vmatprep.subr.mxu0 0.0
    %3540 = vmatpush1.msra.mxu0 0.0
    %3541 = vmatprep.subr.mxu0 0.0
    %3542 = vmatpush1.msra.mxu0 0.0
    %3543 = vmatprep.subr.mxu0 0.0
    %3544 = vmatpush1.msra.mxu0 0.0
    %3545 = vmatprep.mubr.f32.mxu0 0.0
    %3546 = vmatmul.mubr.f32.gmra.mrb[0].mxu0 %v3054
    %v3547 = vpop.f32.mrb[0].mxu0
    %v3548 = vadd.f32 %v3479, %v3547
    %v3549 = vpop.f32.mrb[0].mxu0
    %3550 = vdwg.mxu0
    %v3551 = vadd.f32 %v3318, %v3402
    %v3552 = vxor.u32 %v3551, 2147483648
    %v3553 = vmul.f32 %v3552, 1.442695
    %v3554 = vpow.pop %v3553
    %v3555 = vadd.f32 %v3554, 1.0
    %v3556 = vrcp.pop %v3555
    %v3557 = vmul.f32 1.0, %v3556
    %v3558 = vadd.f32 %v3326, %v3472
    %v3559 = vxor.u32 %v3558, 2147483648
    %v3560 = vmul.f32 %v3559, 1.442695
    %v3561 = vpow.pop %v3560
    %v3562 = vadd.f32 %v3561, 1.0
    %v3563 = vrcp.pop %v3562
    %v3564 = vmul.f32 1.0, %v3563
    %v3565 = vmul.f32 %v3557, %v3548
    %v3566 = vadd.f32 %v3334, %v3565
    %v3567 = vtanh.pop %v3566
    %v3568 = vsub.f32 1.0, %v3564
    %v3569 = vmul.f32 %v3568, %v3567
    %v3571 = vmul.f32 %v3564, %v3053
    %v3572 = vadd.f32 %v3569, %v3571
    %v3574 = vlaneseq
    %v3575 = vshrl.u32 %v3574, 7
    %v3576 = vsub.s32 0, %v3575
    %v3577 = vrot.slane %v3304, %v3576
    %v3579 = vmul.f32 %v3572, %v3577
    %vm3580 = vcmask 254976
    %v3581 = vsel %vm3580, %v3579, 0.0
    %3582 = vadd.xlane.f32.xlu0 %v3581
    %v3583 = vpop.xlane.xlu0 %3582
    %v3584 = vstv %s3305
    %v3585 = vadd.f32 %v3583, %v3584
    %3586 = vset.pattern.permute.xlu0 1
    %3587 = vperm.xlu0 %3586, %v334
    %v3588 = vpop.permute.xlu0 %3587
    %v3590 = vmul.f32 %v3588, %v3315
    %v3591 = vadd.f32 %v3123, %v3590
    %v3592 = vmul.f32 %v3588, %v3323
    %v3593 = vadd.f32 %v3204, %v3592
    %v3594 = vmul.f32 %v3588, %v3331
    %v3595 = vadd.f32 %v3285, %v3594
    %v3597 = vsel %vm630, %v3572, 0
    %3599 = vmatprep.subr.mxu0 0.0
    %3600 = vmatpush1.msra.mxu0 %v3291
    %3601 = vmatprep.subr.mxu0 0.0
    %3602 = vmatpush1.msra.mxu0 %v3292
    %3603 = vmatprep.subr.mxu0 0.0
    %3604 = vmatpush1.msra.mxu0 %v3293
    %3605 = vmatprep.subr.mxu0 0.0
    %3606 = vmatpush1.msra.mxu0 %v3294
    %3607 = vmatprep.subr.mxu0 0.0
    %3608 = vmatpush1.msra.mxu0 0.0
    %3609 = vmatprep.subr.mxu0 0.0
    %3610 = vmatpush1.msra.mxu0 0.0
    %3611 = vmatprep.subr.mxu0 0.0
    %3612 = vmatpush1.msra.mxu0 0.0
    %3613 = vmatprep.subr.mxu0 0.0
    %3614 = vmatpush1.msra.mxu0 0.0
    %3615 = vmatprep.subr.mxu0 0.0
    %3616 = vmatpush1.msra.mxu0 0.0
    %3617 = vmatprep.subr.mxu0 0.0
    %3618 = vmatpush1.msra.mxu0 0.0
    %3619 = vmatprep.subr.mxu0 0.0
    %3620 = vmatpush1.msra.mxu0 0.0
    %3621 = vmatprep.subr.mxu0 0.0
    %3622 = vmatpush1.msra.mxu0 0.0
    %3623 = vmatprep.subr.mxu0 0.0
    %3624 = vmatpush1.msra.mxu0 0.0
    %3625 = vmatprep.subr.mxu0 0.0
    %3626 = vmatpush1.msra.mxu0 0.0
    %3627 = vmatprep.subr.mxu0 0.0
    %3628 = vmatpush1.msra.mxu0 0.0
    %3629 = vmatprep.subr.mxu0 0.0
    %3630 = vmatpush1.msra.mxu0 0.0
    %3631 = vmatprep.subr.mxu0 0.0
    %3632 = vmatpush1.msra.mxu0 0.0
    %3633 = vmatprep.subr.mxu0 0.0
    %3634 = vmatpush1.msra.mxu0 0.0
    %3635 = vmatprep.subr.mxu0 0.0
    %3636 = vmatpush1.msra.mxu0 0.0
    %3637 = vmatprep.subr.mxu0 0.0
    %3638 = vmatpush1.msra.mxu0 0.0
    %3639 = vmatprep.subr.mxu0 0.0
    %3640 = vmatpush1.msra.mxu0 0.0
    %3641 = vmatprep.subr.mxu0 0.0
    %3642 = vmatpush1.msra.mxu0 0.0
    %3643 = vmatprep.subr.mxu0 0.0
    %3644 = vmatpush1.msra.mxu0 0.0
    %3645 = vmatprep.subr.mxu0 0.0
    %3646 = vmatpush1.msra.mxu0 0.0
    %3647 = vmatprep.subr.mxu0 0.0
    %3648 = vmatpush1.msra.mxu0 0.0
    %3649 = vmatprep.subr.mxu0 0.0
    %3650 = vmatpush1.msra.mxu0 0.0
    %3651 = vmatprep.subr.mxu0 0.0
    %3652 = vmatpush1.msra.mxu0 0.0
    %3653 = vmatprep.subr.mxu0 0.0
    %3654 = vmatpush1.msra.mxu0 0.0
    %3655 = vmatprep.subr.mxu0 0.0
    %3656 = vmatpush1.msra.mxu0 0.0
    %3657 = vmatprep.subr.mxu0 0.0
    %3658 = vmatpush1.msra.mxu0 0.0
    %3659 = vmatprep.subr.mxu0 0.0
    %3660 = vmatpush1.msra.mxu0 0.0
    %3661 = vmatprep.subr.mxu0 0.0
    %3662 = vmatpush1.msra.mxu0 0.0
    %3663 = vmatprep.mubr.f32.mxu0 0.0
    %3664 = vmatmul.mubr.f32.gmra.mrb[0].mxu0 %v3597
    %v3665 = vpop.f32.mrb[0].mxu0
    %v3666 = vadd.f32 0.0, %v3665
    %v3667 = vpop.f32.mrb[0].mxu0
    %3668 = vdwg.mxu0
    %3669 = vmatprep.subr.mxu0 0.0
    %3670 = vmatpush1.msra.mxu0 %v3295
    %3671 = vmatprep.subr.mxu0 0.0
    %3672 = vmatpush1.msra.mxu0 %v3296
    %3673 = vmatprep.subr.mxu0 0.0
    %3674 = vmatpush1.msra.mxu0 %v3297
    %3675 = vmatprep.subr.mxu0 0.0
    %3676 = vmatpush1.msra.mxu0 %v3298
    %3677 = vmatprep.subr.mxu0 0.0
    %3678 = vmatpush1.msra.mxu0 0.0
    %3679 = vmatprep.subr.mxu0 0.0
    %3680 = vmatpush1.msra.mxu0 0.0
    %3681 = vmatprep.subr.mxu0 0.0
    %3682 = vmatpush1.msra.mxu0 0.0
    %3683 = vmatprep.subr.mxu0 0.0
    %3684 = vmatpush1.msra.mxu0 0.0
    %3685 = vmatprep.subr.mxu0 0.0
    %3686 = vmatpush1.msra.mxu0 0.0
    %3687 = vmatprep.subr.mxu0 0.0
    %3688 = vmatpush1.msra.mxu0 0.0
    %3689 = vmatprep.subr.mxu0 0.0
    %3690 = vmatpush1.msra.mxu0 0.0
    %3691 = vmatprep.subr.mxu0 0.0
    %3692 = vmatpush1.msra.mxu0 0.0
    %3693 = vmatprep.subr.mxu0 0.0
    %3694 = vmatpush1.msra.mxu0 0.0
    %3695 = vmatprep.subr.mxu0 0.0
    %3696 = vmatpush1.msra.mxu0 0.0
    %3697 = vmatprep.subr.mxu0 0.0
    %3698 = vmatpush1.msra.mxu0 0.0
    %3699 = vmatprep.subr.mxu0 0.0
    %3700 = vmatpush1.msra.mxu0 0.0
    %3701 = vmatprep.subr.mxu0 0.0
    %3702 = vmatpush1.msra.mxu0 0.0
    %3703 = vmatprep.subr.mxu0 0.0
    %3704 = vmatpush1.msra.mxu0 0.0
    %3705 = vmatprep.subr.mxu0 0.0
    %3706 = vmatpush1.msra.mxu0 0.0
    %3707 = vmatprep.subr.mxu0 0.0
    %3708 = vmatpush1.msra.mxu0 0.0
    %3709 = vmatprep.subr.mxu0 0.0
    %3710 = vmatpush1.msra.mxu0 0.0
    %3711 = vmatprep.subr.mxu0 0.0
    %3712 = vmatpush1.msra.mxu0 0.0
    %3713 = vmatprep.subr.mxu0 0.0
    %3714 = vmatpush1.msra.mxu0 0.0
    %3715 = vmatprep.subr.mxu0 0.0
    %3716 = vmatpush1.msra.mxu0 0.0
    %3717 = vmatprep.subr.mxu0 0.0
    %3718 = vmatpush1.msra.mxu0 0.0
    %3719 = vmatprep.subr.mxu0 0.0
    %3720 = vmatpush1.msra.mxu0 0.0
    %3721 = vmatprep.subr.mxu0 0.0
    %3722 = vmatpush1.msra.mxu0 0.0
    %3723 = vmatprep.subr.mxu0 0.0
    %3724 = vmatpush1.msra.mxu0 0.0
    %3725 = vmatprep.subr.mxu0 0.0
    %3726 = vmatpush1.msra.mxu0 0.0
    %3727 = vmatprep.subr.mxu0 0.0
    %3728 = vmatpush1.msra.mxu0 0.0
    %3729 = vmatprep.subr.mxu0 0.0
    %3730 = vmatpush1.msra.mxu0 0.0
    %3731 = vmatprep.subr.mxu0 0.0
    %3732 = vmatpush1.msra.mxu0 0.0
    %3733 = vmatprep.mubr.f32.mxu0 0.0
    %3734 = vmatmul.mubr.f32.gmra.mrb[0].mxu0 %v3597
    %v3735 = vpop.f32.mrb[0].mxu0
    %v3736 = vadd.f32 0.0, %v3735
    %v3737 = vpop.f32.mrb[0].mxu0
    %3738 = vdwg.mxu0
    %3739 = vmatprep.subr.mxu0 0.0
    %3740 = vmatpush1.msra.mxu0 %v3299
    %3741 = vmatprep.subr.mxu0 0.0
    %3742 = vmatpush1.msra.mxu0 %v3300
    %3743 = vmatprep.subr.mxu0 0.0
    %3744 = vmatpush1.msra.mxu0 %v3301
    %3745 = vmatprep.subr.mxu0 0.0
    %3746 = vmatpush1.msra.mxu0 %v3302
    %3747 = vmatprep.subr.mxu0 0.0
    %3748 = vmatpush1.msra.mxu0 0.0
    %3749 = vmatprep.subr.mxu0 0.0
    %3750 = vmatpush1.msra.mxu0 0.0
    %3751 = vmatprep.subr.mxu0 0.0
    %3752 = vmatpush1.msra.mxu0 0.0
    %3753 = vmatprep.subr.mxu0 0.0
    %3754 = vmatpush1.msra.mxu0 0.0
    %3755 = vmatprep.subr.mxu0 0.0
    %3756 = vmatpush1.msra.mxu0 0.0
    %3757 = vmatprep.subr.mxu0 0.0
    %3758 = vmatpush1.msra.mxu0 0.0
    %3759 = vmatprep.subr.mxu0 0.0
    %3760 = vmatpush1.msra.mxu0 0.0
    %3761 = vmatprep.subr.mxu0 0.0
    %3762 = vmatpush1.msra.mxu0 0.0
    %3763 = vmatprep.subr.mxu0 0.0
    %3764 = vmatpush1.msra.mxu0 0.0
    %3765 = vmatprep.subr.mxu0 0.0
    %3766 = vmatpush1.msra.mxu0 0.0
    %3767 = vmatprep.subr.mxu0 0.0
    %3768 = vmatpush1.msra.mxu0 0.0
    %3769 = vmatprep.subr.mxu0 0.0
    %3770 = vmatpush1.msra.mxu0 0.0
    %3771 = vmatprep.subr.mxu0 0.0
    %3772 = vmatpush1.msra.mxu0 0.0
    %3773 = vmatprep.subr.mxu0 0.0
    %3774 = vmatpush1.msra.mxu0 0.0
    %3775 = vmatprep.subr.mxu0 0.0
    %3776 = vmatpush1.msra.mxu0 0.0
    %3777 = vmatprep.subr.mxu0 0.0
    %3778 = vmatpush1.msra.mxu0 0.0
    %3779 = vmatprep.subr.mxu0 0.0
    %3780 = vmatpush1.msra.mxu0 0.0
    %3781 = vmatprep.subr.mxu0 0.0
    %3782 = vmatpush1.msra.mxu0 0.0
    %3783 = vmatprep.subr.mxu0 0.0
    %3784 = vmatpush1.msra.mxu0 0.0
    %3785 = vmatprep.subr.mxu0 0.0
    %3786 = vmatpush1.msra.mxu0 0.0
    %3787 = vmatprep.subr.mxu0 0.0
    %3788 = vmatpush1.msra.mxu0 0.0
    %3789 = vmatprep.subr.mxu0 0.0
    %3790 = vmatpush1.msra.mxu0 0.0
    %3791 = vmatprep.subr.mxu0 0.0
    %3792 = vmatpush1.msra.mxu0 0.0
    %3793 = vmatprep.subr.mxu0 0.0
    %3794 = vmatpush1.msra.mxu0 0.0
    %3795 = vmatprep.subr.mxu0 0.0
    %3796 = vmatpush1.msra.mxu0 0.0
    %3797 = vmatprep.subr.mxu0 0.0
    %3798 = vmatpush1.msra.mxu0 0.0
    %3799 = vmatprep.subr.mxu0 0.0
    %3800 = vmatpush1.msra.mxu0 0.0
    %3801 = vmatprep.subr.mxu0 0.0
    %3802 = vmatpush1.msra.mxu0 0.0
    %3803 = vmatprep.mubr.f32.mxu0 0.0
    %3804 = vmatmul.mubr.f32.gmra.mrb[0].mxu0 %v3597
    %v3805 = vpop.f32.mrb[0].mxu0
    %v3806 = vadd.f32 %v3479, %v3805
    %v3807 = vpop.f32.mrb[0].mxu0
    %3808 = vdwg.mxu0
    %v3809 = vadd.f32 %v3591, %v3666
    %v3810 = vxor.u32 %v3809, 2147483648
    %v3811 = vmul.f32 %v3810, 1.442695
    %v3812 = vpow.pop %v3811
    %v3813 = vadd.f32 %v3812, 1.0
    %v3814 = vrcp.pop %v3813
    %v3815 = vmul.f32 1.0, %v3814
    %v3816 = vadd.f32 %v3593, %v3736
    %v3817 = vxor.u32 %v3816, 2147483648
    %v3818 = vmul.f32 %v3817, 1.442695
    %v3819 = vpow.pop %v3818
    %v3820 = vadd.f32 %v3819, 1.0
    %v3821 = vrcp.pop %v3820
    %v3822 = vmul.f32 1.0, %v3821
    %v3823 = vmul.f32 %v3815, %v3806
    %v3824 = vadd.f32 %v3595, %v3823
    %v3825 = vtanh.pop %v3824
    %v3826 = vsub.f32 1.0, %v3822
    %v3827 = vmul.f32 %v3826, %v3825
    %v3828 = vmul.f32 %v3822, %v3572
    %v3829 = vadd.f32 %v3827, %v3828
    %v3830 = vmul.f32 %v3829, %v3577
    %v3831 = vsel %vm3580, %v3830, 0.0
    %3832 = vadd.xlane.f32.xlu0 %v3831
    %v3833 = vpop.xlane.xlu0 %3832
    %v3834 = vadd.f32 %v3833, %v3584
    %3835 = vset.pattern.permute.xlu0 2
    %3836 = vperm.xlu0 %3835, %v334
    %v3837 = vpop.permute.xlu0 %3836
    %v3839 = vmul.f32 %v3837, %v3315
    %v3840 = vadd.f32 %v3123, %v3839
    %v3841 = vmul.f32 %v3837, %v3323
    %v3842 = vadd.f32 %v3204, %v3841
    %v3843 = vmul.f32 %v3837, %v3331
    %v3844 = vadd.f32 %v3285, %v3843
    %v3846 = vsel %vm630, %v3829, 0
    %3848 = vmatprep.subr.mxu0 0.0
    %3849 = vmatpush1.msra.mxu0 %v3291
    %3850 = vmatprep.subr.mxu0 0.0
    %3851 = vmatpush1.msra.mxu0 %v3292
    %3852 = vmatprep.subr.mxu0 0.0
    %3853 = vmatpush1.msra.mxu0 %v3293
    %3854 = vmatprep.subr.mxu0 0.0
    %3855 = vmatpush1.msra.mxu0 %v3294
    %3856 = vmatprep.subr.mxu0 0.0
    %3857 = vmatpush1.msra.mxu0 0.0
    %3858 = vmatprep.subr.mxu0 0.0
    %3859 = vmatpush1.msra.mxu0 0.0
    %3860 = vmatprep.subr.mxu0 0.0
    %3861 = vmatpush1.msra.mxu0 0.0
    %3862 = vmatprep.subr.mxu0 0.0
    %3863 = vmatpush1.msra.mxu0 0.0
    %3864 = vmatprep.subr.mxu0 0.0
    %3865 = vmatpush1.msra.mxu0 0.0
    %3866 = vmatprep.subr.mxu0 0.0
    %3867 = vmatpush1.msra.mxu0 0.0
    %3868 = vmatprep.subr.mxu0 0.0
    %3869 = vmatpush1.msra.mxu0 0.0
    %3870 = vmatprep.subr.mxu0 0.0
    %3871 = vmatpush1.msra.mxu0 0.0
    %3872 = vmatprep.subr.mxu0 0.0
    %3873 = vmatpush1.msra.mxu0 0.0
    %3874 = vmatprep.subr.mxu0 0.0
    %3875 = vmatpush1.msra.mxu0 0.0
    %3876 = vmatprep.subr.mxu0 0.0
    %3877 = vmatpush1.msra.mxu0 0.0
    %3878 = vmatprep.subr.mxu0 0.0
    %3879 = vmatpush1.msra.mxu0 0.0
    %3880 = vmatprep.subr.mxu0 0.0
    %3881 = vmatpush1.msra.mxu0 0.0
    %3882 = vmatprep.subr.mxu0 0.0
    %3883 = vmatpush1.msra.mxu0 0.0
    %3884 = vmatprep.subr.mxu0 0.0
    %3885 = vmatpush1.msra.mxu0 0.0
    %3886 = vmatprep.subr.mxu0 0.0
    %3887 = vmatpush1.msra.mxu0 0.0
    %3888 = vmatprep.subr.mxu0 0.0
    %3889 = vmatpush1.msra.mxu0 0.0
    %3890 = vmatprep.subr.mxu0 0.0
    %3891 = vmatpush1.msra.mxu0 0.0
    %3892 = vmatprep.subr.mxu0 0.0
    %3893 = vmatpush1.msra.mxu0 0.0
    %3894 = vmatprep.subr.mxu0 0.0
    %3895 = vmatpush1.msra.mxu0 0.0
    %3896 = vmatprep.subr.mxu0 0.0
    %3897 = vmatpush1.msra.mxu0 0.0
    %3898 = vmatprep.subr.mxu0 0.0
    %3899 = vmatpush1.msra.mxu0 0.0
    %3900 = vmatprep.subr.mxu0 0.0
    %3901 = vmatpush1.msra.mxu0 0.0
    %3902 = vmatprep.subr.mxu0 0.0
    %3903 = vmatpush1.msra.mxu0 0.0
    %3904 = vmatprep.subr.mxu0 0.0
    %3905 = vmatpush1.msra.mxu0 0.0
    %3906 = vmatprep.subr.mxu0 0.0
    %3907 = vmatpush1.msra.mxu0 0.0
    %3908 = vmatprep.subr.mxu0 0.0
    %3909 = vmatpush1.msra.mxu0 0.0
    %3910 = vmatprep.subr.mxu0 0.0
    %3911 = vmatpush1.msra.mxu0 0.0
    %3912 = vmatprep.mubr.f32.mxu0 0.0
    %3913 = vmatmul.mubr.f32.gmra.mrb[0].mxu0 %v3846
    %v3914 = vpop.f32.mrb[0].mxu0
    %v3915 = vadd.f32 0.0, %v3914
    %v3916 = vpop.f32.mrb[0].mxu0
    %3917 = vdwg.mxu0
    %3918 = vmatprep.subr.mxu0 0.0
    %3919 = vmatpush1.msra.mxu0 %v3295
    %3920 = vmatprep.subr.mxu0 0.0
    %3921 = vmatpush1.msra.mxu0 %v3296
    %3922 = vmatprep.subr.mxu0 0.0
    %3923 = vmatpush1.msra.mxu0 %v3297
    %3924 = vmatprep.subr.mxu0 0.0
    %3925 = vmatpush1.msra.mxu0 %v3298
    %3926 = vmatprep.subr.mxu0 0.0
    %3927 = vmatpush1.msra.mxu0 0.0
    %3928 = vmatprep.subr.mxu0 0.0
    %3929 = vmatpush1.msra.mxu0 0.0
    %3930 = vmatprep.subr.mxu0 0.0
    %3931 = vmatpush1.msra.mxu0 0.0
    %3932 = vmatprep.subr.mxu0 0.0
    %3933 = vmatpush1.msra.mxu0 0.0
    %3934 = vmatprep.subr.mxu0 0.0
    %3935 = vmatpush1.msra.mxu0 0.0
    %3936 = vmatprep.subr.mxu0 0.0
    %3937 = vmatpush1.msra.mxu0 0.0
    %3938 = vmatprep.subr.mxu0 0.0
    %3939 = vmatpush1.msra.mxu0 0.0
    %3940 = vmatprep.subr.mxu0 0.0
    %3941 = vmatpush1.msra.mxu0 0.0
    %3942 = vmatprep.subr.mxu0 0.0
    %3943 = vmatpush1.msra.mxu0 0.0
    %3944 = vmatprep.subr.mxu0 0.0
    %3945 = vmatpush1.msra.mxu0 0.0
    %3946 = vmatprep.subr.mxu0 0.0
    %3947 = vmatpush1.msra.mxu0 0.0
    %3948 = vmatprep.subr.mxu0 0.0
    %3949 = vmatpush1.msra.mxu0 0.0
    %3950 = vmatprep.subr.mxu0 0.0
    %3951 = vmatpush1.msra.mxu0 0.0
    %3952 = vmatprep.subr.mxu0 0.0
    %3953 = vmatpush1.msra.mxu0 0.0
    %3954 = vmatprep.subr.mxu0 0.0
    %3955 = vmatpush1.msra.mxu0 0.0
    %3956 = vmatprep.subr.mxu0 0.0
    %3957 = vmatpush1.msra.mxu0 0.0
    %3958 = vmatprep.subr.mxu0 0.0
    %3959 = vmatpush1.msra.mxu0 0.0
    %3960 = vmatprep.subr.mxu0 0.0
    %3961 = vmatpush1.msra.mxu0 0.0
    %3962 = vmatprep.subr.mxu0 0.0
    %3963 = vmatpush1.msra.mxu0 0.0
    %3964 = vmatprep.subr.mxu0 0.0
    %3965 = vmatpush1.msra.mxu0 0.0
    %3966 = vmatprep.subr.mxu0 0.0
    %3967 = vmatpush1.msra.mxu0 0.0
    %3968 = vmatprep.subr.mxu0 0.0
    %3969 = vmatpush1.msra.mxu0 0.0
    %3970 = vmatprep.subr.mxu0 0.0
    %3971 = vmatpush1.msra.mxu0 0.0
    %3972 = vmatprep.subr.mxu0 0.0
    %3973 = vmatpush1.msra.mxu0 0.0
    %3974 = vmatprep.subr.mxu0 0.0
    %3975 = vmatpush1.msra.mxu0 0.0
    %3976 = vmatprep.subr.mxu0 0.0
    %3977 = vmatpush1.msra.mxu0 0.0
    %3978 = vmatprep.subr.mxu0 0.0
    %3979 = vmatpush1.msra.mxu0 0.0
    %3980 = vmatprep.subr.mxu0 0.0
    %3981 = vmatpush1.msra.mxu0 0.0
    %3982 = vmatprep.mubr.f32.mxu0 0.0
    %3983 = vmatmul.mubr.f32.gmra.mrb[0].mxu0 %v3846
    %v3984 = vpop.f32.mrb[0].mxu0
    %v3985 = vadd.f32 0.0, %v3984
    %v3986 = vpop.f32.mrb[0].mxu0
    %3987 = vdwg.mxu0
    %3988 = vmatprep.subr.mxu0 0.0
    %3989 = vmatpush1.msra.mxu0 %v3299
    %3990 = vmatprep.subr.mxu0 0.0
    %3991 = vmatpush1.msra.mxu0 %v3300
    %3992 = vmatprep.subr.mxu0 0.0
    %3993 = vmatpush1.msra.mxu0 %v3301
    %3994 = vmatprep.subr.mxu0 0.0
    %3995 = vmatpush1.msra.mxu0 %v3302
    %3996 = vmatprep.subr.mxu0 0.0
    %3997 = vmatpush1.msra.mxu0 0.0
    %3998 = vmatprep.subr.mxu0 0.0
    %3999 = vmatpush1.msra.mxu0 0.0
    %4000 = vmatprep.subr.mxu0 0.0
    %4001 = vmatpush1.msra.mxu0 0.0
    %4002 = vmatprep.subr.mxu0 0.0
    %4003 = vmatpush1.msra.mxu0 0.0
    %4004 = vmatprep.subr.mxu0 0.0
    %4005 = vmatpush1.msra.mxu0 0.0
    %4006 = vmatprep.subr.mxu0 0.0
    %4007 = vmatpush1.msra.mxu0 0.0
    %4008 = vmatprep.subr.mxu0 0.0
    %4009 = vmatpush1.msra.mxu0 0.0
    %4010 = vmatprep.subr.mxu0 0.0
    %4011 = vmatpush1.msra.mxu0 0.0
    %4012 = vmatprep.subr.mxu0 0.0
    %4013 = vmatpush1.msra.mxu0 0.0
    %4014 = vmatprep.subr.mxu0 0.0
    %4015 = vmatpush1.msra.mxu0 0.0
    %4016 = vmatprep.subr.mxu0 0.0
    %4017 = vmatpush1.msra.mxu0 0.0
    %4018 = vmatprep.subr.mxu0 0.0
    %4019 = vmatpush1.msra.mxu0 0.0
    %4020 = vmatprep.subr.mxu0 0.0
    %4021 = vmatpush1.msra.mxu0 0.0
    %4022 = vmatprep.subr.mxu0 0.0
    %4023 = vmatpush1.msra.mxu0 0.0
    %4024 = vmatprep.subr.mxu0 0.0
    %4025 = vmatpush1.msra.mxu0 0.0
    %4026 = vmatprep.subr.mxu0 0.0
    %4027 = vmatpush1.msra.mxu0 0.0
    %4028 = vmatprep.subr.mxu0 0.0
    %4029 = vmatpush1.msra.mxu0 0.0
    %4030 = vmatprep.subr.mxu0 0.0
    %4031 = vmatpush1.msra.mxu0 0.0
    %4032 = vmatprep.subr.mxu0 0.0
    %4033 = vmatpush1.msra.mxu0 0.0
    %4034 = vmatprep.subr.mxu0 0.0
    %4035 = vmatpush1.msra.mxu0 0.0
    %4036 = vmatprep.subr.mxu0 0.0
    %4037 = vmatpush1.msra.mxu0 0.0
    %4038 = vmatprep.subr.mxu0 0.0
    %4039 = vmatpush1.msra.mxu0 0.0
    %4040 = vmatprep.subr.mxu0 0.0
    %4041 = vmatpush1.msra.mxu0 0.0
    %4042 = vmatprep.subr.mxu0 0.0
    %4043 = vmatpush1.msra.mxu0 0.0
    %4044 = vmatprep.subr.mxu0 0.0
    %4045 = vmatpush1.msra.mxu0 0.0
    %4046 = vmatprep.subr.mxu0 0.0
    %4047 = vmatpush1.msra.mxu0 0.0
    %4048 = vmatprep.subr.mxu0 0.0
    %4049 = vmatpush1.msra.mxu0 0.0
    %4050 = vmatprep.subr.mxu0 0.0
    %4051 = vmatpush1.msra.mxu0 0.0
    %4052 = vmatprep.mubr.f32.mxu0 0.0
    %4053 = vmatmul.mubr.f32.gmra.mrb[0].mxu0 %v3846
    %v4054 = vpop.f32.mrb[0].mxu0
    %v4055 = vadd.f32 %v3479, %v4054
    %v4056 = vpop.f32.mrb[0].mxu0
    %4057 = vdwg.mxu0
    %v4058 = vadd.f32 %v3840, %v3915
    %v4059 = vxor.u32 %v4058, 2147483648
    %v4060 = vmul.f32 %v4059, 1.442695
    %v4061 = vpow.pop %v4060
    %v4062 = vadd.f32 %v4061, 1.0
    %v4063 = vrcp.pop %v4062
    %v4064 = vmul.f32 1.0, %v4063
    %v4065 = vadd.f32 %v3842, %v3985
    %v4066 = vxor.u32 %v4065, 2147483648
    %v4067 = vmul.f32 %v4066, 1.442695
    %v4068 = vpow.pop %v4067
    %v4069 = vadd.f32 %v4068, 1.0
    %v4070 = vrcp.pop %v4069
    %v4071 = vmul.f32 1.0, %v4070
    %v4072 = vmul.f32 %v4064, %v4055
    %v4073 = vadd.f32 %v3844, %v4072
    %v4074 = vtanh.pop %v4073
    %v4075 = vsub.f32 1.0, %v4071
    %v4076 = vmul.f32 %v4075, %v4074
    %v4077 = vmul.f32 %v4071, %v3829
    %v4078 = vadd.f32 %v4076, %v4077
    %v4079 = vmul.f32 %v4078, %v3577
    %v4080 = vsel %vm3580, %v4079, 0.0
    %4081 = vadd.xlane.f32.xlu0 %v4080
    %v4082 = vpop.xlane.xlu0 %4081
    %v4083 = vadd.f32 %v4082, %v3584
    %4084 = vset.pattern.permute.xlu0 3
    %4085 = vperm.xlu0 %4084, %v334
    %v4086 = vpop.permute.xlu0 %4085
    %v4088 = vmul.f32 %v4086, %v3315
    %v4089 = vadd.f32 %v3123, %v4088
    %v4090 = vmul.f32 %v4086, %v3323
    %v4091 = vadd.f32 %v3204, %v4090
    %v4092 = vmul.f32 %v4086, %v3331
    %v4093 = vadd.f32 %v3285, %v4092
    %v4095 = vsel %vm630, %v4078, 0
    %4097 = vmatprep.subr.mxu0 0.0
    %4098 = vmatpush1.msra.mxu0 %v3291
    %4099 = vmatprep.subr.mxu0 0.0
    %4100 = vmatpush1.msra.mxu0 %v3292
    %4101 = vmatprep.subr.mxu0 0.0
    %4102 = vmatpush1.msra.mxu0 %v3293
    %4103 = vmatprep.subr.mxu0 0.0
    %4104 = vmatpush1.msra.mxu0 %v3294
    %4105 = vmatprep.subr.mxu0 0.0
    %4106 = vmatpush1.msra.mxu0 0.0
    %4107 = vmatprep.subr.mxu0 0.0
    %4108 = vmatpush1.msra.mxu0 0.0
    %4109 = vmatprep.subr.mxu0 0.0
    %4110 = vmatpush1.msra.mxu0 0.0
    %4111 = vmatprep.subr.mxu0 0.0
    %4112 = vmatpush1.msra.mxu0 0.0
    %4113 = vmatprep.subr.mxu0 0.0
    %4114 = vmatpush1.msra.mxu0 0.0
    %4115 = vmatprep.subr.mxu0 0.0
    %4116 = vmatpush1.msra.mxu0 0.0
    %4117 = vmatprep.subr.mxu0 0.0
    %4118 = vmatpush1.msra.mxu0 0.0
    %4119 = vmatprep.subr.mxu0 0.0
    %4120 = vmatpush1.msra.mxu0 0.0
    %4121 = vmatprep.subr.mxu0 0.0
    %4122 = vmatpush1.msra.mxu0 0.0
    %4123 = vmatprep.subr.mxu0 0.0
    %4124 = vmatpush1.msra.mxu0 0.0
    %4125 = vmatprep.subr.mxu0 0.0
    %4126 = vmatpush1.msra.mxu0 0.0
    %4127 = vmatprep.subr.mxu0 0.0
    %4128 = vmatpush1.msra.mxu0 0.0
    %4129 = vmatprep.subr.mxu0 0.0
    %4130 = vmatpush1.msra.mxu0 0.0
    %4131 = vmatprep.subr.mxu0 0.0
    %4132 = vmatpush1.msra.mxu0 0.0
    %4133 = vmatprep.subr.mxu0 0.0
    %4134 = vmatpush1.msra.mxu0 0.0
    %4135 = vmatprep.subr.mxu0 0.0
    %4136 = vmatpush1.msra.mxu0 0.0
    %4137 = vmatprep.subr.mxu0 0.0
    %4138 = vmatpush1.msra.mxu0 0.0
    %4139 = vmatprep.subr.mxu0 0.0
    %4140 = vmatpush1.msra.mxu0 0.0
    %4141 = vmatprep.subr.mxu0 0.0
    %4142 = vmatpush1.msra.mxu0 0.0
    %4143 = vmatprep.subr.mxu0 0.0
    %4144 = vmatpush1.msra.mxu0 0.0
    %4145 = vmatprep.subr.mxu0 0.0
    %4146 = vmatpush1.msra.mxu0 0.0
    %4147 = vmatprep.subr.mxu0 0.0
    %4148 = vmatpush1.msra.mxu0 0.0
    %4149 = vmatprep.subr.mxu0 0.0
    %4150 = vmatpush1.msra.mxu0 0.0
    %4151 = vmatprep.subr.mxu0 0.0
    %4152 = vmatpush1.msra.mxu0 0.0
    %4153 = vmatprep.subr.mxu0 0.0
    %4154 = vmatpush1.msra.mxu0 0.0
    %4155 = vmatprep.subr.mxu0 0.0
    %4156 = vmatpush1.msra.mxu0 0.0
    %4157 = vmatprep.subr.mxu0 0.0
    %4158 = vmatpush1.msra.mxu0 0.0
    %4159 = vmatprep.subr.mxu0 0.0
    %4160 = vmatpush1.msra.mxu0 0.0
    %4161 = vmatprep.mubr.f32.mxu0 0.0
    %4162 = vmatmul.mubr.f32.gmra.mrb[0].mxu0 %v4095
    %v4163 = vpop.f32.mrb[0].mxu0
    %v4164 = vadd.f32 0.0, %v4163
    %v4165 = vpop.f32.mrb[0].mxu0
    %4166 = vdwg.mxu0
    %4167 = vmatprep.subr.mxu0 0.0
    %4168 = vmatpush1.msra.mxu0 %v3295
    %4169 = vmatprep.subr.mxu0 0.0
    %4170 = vmatpush1.msra.mxu0 %v3296
    %4171 = vmatprep.subr.mxu0 0.0
    %4172 = vmatpush1.msra.mxu0 %v3297
    %4173 = vmatprep.subr.mxu0 0.0
    %4174 = vmatpush1.msra.mxu0 %v3298
    %4175 = vmatprep.subr.mxu0 0.0
    %4176 = vmatpush1.msra.mxu0 0.0
    %4177 = vmatprep.subr.mxu0 0.0
    %4178 = vmatpush1.msra.mxu0 0.0
    %4179 = vmatprep.subr.mxu0 0.0
    %4180 = vmatpush1.msra.mxu0 0.0
    %4181 = vmatprep.subr.mxu0 0.0
    %4182 = vmatpush1.msra.mxu0 0.0
    %4183 = vmatprep.subr.mxu0 0.0
    %4184 = vmatpush1.msra.mxu0 0.0
    %4185 = vmatprep.subr.mxu0 0.0
    %4186 = vmatpush1.msra.mxu0 0.0
    %4187 = vmatprep.subr.mxu0 0.0
    %4188 = vmatpush1.msra.mxu0 0.0
    %4189 = vmatprep.subr.mxu0 0.0
    %4190 = vmatpush1.msra.mxu0 0.0
    %4191 = vmatprep.subr.mxu0 0.0
    %4192 = vmatpush1.msra.mxu0 0.0
    %4193 = vmatprep.subr.mxu0 0.0
    %4194 = vmatpush1.msra.mxu0 0.0
    %4195 = vmatprep.subr.mxu0 0.0
    %4196 = vmatpush1.msra.mxu0 0.0
    %4197 = vmatprep.subr.mxu0 0.0
    %4198 = vmatpush1.msra.mxu0 0.0
    %4199 = vmatprep.subr.mxu0 0.0
    %4200 = vmatpush1.msra.mxu0 0.0
    %4201 = vmatprep.subr.mxu0 0.0
    %4202 = vmatpush1.msra.mxu0 0.0
    %4203 = vmatprep.subr.mxu0 0.0
    %4204 = vmatpush1.msra.mxu0 0.0
    %4205 = vmatprep.subr.mxu0 0.0
    %4206 = vmatpush1.msra.mxu0 0.0
    %4207 = vmatprep.subr.mxu0 0.0
    %4208 = vmatpush1.msra.mxu0 0.0
    %4209 = vmatprep.subr.mxu0 0.0
    %4210 = vmatpush1.msra.mxu0 0.0
    %4211 = vmatprep.subr.mxu0 0.0
    %4212 = vmatpush1.msra.mxu0 0.0
    %4213 = vmatprep.subr.mxu0 0.0
    %4214 = vmatpush1.msra.mxu0 0.0
    %4215 = vmatprep.subr.mxu0 0.0
    %4216 = vmatpush1.msra.mxu0 0.0
    %4217 = vmatprep.subr.mxu0 0.0
    %4218 = vmatpush1.msra.mxu0 0.0
    %4219 = vmatprep.subr.mxu0 0.0
    %4220 = vmatpush1.msra.mxu0 0.0
    %4221 = vmatprep.subr.mxu0 0.0
    %4222 = vmatpush1.msra.mxu0 0.0
    %4223 = vmatprep.subr.mxu0 0.0
    %4224 = vmatpush1.msra.mxu0 0.0
    %4225 = vmatprep.subr.mxu0 0.0
    %4226 = vmatpush1.msra.mxu0 0.0
    %4227 = vmatprep.subr.mxu0 0.0
    %4228 = vmatpush1.msra.mxu0 0.0
    %4229 = vmatprep.subr.mxu0 0.0
    %4230 = vmatpush1.msra.mxu0 0.0
    %4231 = vmatprep.mubr.f32.mxu0 0.0
    %4232 = vmatmul.mubr.f32.gmra.mrb[0].mxu0 %v4095
    %v4233 = vpop.f32.mrb[0].mxu0
    %v4234 = vadd.f32 0.0, %v4233
    %v4235 = vpop.f32.mrb[0].mxu0
    %4236 = vdwg.mxu0
    %4237 = vmatprep.subr.mxu0 0.0
    %4238 = vmatpush1.msra.mxu0 %v3299
    %4239 = vmatprep.subr.mxu0 0.0
    %4240 = vmatpush1.msra.mxu0 %v3300
    %4241 = vmatprep.subr.mxu0 0.0
    %4242 = vmatpush1.msra.mxu0 %v3301
    %4243 = vmatprep.subr.mxu0 0.0
    %4244 = vmatpush1.msra.mxu0 %v3302
    %4245 = vmatprep.subr.mxu0 0.0
    %4246 = vmatpush1.msra.mxu0 0.0
    %4247 = vmatprep.subr.mxu0 0.0
    %4248 = vmatpush1.msra.mxu0 0.0
    %4249 = vmatprep.subr.mxu0 0.0
    %4250 = vmatpush1.msra.mxu0 0.0
    %4251 = vmatprep.subr.mxu0 0.0
    %4252 = vmatpush1.msra.mxu0 0.0
    %4253 = vmatprep.subr.mxu0 0.0
    %4254 = vmatpush1.msra.mxu0 0.0
    %4255 = vmatprep.subr.mxu0 0.0
    %4256 = vmatpush1.msra.mxu0 0.0
    %4257 = vmatprep.subr.mxu0 0.0
    %4258 = vmatpush1.msra.mxu0 0.0
    %4259 = vmatprep.subr.mxu0 0.0
    %4260 = vmatpush1.msra.mxu0 0.0
    %4261 = vmatprep.subr.mxu0 0.0
    %4262 = vmatpush1.msra.mxu0 0.0
    %4263 = vmatprep.subr.mxu0 0.0
    %4264 = vmatpush1.msra.mxu0 0.0
    %4265 = vmatprep.subr.mxu0 0.0
    %4266 = vmatpush1.msra.mxu0 0.0
    %4267 = vmatprep.subr.mxu0 0.0
    %4268 = vmatpush1.msra.mxu0 0.0
    %4269 = vmatprep.subr.mxu0 0.0
    %4270 = vmatpush1.msra.mxu0 0.0
    %4271 = vmatprep.subr.mxu0 0.0
    %4272 = vmatpush1.msra.mxu0 0.0
    %4273 = vmatprep.subr.mxu0 0.0
    %4274 = vmatpush1.msra.mxu0 0.0
    %4275 = vmatprep.subr.mxu0 0.0
    %4276 = vmatpush1.msra.mxu0 0.0
    %4277 = vmatprep.subr.mxu0 0.0
    %4278 = vmatpush1.msra.mxu0 0.0
    %4279 = vmatprep.subr.mxu0 0.0
    %4280 = vmatpush1.msra.mxu0 0.0
    %4281 = vmatprep.subr.mxu0 0.0
    %4282 = vmatpush1.msra.mxu0 0.0
    %4283 = vmatprep.subr.mxu0 0.0
    %4284 = vmatpush1.msra.mxu0 0.0
    %4285 = vmatprep.subr.mxu0 0.0
    %4286 = vmatpush1.msra.mxu0 0.0
    %4287 = vmatprep.subr.mxu0 0.0
    %4288 = vmatpush1.msra.mxu0 0.0
    %4289 = vmatprep.subr.mxu0 0.0
    %4290 = vmatpush1.msra.mxu0 0.0
    %4291 = vmatprep.subr.mxu0 0.0
    %4292 = vmatpush1.msra.mxu0 0.0
    %4293 = vmatprep.subr.mxu0 0.0
    %4294 = vmatpush1.msra.mxu0 0.0
    %4295 = vmatprep.subr.mxu0 0.0
    %4296 = vmatpush1.msra.mxu0 0.0
    %4297 = vmatprep.subr.mxu0 0.0
    %4298 = vmatpush1.msra.mxu0 0.0
    %4299 = vmatprep.subr.mxu0 0.0
    %4300 = vmatpush1.msra.mxu0 0.0
    %4301 = vmatprep.mubr.f32.mxu0 0.0
    %4302 = vmatmul.mubr.f32.gmra.mrb[0].mxu0 %v4095
    %v4303 = vpop.f32.mrb[0].mxu0
    %v4304 = vadd.f32 %v3479, %v4303
    %v4305 = vpop.f32.mrb[0].mxu0
    %4306 = vdwg.mxu0
    %v4307 = vadd.f32 %v4089, %v4164
    %v4308 = vxor.u32 %v4307, 2147483648
    %v4309 = vmul.f32 %v4308, 1.442695
    %v4310 = vpow.pop %v4309
    %v4311 = vadd.f32 %v4310, 1.0
    %v4312 = vrcp.pop %v4311
    %v4313 = vmul.f32 1.0, %v4312
    %v4314 = vadd.f32 %v4091, %v4234
    %v4315 = vxor.u32 %v4314, 2147483648
    %v4316 = vmul.f32 %v4315, 1.442695
    %v4317 = vpow.pop %v4316
    %v4318 = vadd.f32 %v4317, 1.0
    %v4319 = vrcp.pop %v4318
    %v4320 = vmul.f32 1.0, %v4319
    %v4321 = vmul.f32 %v4313, %v4304
    %v4322 = vadd.f32 %v4093, %v4321
    %v4323 = vtanh.pop %v4322
    %v4324 = vsub.f32 1.0, %v4320
    %v4325 = vmul.f32 %v4324, %v4323
    %v4326 = vmul.f32 %v4320, %v4078
    %v4327 = vadd.f32 %v4325, %v4326
    %v4328 = vmul.f32 %v4327, %v3577
    %v4329 = vsel %vm3580, %v4328, 0.0
    %4330 = vadd.xlane.f32.xlu0 %v4329
    %v4331 = vpop.xlane.xlu0 %4330
    %v4332 = vadd.f32 %v4331, %v3584
    %v4333 = vadd.s32 %v2984, 4294967292
    %v4334 = vlaneseq
    %v4335 = vshrl.u32 %v4334, 7
    %v4336 = vsub.s32 %v4333, %v4335
    %v4337 = vrot.slane %v2976, %v4336
    %v4338 = vlaneseq
    %v4339 = vshrl.u32 %v4338, 7
    %v4340 = vsub.s32 %v4333, %v4339
    %v4341 = vrot.slane %v2979, %v4340
    %v4342 = vsel %vm910, %v4341, %v4337
    %4345 = vrot.lane.b32.xlu0 %v3009, 12
    %v4346 = vpop.permute.xlu0 %4345
    %vm4348 = vcmask 7168
    %v4349 = vsel %vm4348, %v3585, %v3834
    %vm4350 = vcmask 15360
    %v4351 = vsel %vm4350, %v4349, %v4083
    %vm4352 = vcmask 23552
    %v4353 = vsel %vm4352, %v4351, %v4332
    %v4354 = vsel %vm359, %v4353, %v4342
    %vm4355 = vcmask 97280
    %v4356 = vsel %vm4355, %v4354, %v4346
    %vm4357 = vcmask 162816
    %v4358 = vsel %vm4357, %v4356, 0.0
    %4359 = vst [vmem:[#allocation30] sm:$0x3] %v4358
    // Predicated region
    $region190: #{tpu_custom_call.1} parent=1 // pred_check
      _
    $region191: #{tpu_custom_call.1} parent=1 // pred_check_branch
      %4361 = sbr.rel (0) target = $region193
    $region192: #{tpu_custom_call.1} parent=1 // pred_region
      %s4363 = ssub.s32 32, 32
      %4364 = vsyncadd [#allocation6], %s4363
      %s4366 = sshll.u32 [#allocation30], 4
      %s4367 = int_to_ptr.vmem [resolvable:$true] %s4366
      %4369 = dma.vmem_to_hbm [thread:$0]  %s4367, 32, %s63, [#allocation6]
    $region193: #{tpu_custom_call.1} parent=1 // pred_fallthru
      _
    // Predicated region
    $region194: #{tpu_custom_call.1} parent=1 // pred_check
      _
    $region195: #{tpu_custom_call.1} parent=1 // pred_check_branch
      %4371 = sbr.rel (0) target = $region197
    $region196: #{tpu_custom_call.1} parent=1 // pred_region
      %4372 = dma.done [#allocation6], 32
    $region197: #{tpu_custom_call.1} parent=1 // pred_fallthru
      _
    %4373 = vsyncpa [#allocation5], 1
    %4374 = vsyncpa [#allocation8], 1
    %4375 = vsyncpa [#allocation11], 1
    %4376 = vsyncpa [#allocation14], 1
    %4377 = vsyncpa [#allocation17], 1
    %4378 = vsyncpa [#allocation20], 1
    %4379 = vsyncpa [#allocation23], 1
    %4380 = vsyncpa [#allocation26], 1
    %4381 = vsyncpa [#allocation29], 1
    %4382 = vsyncpa [#allocation6], 1

</llo_original>
